<compile_context>
chip_gen: v7x
topology: tpu7x:2x2x1
jax: 0.10.0
libtpu: 0.0.40
codegen_flags: <defaults>
</compile_context>

<pallas_src>
import functools
import math

import numpy as np

import jax
import jax.numpy as jnp
from jax.experimental import pallas as pl
from jax.experimental.pallas import tpu as pltpu

# Hyperparameters implied by the module's __init__
D = 6            # d_model (ninp)
H = 6            # nhead
HD = D // H      # head_dim = 1
L = 4            # nlayers
DFF = 4 * D      # dim_feedforward = 24
LN_EPS = 1e-5
NEG_INF = -1e9   # finite "minus infinity" (diagonal is always unmasked -> safe)

# ---- packed-parameter slab layout (single input, 128 lanes wide) --------------
# Weight bands (pre-transposed on host, no in-kernel transposes):
#   rows l*8 : l*8+6, cols  0:18                -> Wqkv^T (in_proj_weight.T) (6, 18)
#   rows l*8 : l*8+6, cols 18:24                -> Wo^T                      (6, 6)
#   rows l*8 : l*8+6, cols 24:48                -> W1^T                      (6, 24)
#   rows 0:24,        cols 48+l*6 : 48+(l+1)*6  -> W2^T                      (24, 6)
# Per-layer vector rows (biases / LayerNorm params):
#   row VEC_ROW0+l: [bqkv(18) | bo(6) | b1(24) | b2(6) | g1(6) | be1(6) | g2(6) | be2(6)]
# Decoder row:
#   row DEC_ROW, cols 0:6 -> decoder weight ; col 6 -> decoder bias
# Positional encoding (sequence-major, row n = s*B + b):
#   rows PE_ROW0 : PE_ROW0 + S*B, cols 0:6
WROW = 8
WOFF_QKV, WOFF_O, WOFF_1, WOFF_2 = 0, 3 * D, 4 * D, 4 * D + DFF   # 0, 18, 24, 48

OFF_BQKV, OFF_BO, OFF_B1, OFF_B2 = 0, 18, 24, 48
OFF_G1, OFF_BE1, OFF_G2, OFF_BE2 = 54, 60, 66, 72
VEC_W = 78

VEC_ROW0 = L * WROW          # 32
DEC_ROW = VEC_ROW0 + L       # 36
PE_ROW0 = 40                 # 8-aligned
SLAB_COLS = 128              # lane-aligned width


def _layernorm(x, g, b):
    # One-pass statistics: mean and mean-of-squares are independent lane reductions.
    mu = jnp.mean(x, axis=-1, keepdims=True)
    msq = jnp.mean(x * x, axis=-1, keepdims=True)
    var = msq - mu * mu
    return (x - mu) * jax.lax.rsqrt(var + LN_EPS) * g + b


def _matmul_k6(x, w_t):
    """(N, D) @ (D, M) with D == 6 as 6 broadcast-FMA terms on the VPU.

    With M<=24 and K=6 the 256-wide MXU is <1% utilized and every dot sits on a
    strictly serial dependency chain; the VPU expansion avoids the MXU
    push/fill/drain/pop round trip entirely.
    """
    acc = x[:, 0:1] * w_t[0:1, :]
    for d in range(1, D):
        acc = acc + x[:, d:d + 1] * w_t[d:d + 1, :]
    return acc


def transformer_kernel(src_ref, p_ref, out_ref, *, batch):
    """Full forward pass; everything is tiny and VMEM resident.

    src_ref: (B*S, D) activations, sequence-major (row n = s*B + b).
    p_ref:   (PE_ROW0 + B*S, 128) merged parameter slab (see layout above).
    out_ref: (B*S, 1) decoder output.
    """
    bs = src_ref.shape[0]

    # PositionalEncoding: x + pe ; dropout = identity (eval mode)
    x = src_ref[...] + p_ref[PE_ROW0:PE_ROW0 + bs, 0:D]             # (BS, D)

    # Block-diagonal causal mask, built once at full broadcast shape and hoisted
    # out of the statically unrolled layer loop (JAX does not CSE broadcasts).
    # Axis order is (key j, query i, head h) so the softmax max/sum and the
    # context reduction below are plain cross-vreg VPU folds — no transposes.
    jj = jax.lax.broadcasted_iota(jnp.int32, (bs, bs, D), 0)        # key row
    ii = jax.lax.broadcasted_iota(jnp.int32, (bs, bs, D), 1)        # query row
    allowed = ((jj % batch) == (ii % batch)) & (jj <= ii)
    mask3 = jnp.where(allowed, 0.0, NEG_INF).astype(jnp.float32)    # (BS, BS, D)

    scale = 1.0 / math.sqrt(HD)                                     # == 1.0 (head_dim 1)

    for l in range(L):                                              # static unroll (L=4)
        r0 = l * WROW
        wqkv_t = p_ref[r0:r0 + D, WOFF_QKV:WOFF_QKV + 3 * D]        # (D, 3D)
        wo_t = p_ref[r0:r0 + D, WOFF_O:WOFF_O + D]                  # (D, D)
        w1_t = p_ref[r0:r0 + D, WOFF_1:WOFF_1 + DFF]                # (D, DFF)
        w2_t = p_ref[0:DFF, WOFF_2 + l * D:WOFF_2 + (l + 1) * D]    # (DFF, D)
        row = p_ref[VEC_ROW0 + l:VEC_ROW0 + l + 1, :]               # (1, 128)

        # ---------- multi-head self-attention (heads & batches fused) ----------
        qkv = _matmul_k6(x, wqkv_t) + row[:, OFF_BQKV:OFF_BQKV + 3 * D]   # (BS, 3D) VPU
        q = qkv[:, 0:D]
        k = qkv[:, D:2 * D]
        v = qkv[:, 2 * D:3 * D]
        if scale != 1.0:                 # trace-time constant; no-op for head_dim 1
            q = q * scale
        # head_dim == 1  =>  per-head scores are outer products:
        #   s[j, i, h] = k[j, h] * q[i, h] + mask[j, i, h]
        s = k[:, None, :] * q[None, :, :] + mask3                   # (BS, BS, D)
        m = jnp.max(s, axis=0, keepdims=True)                       # (1, BS, D) VPU fold
        p = jnp.exp(s - m)                                          # EUP
        denom = jnp.sum(p, axis=0)                                  # (BS, D)
        ctx = jnp.sum(p * v[:, None, :], axis=0)                    # (BS, D)
        ctx = ctx * pl.reciprocal(denom, approx=True)               # EUP recip, no divide
        a_out = _matmul_k6(ctx, wo_t) + row[:, OFF_BO:OFF_BO + D]   # (BS, D) VPU
        # post-norm residual #1 (attention dropout = identity)
        x = _layernorm(x + a_out,
                       row[:, OFF_G1:OFF_G1 + D], row[:, OFF_BE1:OFF_BE1 + D])

        # ---------- feed forward (ReLU) ----------
        h1 = jnp.maximum(_matmul_k6(x, w1_t)
                         + row[:, OFF_B1:OFF_B1 + DFF], 0.0)        # (BS, DFF) VPU
        ff = (jnp.dot(h1, w2_t, preferred_element_type=jnp.float32)  # K=24 -> MXU
              + row[:, OFF_B2:OFF_B2 + D])
        # post-norm residual #2 (ffn dropout = identity)
        x = _layernorm(x + ff,
                       row[:, OFF_G2:OFF_G2 + D], row[:, OFF_BE2:OFF_BE2 + D])

    # ---------- decoder: Linear(D, 1) as VPU multiply + lane reduction ----------
    wd_row = p_ref[DEC_ROW:DEC_ROW + 1, 0:D]                        # (1, D)
    bd = p_ref[DEC_ROW:DEC_ROW + 1, D:D + 1]                        # (1, 1)
    out_ref[...] = jnp.sum(x * wd_row, axis=-1, keepdims=True) + bd


# ---------------------------- host-side packing (numpy, one-time) ---------------
def make_positional_encoding_np(seq_len):
    pos = np.arange(seq_len, dtype=np.float32)[:, None]
    div = np.exp(np.arange(0, D, 2, dtype=np.float32) * (-math.log(10000.0) / D))
    pe = np.zeros((seq_len, D), np.float32)
    pe[:, 0::2] = np.sin(pos * div)
    pe[:, 1::2] = np.cos(pos * div)
    return pe


def init_params(key):
    """Deterministic synthetic parameters (PyTorch-layout shapes)."""
    ks = jax.random.split(key, 9)

    def u(k, shape, scale=0.1):
        return jax.random.uniform(k, shape, jnp.float32, -scale, scale)

    return dict(
        wqkv=u(ks[0], (L, 3 * D, D)), bqkv=u(ks[1], (L, 3 * D)),      # in_proj
        wo=u(ks[2], (L, D, D)),       bo=u(ks[3], (L, D)),            # out_proj
        w1=u(ks[4], (L, DFF, D)),     b1=u(ks[5], (L, DFF)),          # linear1
        w2=u(ks[6], (L, D, DFF)),     b2=u(ks[7], (L, D)),            # linear2
        g1=jnp.ones((L, D), jnp.float32), be1=jnp.zeros((L, D), jnp.float32),
        g2=jnp.ones((L, D), jnp.float32), be2=jnp.zeros((L, D), jnp.float32),
        # decoder per init_weights(): weight ~ U(-0.1, 0.1), bias = 0
        wd=u(ks[8], (1, D), 0.1),     bd=jnp.zeros((), jnp.float32),
    )


def pack_param_slab(p, seq_len, batch):
    """Build the single merged parameter slab on the host with numpy (no per-call
    XLA packing graph). Only depends on (params, seq_len, batch) -> build once."""
    bs = seq_len * batch
    pn = {k: np.asarray(v) for k, v in p.items()}
    slab = np.zeros((PE_ROW0 + bs, SLAB_COLS), np.float32)
    for l in range(L):
        r0 = l * WROW
        slab[r0:r0 + D, WOFF_QKV:WOFF_QKV + 3 * D] = pn["wqkv"][l].T
        slab[r0:r0 + D, WOFF_O:WOFF_O + D] = pn["wo"][l].T
        slab[r0:r0 + D, WOFF_1:WOFF_1 + DFF] = pn["w1"][l].T
        slab[0:DFF, WOFF_2 + l * D:WOFF_2 + (l + 1) * D] = pn["w2"][l].T
        slab[VEC_ROW0 + l, :VEC_W] = np.concatenate(
            [pn["bqkv"][l], pn["bo"][l], pn["b1"][l], pn["b2"][l],
             pn["g1"][l], pn["be1"][l], pn["g2"][l], pn["be2"][l]])
    slab[DEC_ROW, 0:D] = pn["wd"][0]
    slab[DEC_ROW, D] = float(pn["bd"])
    # positional encoding, sequence-major: row n = s*batch + b  ->  pe[n // batch]
    pe = make_positional_encoding_np(seq_len)
    slab[PE_ROW0:PE_ROW0 + bs, 0:D] = np.repeat(pe, batch, axis=0)
    return jnp.asarray(slab)


@jax.jit
def transformer_forward(src, param_slab):
    """src: (S, B, D) float32 (PyTorch TransformerEncoder layout). Returns (S, B, 1)."""
    S, B, _ = src.shape
    bs = S * B
    # Sequence-major 2D slab (row n = s*B + b): plain reshape, no transpose/copy.
    src2d = src.astype(jnp.float32).reshape(bs, D)

    vmem = lambda: pl.BlockSpec(memory_space=pltpu.MemorySpace.VMEM)
    y = pl.pallas_call(
        functools.partial(transformer_kernel, batch=B),
        out_shape=jax.ShapeDtypeStruct((bs, 1), jnp.float32),
        in_specs=[vmem(), vmem()],
        out_specs=vmem(),
    )(src2d, param_slab)
    # back to the module's (S, B, 1) output layout — free reshape (sequence-major)
    return y.reshape(S, B, 1)


# ------------------------- pure-JAX reference (validation) ---------------------
def reference_forward(src, p):
    S, B, _ = src.shape
    pe = jnp.asarray(make_positional_encoding_np(S))
    x = src + pe[:, None, :]
    mask = jnp.where(jnp.tril(jnp.ones((S, S), dtype=bool)), 0.0, -jnp.inf)

    def ln(z, g, b):
        mu = z.mean(-1, keepdims=True)
        var = ((z - mu) ** 2).mean(-1, keepdims=True)
        return (z - mu) / jnp.sqrt(var + LN_EPS) * g + b

    for l in range(L):
        qkv = jnp.einsum("sbd,ed->sbe", x, p["wqkv"][l]) + p["bqkv"][l]
        q, k, v = qkv[..., :D], qkv[..., D:2 * D], qkv[..., 2 * D:]
        scores = jnp.einsum("ibh,jbh->bhij", q, k) / math.sqrt(HD)
        attn = jax.nn.softmax(scores + mask[None, None, :, :], axis=-1)
        ctx = jnp.einsum("bhij,jbh->ibh", attn, v)
        a_out = jnp.einsum("sbd,ed->sbe", ctx, p["wo"][l]) + p["bo"][l]
        x = ln(x + a_out, p["g1"][l], p["be1"][l])
        h1 = jax.nn.relu(jnp.einsum("sbd,fd->sbf", x, p["w1"][l]) + p["b1"][l])
        ff = jnp.einsum("sbf,df->sbd", h1, p["w2"][l]) + p["b2"][l]
        x = ln(x + ff, p["g2"][l], p["be2"][l])
    return jnp.einsum("sbd,od->sbo", x, p["wd"]) + p["bd"]


if __name__ == "__main__":
    key = jax.random.PRNGKey(0)
    k_x, k_p = jax.random.split(key)

    S, B = 8, 2                               # small seq / batch; embed dim fixed by ninp=6
    src = jax.random.normal(k_x, (S, B, D), jnp.float32)
    params = init_params(k_p)

    # One-time host-side packing (numpy); reused across every forward call.
    param_slab = pack_param_slab(params, S, B)

    out = jax.block_until_ready(transformer_forward(src, param_slab))
    assert out.shape == (S, B, 1), out.shape
    assert bool(jnp.all(jnp.isfinite(out)))

    ref = reference_forward(src, params)
    err = float(jnp.max(jnp.abs(out - ref)))
    assert err < 2e-2, f"kernel/reference mismatch: max abs err {err}"
    print("KERNEL_OK")
</pallas_src>

<mosaic_0001>
module attributes {stable_mosaic.version = 11 : i64} {
  func.func @transformer_kernel(%arg0: memref<16x6xf32, #tpu.memory_space<vmem>>, %arg1: memref<56x128xf32, #tpu.memory_space<vmem>>, %arg2: memref<16x1xf32, #tpu.memory_space<vmem>>) attributes {dimension_semantics = [], scalar_prefetch = 0 : i64, scratch_operands = 0 : i64, tpu.core_type = #tpu.core_type<tc>} {
    %c0 = arith.constant 0 : index
    %c0_0 = arith.constant 0 : index
    %0 = vector.load %arg0[%c0, %c0_0] : memref<16x6xf32, #tpu.memory_space<vmem>>, vector<16x6xf32>
    %c40 = arith.constant 40 : index
    %c0_1 = arith.constant 0 : index
    %1 = vector.load %arg1[%c40, %c0_1] : memref<56x128xf32, #tpu.memory_space<vmem>>, vector<16x6xf32>
    %2 = arith.addf %0, %1 : vector<16x6xf32>
    %3 = tpu.iota {dimensions = array<i32: 0>} : vector<16x16x6xi32>
    %4 = tpu.iota {dimensions = array<i32: 1>} : vector<16x16x6xi32>
    %c2_i32 = arith.constant 2 : i32
    %c0_i32 = arith.constant 0 : i32
    %5 = arith.cmpi eq, %c2_i32, %c0_i32 : i32
    %c1_i32 = arith.constant 1 : i32
    %6 = arith.select %5, %c1_i32, %c2_i32 : i32
    %7 = vector.broadcast %6 : i32 to vector<16x16x6xi32>
    %8 = arith.remsi %3, %7 : vector<16x16x6xi32>
    %c0_i32_2 = arith.constant 0 : i32
    %9 = vector.broadcast %c0_i32_2 : i32 to vector<16x16x6xi32>
    %10 = arith.cmpi ne, %8, %9 : vector<16x16x6xi32>
    %c0_i32_3 = arith.constant 0 : i32
    %11 = vector.broadcast %c0_i32_3 : i32 to vector<16x16x6xi32>
    %12 = arith.cmpi slt, %8, %11 : vector<16x16x6xi32>
    %c0_i32_4 = arith.constant 0 : i32
    %13 = arith.cmpi slt, %6, %c0_i32_4 : i32
    %14 = vector.broadcast %13 : i1 to vector<16x16x6xi1>
    %15 = vector.broadcast %14 : vector<16x16x6xi1> to vector<16x16x6xi1>
    %16 = arith.xori %12, %15 : vector<16x16x6xi1>
    %17 = arith.andi %16, %10 : vector<16x16x6xi1>
    %18 = vector.broadcast %6 : i32 to vector<16x16x6xi32>
    %19 = arith.addi %8, %18 : vector<16x16x6xi32>
    %20 = arith.select %17, %19, %8 : vector<16x16x6xi1>, vector<16x16x6xi32>
    %c2_i32_5 = arith.constant 2 : i32
    %c0_i32_6 = arith.constant 0 : i32
    %21 = arith.cmpi eq, %c2_i32_5, %c0_i32_6 : i32
    %c1_i32_7 = arith.constant 1 : i32
    %22 = arith.select %21, %c1_i32_7, %c2_i32_5 : i32
    %23 = vector.broadcast %22 : i32 to vector<16x16x6xi32>
    %24 = arith.remsi %4, %23 : vector<16x16x6xi32>
    %c0_i32_8 = arith.constant 0 : i32
    %25 = vector.broadcast %c0_i32_8 : i32 to vector<16x16x6xi32>
    %26 = arith.cmpi ne, %24, %25 : vector<16x16x6xi32>
    %c0_i32_9 = arith.constant 0 : i32
    %27 = vector.broadcast %c0_i32_9 : i32 to vector<16x16x6xi32>
    %28 = arith.cmpi slt, %24, %27 : vector<16x16x6xi32>
    %c0_i32_10 = arith.constant 0 : i32
    %29 = arith.cmpi slt, %22, %c0_i32_10 : i32
    %30 = vector.broadcast %29 : i1 to vector<16x16x6xi1>
    %31 = vector.broadcast %30 : vector<16x16x6xi1> to vector<16x16x6xi1>
    %32 = arith.xori %28, %31 : vector<16x16x6xi1>
    %33 = arith.andi %32, %26 : vector<16x16x6xi1>
    %34 = vector.broadcast %22 : i32 to vector<16x16x6xi32>
    %35 = arith.addi %24, %34 : vector<16x16x6xi32>
    %36 = arith.select %33, %35, %24 : vector<16x16x6xi1>, vector<16x16x6xi32>
    %37 = arith.cmpi eq, %20, %36 : vector<16x16x6xi32>
    %38 = arith.cmpi sle, %3, %4 : vector<16x16x6xi32>
    %39 = arith.andi %37, %38 : vector<16x16x6xi1>
    %cst = arith.constant 0.000000e+00 : f32
    %cst_11 = arith.constant -1.000000e+09 : f32
    %40 = vector.broadcast %cst : f32 to vector<16x16x6xf32>
    %41 = vector.broadcast %cst_11 : f32 to vector<16x16x6xf32>
    %42 = arith.select %39, %40, %41 : vector<16x16x6xi1>, vector<16x16x6xf32>
    %c0_12 = arith.constant 0 : index
    %c0_13 = arith.constant 0 : index
    %43 = vector.load %arg1[%c0_12, %c0_13] : memref<56x128xf32, #tpu.memory_space<vmem>>, vector<6x18xf32>
    %c0_14 = arith.constant 0 : index
    %c18 = arith.constant 18 : index
    %44 = vector.load %arg1[%c0_14, %c18] : memref<56x128xf32, #tpu.memory_space<vmem>>, vector<6x6xf32>
    %c0_15 = arith.constant 0 : index
    %c24 = arith.constant 24 : index
    %45 = vector.load %arg1[%c0_15, %c24] : memref<56x128xf32, #tpu.memory_space<vmem>>, vector<6x24xf32>
    %c0_16 = arith.constant 0 : index
    %c48 = arith.constant 48 : index
    %46 = vector.load %arg1[%c0_16, %c48] : memref<56x128xf32, #tpu.memory_space<vmem>>, vector<24x6xf32>
    %c32 = arith.constant 32 : index
    %c0_17 = arith.constant 0 : index
    %47 = vector.load %arg1[%c32, %c0_17] : memref<56x128xf32, #tpu.memory_space<vmem>>, vector<1x128xf32>
    %48 = vector.extract_strided_slice %2 {offsets = [0, 0], sizes = [16, 1], strides = [1, 1]} : vector<16x6xf32> to vector<16x1xf32>
    %49 = vector.extract_strided_slice %43 {offsets = [0, 0], sizes = [1, 18], strides = [1, 1]} : vector<6x18xf32> to vector<1x18xf32>
    %50 = vector.broadcast %48 : vector<16x1xf32> to vector<16x18xf32>
    %51 = vector.broadcast %49 : vector<1x18xf32> to vector<16x18xf32>
    %52 = arith.mulf %50, %51 : vector<16x18xf32>
    %53 = vector.extract_strided_slice %2 {offsets = [0, 1], sizes = [16, 1], strides = [1, 1]} : vector<16x6xf32> to vector<16x1xf32>
    %54 = vector.extract_strided_slice %43 {offsets = [1, 0], sizes = [1, 18], strides = [1, 1]} : vector<6x18xf32> to vector<1x18xf32>
    %55 = vector.broadcast %53 : vector<16x1xf32> to vector<16x18xf32>
    %56 = vector.broadcast %54 : vector<1x18xf32> to vector<16x18xf32>
    %57 = arith.mulf %55, %56 : vector<16x18xf32>
    %58 = arith.addf %52, %57 : vector<16x18xf32>
    %59 = vector.extract_strided_slice %2 {offsets = [0, 2], sizes = [16, 1], strides = [1, 1]} : vector<16x6xf32> to vector<16x1xf32>
    %60 = vector.extract_strided_slice %43 {offsets = [2, 0], sizes = [1, 18], strides = [1, 1]} : vector<6x18xf32> to vector<1x18xf32>
    %61 = vector.broadcast %59 : vector<16x1xf32> to vector<16x18xf32>
    %62 = vector.broadcast %60 : vector<1x18xf32> to vector<16x18xf32>
    %63 = arith.mulf %61, %62 : vector<16x18xf32>
    %64 = arith.addf %58, %63 : vector<16x18xf32>
    %65 = vector.extract_strided_slice %2 {offsets = [0, 3], sizes = [16, 1], strides = [1, 1]} : vector<16x6xf32> to vector<16x1xf32>
    %66 = vector.extract_strided_slice %43 {offsets = [3, 0], sizes = [1, 18], strides = [1, 1]} : vector<6x18xf32> to vector<1x18xf32>
    %67 = vector.broadcast %65 : vector<16x1xf32> to vector<16x18xf32>
    %68 = vector.broadcast %66 : vector<1x18xf32> to vector<16x18xf32>
    %69 = arith.mulf %67, %68 : vector<16x18xf32>
    %70 = arith.addf %64, %69 : vector<16x18xf32>
    %71 = vector.extract_strided_slice %2 {offsets = [0, 4], sizes = [16, 1], strides = [1, 1]} : vector<16x6xf32> to vector<16x1xf32>
    %72 = vector.extract_strided_slice %43 {offsets = [4, 0], sizes = [1, 18], strides = [1, 1]} : vector<6x18xf32> to vector<1x18xf32>
    %73 = vector.broadcast %71 : vector<16x1xf32> to vector<16x18xf32>
    %74 = vector.broadcast %72 : vector<1x18xf32> to vector<16x18xf32>
    %75 = arith.mulf %73, %74 : vector<16x18xf32>
    %76 = arith.addf %70, %75 : vector<16x18xf32>
    %77 = vector.extract_strided_slice %2 {offsets = [0, 5], sizes = [16, 1], strides = [1, 1]} : vector<16x6xf32> to vector<16x1xf32>
    %78 = vector.extract_strided_slice %43 {offsets = [5, 0], sizes = [1, 18], strides = [1, 1]} : vector<6x18xf32> to vector<1x18xf32>
    %79 = vector.broadcast %77 : vector<16x1xf32> to vector<16x18xf32>
    %80 = vector.broadcast %78 : vector<1x18xf32> to vector<16x18xf32>
    %81 = arith.mulf %79, %80 : vector<16x18xf32>
    %82 = arith.addf %76, %81 : vector<16x18xf32>
    %83 = vector.extract_strided_slice %47 {offsets = [0, 0], sizes = [1, 18], strides = [1, 1]} : vector<1x128xf32> to vector<1x18xf32>
    %84 = vector.broadcast %83 : vector<1x18xf32> to vector<16x18xf32>
    %85 = arith.addf %82, %84 : vector<16x18xf32>
    %86 = vector.extract_strided_slice %85 {offsets = [0, 0], sizes = [16, 6], strides = [1, 1]} : vector<16x18xf32> to vector<16x6xf32>
    %87 = vector.extract_strided_slice %85 {offsets = [0, 6], sizes = [16, 6], strides = [1, 1]} : vector<16x18xf32> to vector<16x6xf32>
    %88 = vector.extract_strided_slice %85 {offsets = [0, 12], sizes = [16, 6], strides = [1, 1]} : vector<16x18xf32> to vector<16x6xf32>
    %89 = vector.shape_cast %87 : vector<16x6xf32> to vector<16x1x6xf32>
    %90 = vector.shape_cast %86 : vector<16x6xf32> to vector<1x16x6xf32>
    %91 = vector.broadcast %89 : vector<16x1x6xf32> to vector<16x16x6xf32>
    %92 = vector.broadcast %90 : vector<1x16x6xf32> to vector<16x16x6xf32>
    %93 = arith.mulf %91, %92 : vector<16x16x6xf32>
    %94 = arith.addf %93, %42 : vector<16x16x6xf32>
    %cst_18 = arith.constant dense<0xFF800000> : vector<16x6xf32>
    %95 = vector.multi_reduction <maximumf>, %94, %cst_18 [0] : vector<16x16x6xf32> to vector<16x6xf32>
    %96 = vector.shape_cast %95 : vector<16x6xf32> to vector<1x16x6xf32>
    %97 = vector.broadcast %96 : vector<1x16x6xf32> to vector<16x16x6xf32>
    %98 = arith.subf %94, %97 : vector<16x16x6xf32>
    %99 = math.exp %98 : vector<16x16x6xf32>
    %cst_19 = arith.constant dense<0.000000e+00> : vector<16x6xf32>
    %100 = vector.multi_reduction <add>, %99, %cst_19 [0] : vector<16x16x6xf32> to vector<16x6xf32>
    %101 = vector.shape_cast %88 : vector<16x6xf32> to vector<16x1x6xf32>
    %102 = vector.broadcast %101 : vector<16x1x6xf32> to vector<16x16x6xf32>
    %103 = arith.mulf %99, %102 : vector<16x16x6xf32>
    %cst_20 = arith.constant dense<0.000000e+00> : vector<16x6xf32>
    %104 = vector.multi_reduction <add>, %103, %cst_20 [0] : vector<16x16x6xf32> to vector<16x6xf32>
    %105 = tpu.reciprocal %100 {approx = true} : vector<16x6xf32> -> vector<16x6xf32>
    %106 = arith.mulf %104, %105 : vector<16x6xf32>
    %107 = vector.extract_strided_slice %106 {offsets = [0, 0], sizes = [16, 1], strides = [1, 1]} : vector<16x6xf32> to vector<16x1xf32>
    %108 = vector.extract_strided_slice %44 {offsets = [0, 0], sizes = [1, 6], strides = [1, 1]} : vector<6x6xf32> to vector<1x6xf32>
    %109 = vector.broadcast %107 : vector<16x1xf32> to vector<16x6xf32>
    %110 = vector.broadcast %108 : vector<1x6xf32> to vector<16x6xf32>
    %111 = arith.mulf %109, %110 : vector<16x6xf32>
    %112 = vector.extract_strided_slice %106 {offsets = [0, 1], sizes = [16, 1], strides = [1, 1]} : vector<16x6xf32> to vector<16x1xf32>
    %113 = vector.extract_strided_slice %44 {offsets = [1, 0], sizes = [1, 6], strides = [1, 1]} : vector<6x6xf32> to vector<1x6xf32>
    %114 = vector.broadcast %112 : vector<16x1xf32> to vector<16x6xf32>
    %115 = vector.broadcast %113 : vector<1x6xf32> to vector<16x6xf32>
    %116 = arith.mulf %114, %115 : vector<16x6xf32>
    %117 = arith.addf %111, %116 : vector<16x6xf32>
    %118 = vector.extract_strided_slice %106 {offsets = [0, 2], sizes = [16, 1], strides = [1, 1]} : vector<16x6xf32> to vector<16x1xf32>
    %119 = vector.extract_strided_slice %44 {offsets = [2, 0], sizes = [1, 6], strides = [1, 1]} : vector<6x6xf32> to vector<1x6xf32>
    %120 = vector.broadcast %118 : vector<16x1xf32> to vector<16x6xf32>
    %121 = vector.broadcast %119 : vector<1x6xf32> to vector<16x6xf32>
    %122 = arith.mulf %120, %121 : vector<16x6xf32>
    %123 = arith.addf %117, %122 : vector<16x6xf32>
    %124 = vector.extract_strided_slice %106 {offsets = [0, 3], sizes = [16, 1], strides = [1, 1]} : vector<16x6xf32> to vector<16x1xf32>
    %125 = vector.extract_strided_slice %44 {offsets = [3, 0], sizes = [1, 6], strides = [1, 1]} : vector<6x6xf32> to vector<1x6xf32>
    %126 = vector.broadcast %124 : vector<16x1xf32> to vector<16x6xf32>
    %127 = vector.broadcast %125 : vector<1x6xf32> to vector<16x6xf32>
    %128 = arith.mulf %126, %127 : vector<16x6xf32>
    %129 = arith.addf %123, %128 : vector<16x6xf32>
    %130 = vector.extract_strided_slice %106 {offsets = [0, 4], sizes = [16, 1], strides = [1, 1]} : vector<16x6xf32> to vector<16x1xf32>
    %131 = vector.extract_strided_slice %44 {offsets = [4, 0], sizes = [1, 6], strides = [1, 1]} : vector<6x6xf32> to vector<1x6xf32>
    %132 = vector.broadcast %130 : vector<16x1xf32> to vector<16x6xf32>
    %133 = vector.broadcast %131 : vector<1x6xf32> to vector<16x6xf32>
    %134 = arith.mulf %132, %133 : vector<16x6xf32>
    %135 = arith.addf %129, %134 : vector<16x6xf32>
    %136 = vector.extract_strided_slice %106 {offsets = [0, 5], sizes = [16, 1], strides = [1, 1]} : vector<16x6xf32> to vector<16x1xf32>
    %137 = vector.extract_strided_slice %44 {offsets = [5, 0], sizes = [1, 6], strides = [1, 1]} : vector<6x6xf32> to vector<1x6xf32>
    %138 = vector.broadcast %136 : vector<16x1xf32> to vector<16x6xf32>
    %139 = vector.broadcast %137 : vector<1x6xf32> to vector<16x6xf32>
    %140 = arith.mulf %138, %139 : vector<16x6xf32>
    %141 = arith.addf %135, %140 : vector<16x6xf32>
    %142 = vector.extract_strided_slice %47 {offsets = [0, 18], sizes = [1, 6], strides = [1, 1]} : vector<1x128xf32> to vector<1x6xf32>
    %143 = vector.broadcast %142 : vector<1x6xf32> to vector<16x6xf32>
    %144 = arith.addf %141, %143 : vector<16x6xf32>
    %145 = arith.addf %2, %144 : vector<16x6xf32>
    %146 = vector.extract_strided_slice %47 {offsets = [0, 54], sizes = [1, 6], strides = [1, 1]} : vector<1x128xf32> to vector<1x6xf32>
    %147 = vector.extract_strided_slice %47 {offsets = [0, 60], sizes = [1, 6], strides = [1, 1]} : vector<1x128xf32> to vector<1x6xf32>
    %cst_21 = arith.constant dense<0.000000e+00> : vector<16xf32>
    %148 = vector.multi_reduction <add>, %145, %cst_21 [1] : vector<16x6xf32> to vector<16xf32>
    %149 = vector.shape_cast %148 : vector<16xf32> to vector<16x1xf32>
    %cst_22 = arith.constant 6.000000e+00 : f32
    %150 = vector.broadcast %cst_22 : f32 to vector<16x1xf32>
    %151 = arith.divf %149, %150 : vector<16x1xf32>
    %152 = arith.mulf %145, %145 : vector<16x6xf32>
    %cst_23 = arith.constant dense<0.000000e+00> : vector<16xf32>
    %153 = vector.multi_reduction <add>, %152, %cst_23 [1] : vector<16x6xf32> to vector<16xf32>
    %154 = vector.shape_cast %153 : vector<16xf32> to vector<16x1xf32>
    %cst_24 = arith.constant 6.000000e+00 : f32
    %155 = vector.broadcast %cst_24 : f32 to vector<16x1xf32>
    %156 = arith.divf %154, %155 : vector<16x1xf32>
    %157 = arith.mulf %151, %151 : vector<16x1xf32>
    %158 = arith.subf %156, %157 : vector<16x1xf32>
    %159 = vector.broadcast %151 : vector<16x1xf32> to vector<16x6xf32>
    %160 = arith.subf %145, %159 : vector<16x6xf32>
    %cst_25 = arith.constant 9.99999974E-6 : f32
    %161 = vector.broadcast %cst_25 : f32 to vector<16x1xf32>
    %162 = arith.addf %158, %161 : vector<16x1xf32>
    %163 = math.rsqrt %162 : vector<16x1xf32>
    %164 = vector.broadcast %163 : vector<16x1xf32> to vector<16x6xf32>
    %165 = arith.mulf %160, %164 : vector<16x6xf32>
    %166 = vector.broadcast %146 : vector<1x6xf32> to vector<16x6xf32>
    %167 = arith.mulf %165, %166 : vector<16x6xf32>
    %168 = vector.broadcast %147 : vector<1x6xf32> to vector<16x6xf32>
    %169 = arith.addf %167, %168 : vector<16x6xf32>
    %170 = vector.extract_strided_slice %169 {offsets = [0, 0], sizes = [16, 1], strides = [1, 1]} : vector<16x6xf32> to vector<16x1xf32>
    %171 = vector.extract_strided_slice %45 {offsets = [0, 0], sizes = [1, 24], strides = [1, 1]} : vector<6x24xf32> to vector<1x24xf32>
    %172 = vector.broadcast %170 : vector<16x1xf32> to vector<16x24xf32>
    %173 = vector.broadcast %171 : vector<1x24xf32> to vector<16x24xf32>
    %174 = arith.mulf %172, %173 : vector<16x24xf32>
    %175 = vector.extract_strided_slice %169 {offsets = [0, 1], sizes = [16, 1], strides = [1, 1]} : vector<16x6xf32> to vector<16x1xf32>
    %176 = vector.extract_strided_slice %45 {offsets = [1, 0], sizes = [1, 24], strides = [1, 1]} : vector<6x24xf32> to vector<1x24xf32>
    %177 = vector.broadcast %175 : vector<16x1xf32> to vector<16x24xf32>
    %178 = vector.broadcast %176 : vector<1x24xf32> to vector<16x24xf32>
    %179 = arith.mulf %177, %178 : vector<16x24xf32>
    %180 = arith.addf %174, %179 : vector<16x24xf32>
    %181 = vector.extract_strided_slice %169 {offsets = [0, 2], sizes = [16, 1], strides = [1, 1]} : vector<16x6xf32> to vector<16x1xf32>
    %182 = vector.extract_strided_slice %45 {offsets = [2, 0], sizes = [1, 24], strides = [1, 1]} : vector<6x24xf32> to vector<1x24xf32>
    %183 = vector.broadcast %181 : vector<16x1xf32> to vector<16x24xf32>
    %184 = vector.broadcast %182 : vector<1x24xf32> to vector<16x24xf32>
    %185 = arith.mulf %183, %184 : vector<16x24xf32>
    %186 = arith.addf %180, %185 : vector<16x24xf32>
    %187 = vector.extract_strided_slice %169 {offsets = [0, 3], sizes = [16, 1], strides = [1, 1]} : vector<16x6xf32> to vector<16x1xf32>
    %188 = vector.extract_strided_slice %45 {offsets = [3, 0], sizes = [1, 24], strides = [1, 1]} : vector<6x24xf32> to vector<1x24xf32>
    %189 = vector.broadcast %187 : vector<16x1xf32> to vector<16x24xf32>
    %190 = vector.broadcast %188 : vector<1x24xf32> to vector<16x24xf32>
    %191 = arith.mulf %189, %190 : vector<16x24xf32>
    %192 = arith.addf %186, %191 : vector<16x24xf32>
    %193 = vector.extract_strided_slice %169 {offsets = [0, 4], sizes = [16, 1], strides = [1, 1]} : vector<16x6xf32> to vector<16x1xf32>
    %194 = vector.extract_strided_slice %45 {offsets = [4, 0], sizes = [1, 24], strides = [1, 1]} : vector<6x24xf32> to vector<1x24xf32>
    %195 = vector.broadcast %193 : vector<16x1xf32> to vector<16x24xf32>
    %196 = vector.broadcast %194 : vector<1x24xf32> to vector<16x24xf32>
    %197 = arith.mulf %195, %196 : vector<16x24xf32>
    %198 = arith.addf %192, %197 : vector<16x24xf32>
    %199 = vector.extract_strided_slice %169 {offsets = [0, 5], sizes = [16, 1], strides = [1, 1]} : vector<16x6xf32> to vector<16x1xf32>
    %200 = vector.extract_strided_slice %45 {offsets = [5, 0], sizes = [1, 24], strides = [1, 1]} : vector<6x24xf32> to vector<1x24xf32>
    %201 = vector.broadcast %199 : vector<16x1xf32> to vector<16x24xf32>
    %202 = vector.broadcast %200 : vector<1x24xf32> to vector<16x24xf32>
    %203 = arith.mulf %201, %202 : vector<16x24xf32>
    %204 = arith.addf %198, %203 : vector<16x24xf32>
    %205 = vector.extract_strided_slice %47 {offsets = [0, 24], sizes = [1, 24], strides = [1, 1]} : vector<1x128xf32> to vector<1x24xf32>
    %206 = vector.broadcast %205 : vector<1x24xf32> to vector<16x24xf32>
    %207 = arith.addf %204, %206 : vector<16x24xf32>
    %cst_26 = arith.constant 0.000000e+00 : f32
    %208 = vector.broadcast %cst_26 : f32 to vector<16x24xf32>
    %209 = arith.maximumf %207, %208 : vector<16x24xf32>
    %cst_27 = arith.constant dense<0.000000e+00> : vector<16x6xf32>
    %210 = tpu.matmul %209, %46, %cst_27 {dimension_numbers = #tpu.dot_dimension_numbers<[1], [0], [0], [1], [0, 0, 1, 1], [], []>} : vector<16x24xf32>, vector<24x6xf32>, vector<16x6xf32> -> vector<16x6xf32>
    %211 = vector.extract_strided_slice %47 {offsets = [0, 48], sizes = [1, 6], strides = [1, 1]} : vector<1x128xf32> to vector<1x6xf32>
    %212 = vector.broadcast %211 : vector<1x6xf32> to vector<16x6xf32>
    %213 = arith.addf %210, %212 : vector<16x6xf32>
    %214 = arith.addf %169, %213 : vector<16x6xf32>
    %215 = vector.extract_strided_slice %47 {offsets = [0, 66], sizes = [1, 6], strides = [1, 1]} : vector<1x128xf32> to vector<1x6xf32>
    %216 = vector.extract_strided_slice %47 {offsets = [0, 72], sizes = [1, 6], strides = [1, 1]} : vector<1x128xf32> to vector<1x6xf32>
    %cst_28 = arith.constant dense<0.000000e+00> : vector<16xf32>
    %217 = vector.multi_reduction <add>, %214, %cst_28 [1] : vector<16x6xf32> to vector<16xf32>
    %218 = vector.shape_cast %217 : vector<16xf32> to vector<16x1xf32>
    %cst_29 = arith.constant 6.000000e+00 : f32
    %219 = vector.broadcast %cst_29 : f32 to vector<16x1xf32>
    %220 = arith.divf %218, %219 : vector<16x1xf32>
    %221 = arith.mulf %214, %214 : vector<16x6xf32>
    %cst_30 = arith.constant dense<0.000000e+00> : vector<16xf32>
    %222 = vector.multi_reduction <add>, %221, %cst_30 [1] : vector<16x6xf32> to vector<16xf32>
    %223 = vector.shape_cast %222 : vector<16xf32> to vector<16x1xf32>
    %cst_31 = arith.constant 6.000000e+00 : f32
    %224 = vector.broadcast %cst_31 : f32 to vector<16x1xf32>
    %225 = arith.divf %223, %224 : vector<16x1xf32>
    %226 = arith.mulf %220, %220 : vector<16x1xf32>
    %227 = arith.subf %225, %226 : vector<16x1xf32>
    %228 = vector.broadcast %220 : vector<16x1xf32> to vector<16x6xf32>
    %229 = arith.subf %214, %228 : vector<16x6xf32>
    %cst_32 = arith.constant 9.99999974E-6 : f32
    %230 = vector.broadcast %cst_32 : f32 to vector<16x1xf32>
    %231 = arith.addf %227, %230 : vector<16x1xf32>
    %232 = math.rsqrt %231 : vector<16x1xf32>
    %233 = vector.broadcast %232 : vector<16x1xf32> to vector<16x6xf32>
    %234 = arith.mulf %229, %233 : vector<16x6xf32>
    %235 = vector.broadcast %215 : vector<1x6xf32> to vector<16x6xf32>
    %236 = arith.mulf %234, %235 : vector<16x6xf32>
    %237 = vector.broadcast %216 : vector<1x6xf32> to vector<16x6xf32>
    %238 = arith.addf %236, %237 : vector<16x6xf32>
    %c8 = arith.constant 8 : index
    %c0_33 = arith.constant 0 : index
    %239 = vector.load %arg1[%c8, %c0_33] : memref<56x128xf32, #tpu.memory_space<vmem>>, vector<6x18xf32>
    %c8_34 = arith.constant 8 : index
    %c18_35 = arith.constant 18 : index
    %240 = vector.load %arg1[%c8_34, %c18_35] : memref<56x128xf32, #tpu.memory_space<vmem>>, vector<6x6xf32>
    %c8_36 = arith.constant 8 : index
    %c24_37 = arith.constant 24 : index
    %241 = vector.load %arg1[%c8_36, %c24_37] : memref<56x128xf32, #tpu.memory_space<vmem>>, vector<6x24xf32>
    %c0_38 = arith.constant 0 : index
    %c54 = arith.constant 54 : index
    %242 = vector.load %arg1[%c0_38, %c54] : memref<56x128xf32, #tpu.memory_space<vmem>>, vector<24x6xf32>
    %c33 = arith.constant 33 : index
    %c0_39 = arith.constant 0 : index
    %243 = vector.load %arg1[%c33, %c0_39] : memref<56x128xf32, #tpu.memory_space<vmem>>, vector<1x128xf32>
    %244 = vector.extract_strided_slice %238 {offsets = [0, 0], sizes = [16, 1], strides = [1, 1]} : vector<16x6xf32> to vector<16x1xf32>
    %245 = vector.extract_strided_slice %239 {offsets = [0, 0], sizes = [1, 18], strides = [1, 1]} : vector<6x18xf32> to vector<1x18xf32>
    %246 = vector.broadcast %244 : vector<16x1xf32> to vector<16x18xf32>
    %247 = vector.broadcast %245 : vector<1x18xf32> to vector<16x18xf32>
    %248 = arith.mulf %246, %247 : vector<16x18xf32>
    %249 = vector.extract_strided_slice %238 {offsets = [0, 1], sizes = [16, 1], strides = [1, 1]} : vector<16x6xf32> to vector<16x1xf32>
    %250 = vector.extract_strided_slice %239 {offsets = [1, 0], sizes = [1, 18], strides = [1, 1]} : vector<6x18xf32> to vector<1x18xf32>
    %251 = vector.broadcast %249 : vector<16x1xf32> to vector<16x18xf32>
    %252 = vector.broadcast %250 : vector<1x18xf32> to vector<16x18xf32>
    %253 = arith.mulf %251, %252 : vector<16x18xf32>
    %254 = arith.addf %248, %253 : vector<16x18xf32>
    %255 = vector.extract_strided_slice %238 {offsets = [0, 2], sizes = [16, 1], strides = [1, 1]} : vector<16x6xf32> to vector<16x1xf32>
    %256 = vector.extract_strided_slice %239 {offsets = [2, 0], sizes = [1, 18], strides = [1, 1]} : vector<6x18xf32> to vector<1x18xf32>
    %257 = vector.broadcast %255 : vector<16x1xf32> to vector<16x18xf32>
    %258 = vector.broadcast %256 : vector<1x18xf32> to vector<16x18xf32>
    %259 = arith.mulf %257, %258 : vector<16x18xf32>
    %260 = arith.addf %254, %259 : vector<16x18xf32>
    %261 = vector.extract_strided_slice %238 {offsets = [0, 3], sizes = [16, 1], strides = [1, 1]} : vector<16x6xf32> to vector<16x1xf32>
    %262 = vector.extract_strided_slice %239 {offsets = [3, 0], sizes = [1, 18], strides = [1, 1]} : vector<6x18xf32> to vector<1x18xf32>
    %263 = vector.broadcast %261 : vector<16x1xf32> to vector<16x18xf32>
    %264 = vector.broadcast %262 : vector<1x18xf32> to vector<16x18xf32>
    %265 = arith.mulf %263, %264 : vector<16x18xf32>
    %266 = arith.addf %260, %265 : vector<16x18xf32>
    %267 = vector.extract_strided_slice %238 {offsets = [0, 4], sizes = [16, 1], strides = [1, 1]} : vector<16x6xf32> to vector<16x1xf32>
    %268 = vector.extract_strided_slice %239 {offsets = [4, 0], sizes = [1, 18], strides = [1, 1]} : vector<6x18xf32> to vector<1x18xf32>
    %269 = vector.broadcast %267 : vector<16x1xf32> to vector<16x18xf32>
    %270 = vector.broadcast %268 : vector<1x18xf32> to vector<16x18xf32>
    %271 = arith.mulf %269, %270 : vector<16x18xf32>
    %272 = arith.addf %266, %271 : vector<16x18xf32>
    %273 = vector.extract_strided_slice %238 {offsets = [0, 5], sizes = [16, 1], strides = [1, 1]} : vector<16x6xf32> to vector<16x1xf32>
    %274 = vector.extract_strided_slice %239 {offsets = [5, 0], sizes = [1, 18], strides = [1, 1]} : vector<6x18xf32> to vector<1x18xf32>
    %275 = vector.broadcast %273 : vector<16x1xf32> to vector<16x18xf32>
    %276 = vector.broadcast %274 : vector<1x18xf32> to vector<16x18xf32>
    %277 = arith.mulf %275, %276 : vector<16x18xf32>
    %278 = arith.addf %272, %277 : vector<16x18xf32>
    %279 = vector.extract_strided_slice %243 {offsets = [0, 0], sizes = [1, 18], strides = [1, 1]} : vector<1x128xf32> to vector<1x18xf32>
    %280 = vector.broadcast %279 : vector<1x18xf32> to vector<16x18xf32>
    %281 = arith.addf %278, %280 : vector<16x18xf32>
    %282 = vector.extract_strided_slice %281 {offsets = [0, 0], sizes = [16, 6], strides = [1, 1]} : vector<16x18xf32> to vector<16x6xf32>
    %283 = vector.extract_strided_slice %281 {offsets = [0, 6], sizes = [16, 6], strides = [1, 1]} : vector<16x18xf32> to vector<16x6xf32>
    %284 = vector.extract_strided_slice %281 {offsets = [0, 12], sizes = [16, 6], strides = [1, 1]} : vector<16x18xf32> to vector<16x6xf32>
    %285 = vector.shape_cast %283 : vector<16x6xf32> to vector<16x1x6xf32>
    %286 = vector.shape_cast %282 : vector<16x6xf32> to vector<1x16x6xf32>
    %287 = vector.broadcast %285 : vector<16x1x6xf32> to vector<16x16x6xf32>
    %288 = vector.broadcast %286 : vector<1x16x6xf32> to vector<16x16x6xf32>
    %289 = arith.mulf %287, %288 : vector<16x16x6xf32>
    %290 = arith.addf %289, %42 : vector<16x16x6xf32>
    %cst_40 = arith.constant dense<0xFF800000> : vector<16x6xf32>
    %291 = vector.multi_reduction <maximumf>, %290, %cst_40 [0] : vector<16x16x6xf32> to vector<16x6xf32>
    %292 = vector.shape_cast %291 : vector<16x6xf32> to vector<1x16x6xf32>
    %293 = vector.broadcast %292 : vector<1x16x6xf32> to vector<16x16x6xf32>
    %294 = arith.subf %290, %293 : vector<16x16x6xf32>
    %295 = math.exp %294 : vector<16x16x6xf32>
    %cst_41 = arith.constant dense<0.000000e+00> : vector<16x6xf32>
    %296 = vector.multi_reduction <add>, %295, %cst_41 [0] : vector<16x16x6xf32> to vector<16x6xf32>
    %297 = vector.shape_cast %284 : vector<16x6xf32> to vector<16x1x6xf32>
    %298 = vector.broadcast %297 : vector<16x1x6xf32> to vector<16x16x6xf32>
    %299 = arith.mulf %295, %298 : vector<16x16x6xf32>
    %cst_42 = arith.constant dense<0.000000e+00> : vector<16x6xf32>
    %300 = vector.multi_reduction <add>, %299, %cst_42 [0] : vector<16x16x6xf32> to vector<16x6xf32>
    %301 = tpu.reciprocal %296 {approx = true} : vector<16x6xf32> -> vector<16x6xf32>
    %302 = arith.mulf %300, %301 : vector<16x6xf32>
    %303 = vector.extract_strided_slice %302 {offsets = [0, 0], sizes = [16, 1], strides = [1, 1]} : vector<16x6xf32> to vector<16x1xf32>
    %304 = vector.extract_strided_slice %240 {offsets = [0, 0], sizes = [1, 6], strides = [1, 1]} : vector<6x6xf32> to vector<1x6xf32>
    %305 = vector.broadcast %303 : vector<16x1xf32> to vector<16x6xf32>
    %306 = vector.broadcast %304 : vector<1x6xf32> to vector<16x6xf32>
    %307 = arith.mulf %305, %306 : vector<16x6xf32>
    %308 = vector.extract_strided_slice %302 {offsets = [0, 1], sizes = [16, 1], strides = [1, 1]} : vector<16x6xf32> to vector<16x1xf32>
    %309 = vector.extract_strided_slice %240 {offsets = [1, 0], sizes = [1, 6], strides = [1, 1]} : vector<6x6xf32> to vector<1x6xf32>
    %310 = vector.broadcast %308 : vector<16x1xf32> to vector<16x6xf32>
    %311 = vector.broadcast %309 : vector<1x6xf32> to vector<16x6xf32>
    %312 = arith.mulf %310, %311 : vector<16x6xf32>
    %313 = arith.addf %307, %312 : vector<16x6xf32>
    %314 = vector.extract_strided_slice %302 {offsets = [0, 2], sizes = [16, 1], strides = [1, 1]} : vector<16x6xf32> to vector<16x1xf32>
    %315 = vector.extract_strided_slice %240 {offsets = [2, 0], sizes = [1, 6], strides = [1, 1]} : vector<6x6xf32> to vector<1x6xf32>
    %316 = vector.broadcast %314 : vector<16x1xf32> to vector<16x6xf32>
    %317 = vector.broadcast %315 : vector<1x6xf32> to vector<16x6xf32>
    %318 = arith.mulf %316, %317 : vector<16x6xf32>
    %319 = arith.addf %313, %318 : vector<16x6xf32>
    %320 = vector.extract_strided_slice %302 {offsets = [0, 3], sizes = [16, 1], strides = [1, 1]} : vector<16x6xf32> to vector<16x1xf32>
    %321 = vector.extract_strided_slice %240 {offsets = [3, 0], sizes = [1, 6], strides = [1, 1]} : vector<6x6xf32> to vector<1x6xf32>
    %322 = vector.broadcast %320 : vector<16x1xf32> to vector<16x6xf32>
    %323 = vector.broadcast %321 : vector<1x6xf32> to vector<16x6xf32>
    %324 = arith.mulf %322, %323 : vector<16x6xf32>
    %325 = arith.addf %319, %324 : vector<16x6xf32>
    %326 = vector.extract_strided_slice %302 {offsets = [0, 4], sizes = [16, 1], strides = [1, 1]} : vector<16x6xf32> to vector<16x1xf32>
    %327 = vector.extract_strided_slice %240 {offsets = [4, 0], sizes = [1, 6], strides = [1, 1]} : vector<6x6xf32> to vector<1x6xf32>
    %328 = vector.broadcast %326 : vector<16x1xf32> to vector<16x6xf32>
    %329 = vector.broadcast %327 : vector<1x6xf32> to vector<16x6xf32>
    %330 = arith.mulf %328, %329 : vector<16x6xf32>
    %331 = arith.addf %325, %330 : vector<16x6xf32>
    %332 = vector.extract_strided_slice %302 {offsets = [0, 5], sizes = [16, 1], strides = [1, 1]} : vector<16x6xf32> to vector<16x1xf32>
    %333 = vector.extract_strided_slice %240 {offsets = [5, 0], sizes = [1, 6], strides = [1, 1]} : vector<6x6xf32> to vector<1x6xf32>
    %334 = vector.broadcast %332 : vector<16x1xf32> to vector<16x6xf32>
    %335 = vector.broadcast %333 : vector<1x6xf32> to vector<16x6xf32>
    %336 = arith.mulf %334, %335 : vector<16x6xf32>
    %337 = arith.addf %331, %336 : vector<16x6xf32>
    %338 = vector.extract_strided_slice %243 {offsets = [0, 18], sizes = [1, 6], strides = [1, 1]} : vector<1x128xf32> to vector<1x6xf32>
    %339 = vector.broadcast %338 : vector<1x6xf32> to vector<16x6xf32>
    %340 = arith.addf %337, %339 : vector<16x6xf32>
    %341 = arith.addf %238, %340 : vector<16x6xf32>
    %342 = vector.extract_strided_slice %243 {offsets = [0, 54], sizes = [1, 6], strides = [1, 1]} : vector<1x128xf32> to vector<1x6xf32>
    %343 = vector.extract_strided_slice %243 {offsets = [0, 60], sizes = [1, 6], strides = [1, 1]} : vector<1x128xf32> to vector<1x6xf32>
    %cst_43 = arith.constant dense<0.000000e+00> : vector<16xf32>
    %344 = vector.multi_reduction <add>, %341, %cst_43 [1] : vector<16x6xf32> to vector<16xf32>
    %345 = vector.shape_cast %344 : vector<16xf32> to vector<16x1xf32>
    %cst_44 = arith.constant 6.000000e+00 : f32
    %346 = vector.broadcast %cst_44 : f32 to vector<16x1xf32>
    %347 = arith.divf %345, %346 : vector<16x1xf32>
    %348 = arith.mulf %341, %341 : vector<16x6xf32>
    %cst_45 = arith.constant dense<0.000000e+00> : vector<16xf32>
    %349 = vector.multi_reduction <add>, %348, %cst_45 [1] : vector<16x6xf32> to vector<16xf32>
    %350 = vector.shape_cast %349 : vector<16xf32> to vector<16x1xf32>
    %cst_46 = arith.constant 6.000000e+00 : f32
    %351 = vector.broadcast %cst_46 : f32 to vector<16x1xf32>
    %352 = arith.divf %350, %351 : vector<16x1xf32>
    %353 = arith.mulf %347, %347 : vector<16x1xf32>
    %354 = arith.subf %352, %353 : vector<16x1xf32>
    %355 = vector.broadcast %347 : vector<16x1xf32> to vector<16x6xf32>
    %356 = arith.subf %341, %355 : vector<16x6xf32>
    %cst_47 = arith.constant 9.99999974E-6 : f32
    %357 = vector.broadcast %cst_47 : f32 to vector<16x1xf32>
    %358 = arith.addf %354, %357 : vector<16x1xf32>
    %359 = math.rsqrt %358 : vector<16x1xf32>
    %360 = vector.broadcast %359 : vector<16x1xf32> to vector<16x6xf32>
    %361 = arith.mulf %356, %360 : vector<16x6xf32>
    %362 = vector.broadcast %342 : vector<1x6xf32> to vector<16x6xf32>
    %363 = arith.mulf %361, %362 : vector<16x6xf32>
    %364 = vector.broadcast %343 : vector<1x6xf32> to vector<16x6xf32>
    %365 = arith.addf %363, %364 : vector<16x6xf32>
    %366 = vector.extract_strided_slice %365 {offsets = [0, 0], sizes = [16, 1], strides = [1, 1]} : vector<16x6xf32> to vector<16x1xf32>
    %367 = vector.extract_strided_slice %241 {offsets = [0, 0], sizes = [1, 24], strides = [1, 1]} : vector<6x24xf32> to vector<1x24xf32>
    %368 = vector.broadcast %366 : vector<16x1xf32> to vector<16x24xf32>
    %369 = vector.broadcast %367 : vector<1x24xf32> to vector<16x24xf32>
    %370 = arith.mulf %368, %369 : vector<16x24xf32>
    %371 = vector.extract_strided_slice %365 {offsets = [0, 1], sizes = [16, 1], strides = [1, 1]} : vector<16x6xf32> to vector<16x1xf32>
    %372 = vector.extract_strided_slice %241 {offsets = [1, 0], sizes = [1, 24], strides = [1, 1]} : vector<6x24xf32> to vector<1x24xf32>
    %373 = vector.broadcast %371 : vector<16x1xf32> to vector<16x24xf32>
    %374 = vector.broadcast %372 : vector<1x24xf32> to vector<16x24xf32>
    %375 = arith.mulf %373, %374 : vector<16x24xf32>
    %376 = arith.addf %370, %375 : vector<16x24xf32>
    %377 = vector.extract_strided_slice %365 {offsets = [0, 2], sizes = [16, 1], strides = [1, 1]} : vector<16x6xf32> to vector<16x1xf32>
    %378 = vector.extract_strided_slice %241 {offsets = [2, 0], sizes = [1, 24], strides = [1, 1]} : vector<6x24xf32> to vector<1x24xf32>
    %379 = vector.broadcast %377 : vector<16x1xf32> to vector<16x24xf32>
    %380 = vector.broadcast %378 : vector<1x24xf32> to vector<16x24xf32>
    %381 = arith.mulf %379, %380 : vector<16x24xf32>
    %382 = arith.addf %376, %381 : vector<16x24xf32>
    %383 = vector.extract_strided_slice %365 {offsets = [0, 3], sizes = [16, 1], strides = [1, 1]} : vector<16x6xf32> to vector<16x1xf32>
    %384 = vector.extract_strided_slice %241 {offsets = [3, 0], sizes = [1, 24], strides = [1, 1]} : vector<6x24xf32> to vector<1x24xf32>
    %385 = vector.broadcast %383 : vector<16x1xf32> to vector<16x24xf32>
    %386 = vector.broadcast %384 : vector<1x24xf32> to vector<16x24xf32>
    %387 = arith.mulf %385, %386 : vector<16x24xf32>
    %388 = arith.addf %382, %387 : vector<16x24xf32>
    %389 = vector.extract_strided_slice %365 {offsets = [0, 4], sizes = [16, 1], strides = [1, 1]} : vector<16x6xf32> to vector<16x1xf32>
    %390 = vector.extract_strided_slice %241 {offsets = [4, 0], sizes = [1, 24], strides = [1, 1]} : vector<6x24xf32> to vector<1x24xf32>
    %391 = vector.broadcast %389 : vector<16x1xf32> to vector<16x24xf32>
    %392 = vector.broadcast %390 : vector<1x24xf32> to vector<16x24xf32>
    %393 = arith.mulf %391, %392 : vector<16x24xf32>
    %394 = arith.addf %388, %393 : vector<16x24xf32>
    %395 = vector.extract_strided_slice %365 {offsets = [0, 5], sizes = [16, 1], strides = [1, 1]} : vector<16x6xf32> to vector<16x1xf32>
    %396 = vector.extract_strided_slice %241 {offsets = [5, 0], sizes = [1, 24], strides = [1, 1]} : vector<6x24xf32> to vector<1x24xf32>
    %397 = vector.broadcast %395 : vector<16x1xf32> to vector<16x24xf32>
    %398 = vector.broadcast %396 : vector<1x24xf32> to vector<16x24xf32>
    %399 = arith.mulf %397, %398 : vector<16x24xf32>
    %400 = arith.addf %394, %399 : vector<16x24xf32>
    %401 = vector.extract_strided_slice %243 {offsets = [0, 24], sizes = [1, 24], strides = [1, 1]} : vector<1x128xf32> to vector<1x24xf32>
    %402 = vector.broadcast %401 : vector<1x24xf32> to vector<16x24xf32>
    %403 = arith.addf %400, %402 : vector<16x24xf32>
    %cst_48 = arith.constant 0.000000e+00 : f32
    %404 = vector.broadcast %cst_48 : f32 to vector<16x24xf32>
    %405 = arith.maximumf %403, %404 : vector<16x24xf32>
    %cst_49 = arith.constant dense<0.000000e+00> : vector<16x6xf32>
    %406 = tpu.matmul %405, %242, %cst_49 {dimension_numbers = #tpu.dot_dimension_numbers<[1], [0], [0], [1], [0, 0, 1, 1], [], []>} : vector<16x24xf32>, vector<24x6xf32>, vector<16x6xf32> -> vector<16x6xf32>
    %407 = vector.extract_strided_slice %243 {offsets = [0, 48], sizes = [1, 6], strides = [1, 1]} : vector<1x128xf32> to vector<1x6xf32>
    %408 = vector.broadcast %407 : vector<1x6xf32> to vector<16x6xf32>
    %409 = arith.addf %406, %408 : vector<16x6xf32>
    %410 = arith.addf %365, %409 : vector<16x6xf32>
    %411 = vector.extract_strided_slice %243 {offsets = [0, 66], sizes = [1, 6], strides = [1, 1]} : vector<1x128xf32> to vector<1x6xf32>
    %412 = vector.extract_strided_slice %243 {offsets = [0, 72], sizes = [1, 6], strides = [1, 1]} : vector<1x128xf32> to vector<1x6xf32>
    %cst_50 = arith.constant dense<0.000000e+00> : vector<16xf32>
    %413 = vector.multi_reduction <add>, %410, %cst_50 [1] : vector<16x6xf32> to vector<16xf32>
    %414 = vector.shape_cast %413 : vector<16xf32> to vector<16x1xf32>
    %cst_51 = arith.constant 6.000000e+00 : f32
    %415 = vector.broadcast %cst_51 : f32 to vector<16x1xf32>
    %416 = arith.divf %414, %415 : vector<16x1xf32>
    %417 = arith.mulf %410, %410 : vector<16x6xf32>
    %cst_52 = arith.constant dense<0.000000e+00> : vector<16xf32>
    %418 = vector.multi_reduction <add>, %417, %cst_52 [1] : vector<16x6xf32> to vector<16xf32>
    %419 = vector.shape_cast %418 : vector<16xf32> to vector<16x1xf32>
    %cst_53 = arith.constant 6.000000e+00 : f32
    %420 = vector.broadcast %cst_53 : f32 to vector<16x1xf32>
    %421 = arith.divf %419, %420 : vector<16x1xf32>
    %422 = arith.mulf %416, %416 : vector<16x1xf32>
    %423 = arith.subf %421, %422 : vector<16x1xf32>
    %424 = vector.broadcast %416 : vector<16x1xf32> to vector<16x6xf32>
    %425 = arith.subf %410, %424 : vector<16x6xf32>
    %cst_54 = arith.constant 9.99999974E-6 : f32
    %426 = vector.broadcast %cst_54 : f32 to vector<16x1xf32>
    %427 = arith.addf %423, %426 : vector<16x1xf32>
    %428 = math.rsqrt %427 : vector<16x1xf32>
    %429 = vector.broadcast %428 : vector<16x1xf32> to vector<16x6xf32>
    %430 = arith.mulf %425, %429 : vector<16x6xf32>
    %431 = vector.broadcast %411 : vector<1x6xf32> to vector<16x6xf32>
    %432 = arith.mulf %430, %431 : vector<16x6xf32>
    %433 = vector.broadcast %412 : vector<1x6xf32> to vector<16x6xf32>
    %434 = arith.addf %432, %433 : vector<16x6xf32>
    %c16 = arith.constant 16 : index
    %c0_55 = arith.constant 0 : index
    %435 = vector.load %arg1[%c16, %c0_55] : memref<56x128xf32, #tpu.memory_space<vmem>>, vector<6x18xf32>
    %c16_56 = arith.constant 16 : index
    %c18_57 = arith.constant 18 : index
    %436 = vector.load %arg1[%c16_56, %c18_57] : memref<56x128xf32, #tpu.memory_space<vmem>>, vector<6x6xf32>
    %c16_58 = arith.constant 16 : index
    %c24_59 = arith.constant 24 : index
    %437 = vector.load %arg1[%c16_58, %c24_59] : memref<56x128xf32, #tpu.memory_space<vmem>>, vector<6x24xf32>
    %c0_60 = arith.constant 0 : index
    %c60 = arith.constant 60 : index
    %438 = vector.load %arg1[%c0_60, %c60] : memref<56x128xf32, #tpu.memory_space<vmem>>, vector<24x6xf32>
    %c34 = arith.constant 34 : index
    %c0_61 = arith.constant 0 : index
    %439 = vector.load %arg1[%c34, %c0_61] : memref<56x128xf32, #tpu.memory_space<vmem>>, vector<1x128xf32>
    %440 = vector.extract_strided_slice %434 {offsets = [0, 0], sizes = [16, 1], strides = [1, 1]} : vector<16x6xf32> to vector<16x1xf32>
    %441 = vector.extract_strided_slice %435 {offsets = [0, 0], sizes = [1, 18], strides = [1, 1]} : vector<6x18xf32> to vector<1x18xf32>
    %442 = vector.broadcast %440 : vector<16x1xf32> to vector<16x18xf32>
    %443 = vector.broadcast %441 : vector<1x18xf32> to vector<16x18xf32>
    %444 = arith.mulf %442, %443 : vector<16x18xf32>
    %445 = vector.extract_strided_slice %434 {offsets = [0, 1], sizes = [16, 1], strides = [1, 1]} : vector<16x6xf32> to vector<16x1xf32>
    %446 = vector.extract_strided_slice %435 {offsets = [1, 0], sizes = [1, 18], strides = [1, 1]} : vector<6x18xf32> to vector<1x18xf32>
    %447 = vector.broadcast %445 : vector<16x1xf32> to vector<16x18xf32>
    %448 = vector.broadcast %446 : vector<1x18xf32> to vector<16x18xf32>
    %449 = arith.mulf %447, %448 : vector<16x18xf32>
    %450 = arith.addf %444, %449 : vector<16x18xf32>
    %451 = vector.extract_strided_slice %434 {offsets = [0, 2], sizes = [16, 1], strides = [1, 1]} : vector<16x6xf32> to vector<16x1xf32>
    %452 = vector.extract_strided_slice %435 {offsets = [2, 0], sizes = [1, 18], strides = [1, 1]} : vector<6x18xf32> to vector<1x18xf32>
    %453 = vector.broadcast %451 : vector<16x1xf32> to vector<16x18xf32>
    %454 = vector.broadcast %452 : vector<1x18xf32> to vector<16x18xf32>
    %455 = arith.mulf %453, %454 : vector<16x18xf32>
    %456 = arith.addf %450, %455 : vector<16x18xf32>
    %457 = vector.extract_strided_slice %434 {offsets = [0, 3], sizes = [16, 1], strides = [1, 1]} : vector<16x6xf32> to vector<16x1xf32>
    %458 = vector.extract_strided_slice %435 {offsets = [3, 0], sizes = [1, 18], strides = [1, 1]} : vector<6x18xf32> to vector<1x18xf32>
    %459 = vector.broadcast %457 : vector<16x1xf32> to vector<16x18xf32>
    %460 = vector.broadcast %458 : vector<1x18xf32> to vector<16x18xf32>
    %461 = arith.mulf %459, %460 : vector<16x18xf32>
    %462 = arith.addf %456, %461 : vector<16x18xf32>
    %463 = vector.extract_strided_slice %434 {offsets = [0, 4], sizes = [16, 1], strides = [1, 1]} : vector<16x6xf32> to vector<16x1xf32>
    %464 = vector.extract_strided_slice %435 {offsets = [4, 0], sizes = [1, 18], strides = [1, 1]} : vector<6x18xf32> to vector<1x18xf32>
    %465 = vector.broadcast %463 : vector<16x1xf32> to vector<16x18xf32>
    %466 = vector.broadcast %464 : vector<1x18xf32> to vector<16x18xf32>
    %467 = arith.mulf %465, %466 : vector<16x18xf32>
    %468 = arith.addf %462, %467 : vector<16x18xf32>
    %469 = vector.extract_strided_slice %434 {offsets = [0, 5], sizes = [16, 1], strides = [1, 1]} : vector<16x6xf32> to vector<16x1xf32>
    %470 = vector.extract_strided_slice %435 {offsets = [5, 0], sizes = [1, 18], strides = [1, 1]} : vector<6x18xf32> to vector<1x18xf32>
    %471 = vector.broadcast %469 : vector<16x1xf32> to vector<16x18xf32>
    %472 = vector.broadcast %470 : vector<1x18xf32> to vector<16x18xf32>
    %473 = arith.mulf %471, %472 : vector<16x18xf32>
    %474 = arith.addf %468, %473 : vector<16x18xf32>
    %475 = vector.extract_strided_slice %439 {offsets = [0, 0], sizes = [1, 18], strides = [1, 1]} : vector<1x128xf32> to vector<1x18xf32>
    %476 = vector.broadcast %475 : vector<1x18xf32> to vector<16x18xf32>
    %477 = arith.addf %474, %476 : vector<16x18xf32>
    %478 = vector.extract_strided_slice %477 {offsets = [0, 0], sizes = [16, 6], strides = [1, 1]} : vector<16x18xf32> to vector<16x6xf32>
    %479 = vector.extract_strided_slice %477 {offsets = [0, 6], sizes = [16, 6], strides = [1, 1]} : vector<16x18xf32> to vector<16x6xf32>
    %480 = vector.extract_strided_slice %477 {offsets = [0, 12], sizes = [16, 6], strides = [1, 1]} : vector<16x18xf32> to vector<16x6xf32>
    %481 = vector.shape_cast %479 : vector<16x6xf32> to vector<16x1x6xf32>
    %482 = vector.shape_cast %478 : vector<16x6xf32> to vector<1x16x6xf32>
    %483 = vector.broadcast %481 : vector<16x1x6xf32> to vector<16x16x6xf32>
    %484 = vector.broadcast %482 : vector<1x16x6xf32> to vector<16x16x6xf32>
    %485 = arith.mulf %483, %484 : vector<16x16x6xf32>
    %486 = arith.addf %485, %42 : vector<16x16x6xf32>
    %cst_62 = arith.constant dense<0xFF800000> : vector<16x6xf32>
    %487 = vector.multi_reduction <maximumf>, %486, %cst_62 [0] : vector<16x16x6xf32> to vector<16x6xf32>
    %488 = vector.shape_cast %487 : vector<16x6xf32> to vector<1x16x6xf32>
    %489 = vector.broadcast %488 : vector<1x16x6xf32> to vector<16x16x6xf32>
    %490 = arith.subf %486, %489 : vector<16x16x6xf32>
    %491 = math.exp %490 : vector<16x16x6xf32>
    %cst_63 = arith.constant dense<0.000000e+00> : vector<16x6xf32>
    %492 = vector.multi_reduction <add>, %491, %cst_63 [0] : vector<16x16x6xf32> to vector<16x6xf32>
    %493 = vector.shape_cast %480 : vector<16x6xf32> to vector<16x1x6xf32>
    %494 = vector.broadcast %493 : vector<16x1x6xf32> to vector<16x16x6xf32>
    %495 = arith.mulf %491, %494 : vector<16x16x6xf32>
    %cst_64 = arith.constant dense<0.000000e+00> : vector<16x6xf32>
    %496 = vector.multi_reduction <add>, %495, %cst_64 [0] : vector<16x16x6xf32> to vector<16x6xf32>
    %497 = tpu.reciprocal %492 {approx = true} : vector<16x6xf32> -> vector<16x6xf32>
    %498 = arith.mulf %496, %497 : vector<16x6xf32>
    %499 = vector.extract_strided_slice %498 {offsets = [0, 0], sizes = [16, 1], strides = [1, 1]} : vector<16x6xf32> to vector<16x1xf32>
    %500 = vector.extract_strided_slice %436 {offsets = [0, 0], sizes = [1, 6], strides = [1, 1]} : vector<6x6xf32> to vector<1x6xf32>
    %501 = vector.broadcast %499 : vector<16x1xf32> to vector<16x6xf32>
    %502 = vector.broadcast %500 : vector<1x6xf32> to vector<16x6xf32>
    %503 = arith.mulf %501, %502 : vector<16x6xf32>
    %504 = vector.extract_strided_slice %498 {offsets = [0, 1], sizes = [16, 1], strides = [1, 1]} : vector<16x6xf32> to vector<16x1xf32>
    %505 = vector.extract_strided_slice %436 {offsets = [1, 0], sizes = [1, 6], strides = [1, 1]} : vector<6x6xf32> to vector<1x6xf32>
    %506 = vector.broadcast %504 : vector<16x1xf32> to vector<16x6xf32>
    %507 = vector.broadcast %505 : vector<1x6xf32> to vector<16x6xf32>
    %508 = arith.mulf %506, %507 : vector<16x6xf32>
    %509 = arith.addf %503, %508 : vector<16x6xf32>
    %510 = vector.extract_strided_slice %498 {offsets = [0, 2], sizes = [16, 1], strides = [1, 1]} : vector<16x6xf32> to vector<16x1xf32>
    %511 = vector.extract_strided_slice %436 {offsets = [2, 0], sizes = [1, 6], strides = [1, 1]} : vector<6x6xf32> to vector<1x6xf32>
    %512 = vector.broadcast %510 : vector<16x1xf32> to vector<16x6xf32>
    %513 = vector.broadcast %511 : vector<1x6xf32> to vector<16x6xf32>
    %514 = arith.mulf %512, %513 : vector<16x6xf32>
    %515 = arith.addf %509, %514 : vector<16x6xf32>
    %516 = vector.extract_strided_slice %498 {offsets = [0, 3], sizes = [16, 1], strides = [1, 1]} : vector<16x6xf32> to vector<16x1xf32>
    %517 = vector.extract_strided_slice %436 {offsets = [3, 0], sizes = [1, 6], strides = [1, 1]} : vector<6x6xf32> to vector<1x6xf32>
    %518 = vector.broadcast %516 : vector<16x1xf32> to vector<16x6xf32>
    %519 = vector.broadcast %517 : vector<1x6xf32> to vector<16x6xf32>
    %520 = arith.mulf %518, %519 : vector<16x6xf32>
    %521 = arith.addf %515, %520 : vector<16x6xf32>
    %522 = vector.extract_strided_slice %498 {offsets = [0, 4], sizes = [16, 1], strides = [1, 1]} : vector<16x6xf32> to vector<16x1xf32>
    %523 = vector.extract_strided_slice %436 {offsets = [4, 0], sizes = [1, 6], strides = [1, 1]} : vector<6x6xf32> to vector<1x6xf32>
    %524 = vector.broadcast %522 : vector<16x1xf32> to vector<16x6xf32>
    %525 = vector.broadcast %523 : vector<1x6xf32> to vector<16x6xf32>
    %526 = arith.mulf %524, %525 : vector<16x6xf32>
    %527 = arith.addf %521, %526 : vector<16x6xf32>
    %528 = vector.extract_strided_slice %498 {offsets = [0, 5], sizes = [16, 1], strides = [1, 1]} : vector<16x6xf32> to vector<16x1xf32>
    %529 = vector.extract_strided_slice %436 {offsets = [5, 0], sizes = [1, 6], strides = [1, 1]} : vector<6x6xf32> to vector<1x6xf32>
    %530 = vector.broadcast %528 : vector<16x1xf32> to vector<16x6xf32>
    %531 = vector.broadcast %529 : vector<1x6xf32> to vector<16x6xf32>
    %532 = arith.mulf %530, %531 : vector<16x6xf32>
    %533 = arith.addf %527, %532 : vector<16x6xf32>
    %534 = vector.extract_strided_slice %439 {offsets = [0, 18], sizes = [1, 6], strides = [1, 1]} : vector<1x128xf32> to vector<1x6xf32>
    %535 = vector.broadcast %534 : vector<1x6xf32> to vector<16x6xf32>
    %536 = arith.addf %533, %535 : vector<16x6xf32>
    %537 = arith.addf %434, %536 : vector<16x6xf32>
    %538 = vector.extract_strided_slice %439 {offsets = [0, 54], sizes = [1, 6], strides = [1, 1]} : vector<1x128xf32> to vector<1x6xf32>
    %539 = vector.extract_strided_slice %439 {offsets = [0, 60], sizes = [1, 6], strides = [1, 1]} : vector<1x128xf32> to vector<1x6xf32>
    %cst_65 = arith.constant dense<0.000000e+00> : vector<16xf32>
    %540 = vector.multi_reduction <add>, %537, %cst_65 [1] : vector<16x6xf32> to vector<16xf32>
    %541 = vector.shape_cast %540 : vector<16xf32> to vector<16x1xf32>
    %cst_66 = arith.constant 6.000000e+00 : f32
    %542 = vector.broadcast %cst_66 : f32 to vector<16x1xf32>
    %543 = arith.divf %541, %542 : vector<16x1xf32>
    %544 = arith.mulf %537, %537 : vector<16x6xf32>
    %cst_67 = arith.constant dense<0.000000e+00> : vector<16xf32>
    %545 = vector.multi_reduction <add>, %544, %cst_67 [1] : vector<16x6xf32> to vector<16xf32>
    %546 = vector.shape_cast %545 : vector<16xf32> to vector<16x1xf32>
    %cst_68 = arith.constant 6.000000e+00 : f32
    %547 = vector.broadcast %cst_68 : f32 to vector<16x1xf32>
    %548 = arith.divf %546, %547 : vector<16x1xf32>
    %549 = arith.mulf %543, %543 : vector<16x1xf32>
    %550 = arith.subf %548, %549 : vector<16x1xf32>
    %551 = vector.broadcast %543 : vector<16x1xf32> to vector<16x6xf32>
    %552 = arith.subf %537, %551 : vector<16x6xf32>
    %cst_69 = arith.constant 9.99999974E-6 : f32
    %553 = vector.broadcast %cst_69 : f32 to vector<16x1xf32>
    %554 = arith.addf %550, %553 : vector<16x1xf32>
    %555 = math.rsqrt %554 : vector<16x1xf32>
    %556 = vector.broadcast %555 : vector<16x1xf32> to vector<16x6xf32>
    %557 = arith.mulf %552, %556 : vector<16x6xf32>
    %558 = vector.broadcast %538 : vector<1x6xf32> to vector<16x6xf32>
    %559 = arith.mulf %557, %558 : vector<16x6xf32>
    %560 = vector.broadcast %539 : vector<1x6xf32> to vector<16x6xf32>
    %561 = arith.addf %559, %560 : vector<16x6xf32>
    %562 = vector.extract_strided_slice %561 {offsets = [0, 0], sizes = [16, 1], strides = [1, 1]} : vector<16x6xf32> to vector<16x1xf32>
    %563 = vector.extract_strided_slice %437 {offsets = [0, 0], sizes = [1, 24], strides = [1, 1]} : vector<6x24xf32> to vector<1x24xf32>
    %564 = vector.broadcast %562 : vector<16x1xf32> to vector<16x24xf32>
    %565 = vector.broadcast %563 : vector<1x24xf32> to vector<16x24xf32>
    %566 = arith.mulf %564, %565 : vector<16x24xf32>
    %567 = vector.extract_strided_slice %561 {offsets = [0, 1], sizes = [16, 1], strides = [1, 1]} : vector<16x6xf32> to vector<16x1xf32>
    %568 = vector.extract_strided_slice %437 {offsets = [1, 0], sizes = [1, 24], strides = [1, 1]} : vector<6x24xf32> to vector<1x24xf32>
    %569 = vector.broadcast %567 : vector<16x1xf32> to vector<16x24xf32>
    %570 = vector.broadcast %568 : vector<1x24xf32> to vector<16x24xf32>
    %571 = arith.mulf %569, %570 : vector<16x24xf32>
    %572 = arith.addf %566, %571 : vector<16x24xf32>
    %573 = vector.extract_strided_slice %561 {offsets = [0, 2], sizes = [16, 1], strides = [1, 1]} : vector<16x6xf32> to vector<16x1xf32>
    %574 = vector.extract_strided_slice %437 {offsets = [2, 0], sizes = [1, 24], strides = [1, 1]} : vector<6x24xf32> to vector<1x24xf32>
    %575 = vector.broadcast %573 : vector<16x1xf32> to vector<16x24xf32>
    %576 = vector.broadcast %574 : vector<1x24xf32> to vector<16x24xf32>
    %577 = arith.mulf %575, %576 : vector<16x24xf32>
    %578 = arith.addf %572, %577 : vector<16x24xf32>
    %579 = vector.extract_strided_slice %561 {offsets = [0, 3], sizes = [16, 1], strides = [1, 1]} : vector<16x6xf32> to vector<16x1xf32>
    %580 = vector.extract_strided_slice %437 {offsets = [3, 0], sizes = [1, 24], strides = [1, 1]} : vector<6x24xf32> to vector<1x24xf32>
    %581 = vector.broadcast %579 : vector<16x1xf32> to vector<16x24xf32>
    %582 = vector.broadcast %580 : vector<1x24xf32> to vector<16x24xf32>
    %583 = arith.mulf %581, %582 : vector<16x24xf32>
    %584 = arith.addf %578, %583 : vector<16x24xf32>
    %585 = vector.extract_strided_slice %561 {offsets = [0, 4], sizes = [16, 1], strides = [1, 1]} : vector<16x6xf32> to vector<16x1xf32>
    %586 = vector.extract_strided_slice %437 {offsets = [4, 0], sizes = [1, 24], strides = [1, 1]} : vector<6x24xf32> to vector<1x24xf32>
    %587 = vector.broadcast %585 : vector<16x1xf32> to vector<16x24xf32>
    %588 = vector.broadcast %586 : vector<1x24xf32> to vector<16x24xf32>
    %589 = arith.mulf %587, %588 : vector<16x24xf32>
    %590 = arith.addf %584, %589 : vector<16x24xf32>
    %591 = vector.extract_strided_slice %561 {offsets = [0, 5], sizes = [16, 1], strides = [1, 1]} : vector<16x6xf32> to vector<16x1xf32>
    %592 = vector.extract_strided_slice %437 {offsets = [5, 0], sizes = [1, 24], strides = [1, 1]} : vector<6x24xf32> to vector<1x24xf32>
    %593 = vector.broadcast %591 : vector<16x1xf32> to vector<16x24xf32>
    %594 = vector.broadcast %592 : vector<1x24xf32> to vector<16x24xf32>
    %595 = arith.mulf %593, %594 : vector<16x24xf32>
    %596 = arith.addf %590, %595 : vector<16x24xf32>
    %597 = vector.extract_strided_slice %439 {offsets = [0, 24], sizes = [1, 24], strides = [1, 1]} : vector<1x128xf32> to vector<1x24xf32>
    %598 = vector.broadcast %597 : vector<1x24xf32> to vector<16x24xf32>
    %599 = arith.addf %596, %598 : vector<16x24xf32>
    %cst_70 = arith.constant 0.000000e+00 : f32
    %600 = vector.broadcast %cst_70 : f32 to vector<16x24xf32>
    %601 = arith.maximumf %599, %600 : vector<16x24xf32>
    %cst_71 = arith.constant dense<0.000000e+00> : vector<16x6xf32>
    %602 = tpu.matmul %601, %438, %cst_71 {dimension_numbers = #tpu.dot_dimension_numbers<[1], [0], [0], [1], [0, 0, 1, 1], [], []>} : vector<16x24xf32>, vector<24x6xf32>, vector<16x6xf32> -> vector<16x6xf32>
    %603 = vector.extract_strided_slice %439 {offsets = [0, 48], sizes = [1, 6], strides = [1, 1]} : vector<1x128xf32> to vector<1x6xf32>
    %604 = vector.broadcast %603 : vector<1x6xf32> to vector<16x6xf32>
    %605 = arith.addf %602, %604 : vector<16x6xf32>
    %606 = arith.addf %561, %605 : vector<16x6xf32>
    %607 = vector.extract_strided_slice %439 {offsets = [0, 66], sizes = [1, 6], strides = [1, 1]} : vector<1x128xf32> to vector<1x6xf32>
    %608 = vector.extract_strided_slice %439 {offsets = [0, 72], sizes = [1, 6], strides = [1, 1]} : vector<1x128xf32> to vector<1x6xf32>
    %cst_72 = arith.constant dense<0.000000e+00> : vector<16xf32>
    %609 = vector.multi_reduction <add>, %606, %cst_72 [1] : vector<16x6xf32> to vector<16xf32>
    %610 = vector.shape_cast %609 : vector<16xf32> to vector<16x1xf32>
    %cst_73 = arith.constant 6.000000e+00 : f32
    %611 = vector.broadcast %cst_73 : f32 to vector<16x1xf32>
    %612 = arith.divf %610, %611 : vector<16x1xf32>
    %613 = arith.mulf %606, %606 : vector<16x6xf32>
    %cst_74 = arith.constant dense<0.000000e+00> : vector<16xf32>
    %614 = vector.multi_reduction <add>, %613, %cst_74 [1] : vector<16x6xf32> to vector<16xf32>
    %615 = vector.shape_cast %614 : vector<16xf32> to vector<16x1xf32>
    %cst_75 = arith.constant 6.000000e+00 : f32
    %616 = vector.broadcast %cst_75 : f32 to vector<16x1xf32>
    %617 = arith.divf %615, %616 : vector<16x1xf32>
    %618 = arith.mulf %612, %612 : vector<16x1xf32>
    %619 = arith.subf %617, %618 : vector<16x1xf32>
    %620 = vector.broadcast %612 : vector<16x1xf32> to vector<16x6xf32>
    %621 = arith.subf %606, %620 : vector<16x6xf32>
    %cst_76 = arith.constant 9.99999974E-6 : f32
    %622 = vector.broadcast %cst_76 : f32 to vector<16x1xf32>
    %623 = arith.addf %619, %622 : vector<16x1xf32>
    %624 = math.rsqrt %623 : vector<16x1xf32>
    %625 = vector.broadcast %624 : vector<16x1xf32> to vector<16x6xf32>
    %626 = arith.mulf %621, %625 : vector<16x6xf32>
    %627 = vector.broadcast %607 : vector<1x6xf32> to vector<16x6xf32>
    %628 = arith.mulf %626, %627 : vector<16x6xf32>
    %629 = vector.broadcast %608 : vector<1x6xf32> to vector<16x6xf32>
    %630 = arith.addf %628, %629 : vector<16x6xf32>
    %c24_77 = arith.constant 24 : index
    %c0_78 = arith.constant 0 : index
    %631 = vector.load %arg1[%c24_77, %c0_78] : memref<56x128xf32, #tpu.memory_space<vmem>>, vector<6x18xf32>
    %c24_79 = arith.constant 24 : index
    %c18_80 = arith.constant 18 : index
    %632 = vector.load %arg1[%c24_79, %c18_80] : memref<56x128xf32, #tpu.memory_space<vmem>>, vector<6x6xf32>
    %c24_81 = arith.constant 24 : index
    %c24_82 = arith.constant 24 : index
    %633 = vector.load %arg1[%c24_81, %c24_82] : memref<56x128xf32, #tpu.memory_space<vmem>>, vector<6x24xf32>
    %c0_83 = arith.constant 0 : index
    %c66 = arith.constant 66 : index
    %634 = vector.load %arg1[%c0_83, %c66] : memref<56x128xf32, #tpu.memory_space<vmem>>, vector<24x6xf32>
    %c35 = arith.constant 35 : index
    %c0_84 = arith.constant 0 : index
    %635 = vector.load %arg1[%c35, %c0_84] : memref<56x128xf32, #tpu.memory_space<vmem>>, vector<1x128xf32>
    %636 = vector.extract_strided_slice %630 {offsets = [0, 0], sizes = [16, 1], strides = [1, 1]} : vector<16x6xf32> to vector<16x1xf32>
    %637 = vector.extract_strided_slice %631 {offsets = [0, 0], sizes = [1, 18], strides = [1, 1]} : vector<6x18xf32> to vector<1x18xf32>
    %638 = vector.broadcast %636 : vector<16x1xf32> to vector<16x18xf32>
    %639 = vector.broadcast %637 : vector<1x18xf32> to vector<16x18xf32>
    %640 = arith.mulf %638, %639 : vector<16x18xf32>
    %641 = vector.extract_strided_slice %630 {offsets = [0, 1], sizes = [16, 1], strides = [1, 1]} : vector<16x6xf32> to vector<16x1xf32>
    %642 = vector.extract_strided_slice %631 {offsets = [1, 0], sizes = [1, 18], strides = [1, 1]} : vector<6x18xf32> to vector<1x18xf32>
    %643 = vector.broadcast %641 : vector<16x1xf32> to vector<16x18xf32>
    %644 = vector.broadcast %642 : vector<1x18xf32> to vector<16x18xf32>
    %645 = arith.mulf %643, %644 : vector<16x18xf32>
    %646 = arith.addf %640, %645 : vector<16x18xf32>
    %647 = vector.extract_strided_slice %630 {offsets = [0, 2], sizes = [16, 1], strides = [1, 1]} : vector<16x6xf32> to vector<16x1xf32>
    %648 = vector.extract_strided_slice %631 {offsets = [2, 0], sizes = [1, 18], strides = [1, 1]} : vector<6x18xf32> to vector<1x18xf32>
    %649 = vector.broadcast %647 : vector<16x1xf32> to vector<16x18xf32>
    %650 = vector.broadcast %648 : vector<1x18xf32> to vector<16x18xf32>
    %651 = arith.mulf %649, %650 : vector<16x18xf32>
    %652 = arith.addf %646, %651 : vector<16x18xf32>
    %653 = vector.extract_strided_slice %630 {offsets = [0, 3], sizes = [16, 1], strides = [1, 1]} : vector<16x6xf32> to vector<16x1xf32>
    %654 = vector.extract_strided_slice %631 {offsets = [3, 0], sizes = [1, 18], strides = [1, 1]} : vector<6x18xf32> to vector<1x18xf32>
    %655 = vector.broadcast %653 : vector<16x1xf32> to vector<16x18xf32>
    %656 = vector.broadcast %654 : vector<1x18xf32> to vector<16x18xf32>
    %657 = arith.mulf %655, %656 : vector<16x18xf32>
    %658 = arith.addf %652, %657 : vector<16x18xf32>
    %659 = vector.extract_strided_slice %630 {offsets = [0, 4], sizes = [16, 1], strides = [1, 1]} : vector<16x6xf32> to vector<16x1xf32>
    %660 = vector.extract_strided_slice %631 {offsets = [4, 0], sizes = [1, 18], strides = [1, 1]} : vector<6x18xf32> to vector<1x18xf32>
    %661 = vector.broadcast %659 : vector<16x1xf32> to vector<16x18xf32>
    %662 = vector.broadcast %660 : vector<1x18xf32> to vector<16x18xf32>
    %663 = arith.mulf %661, %662 : vector<16x18xf32>
    %664 = arith.addf %658, %663 : vector<16x18xf32>
    %665 = vector.extract_strided_slice %630 {offsets = [0, 5], sizes = [16, 1], strides = [1, 1]} : vector<16x6xf32> to vector<16x1xf32>
    %666 = vector.extract_strided_slice %631 {offsets = [5, 0], sizes = [1, 18], strides = [1, 1]} : vector<6x18xf32> to vector<1x18xf32>
    %667 = vector.broadcast %665 : vector<16x1xf32> to vector<16x18xf32>
    %668 = vector.broadcast %666 : vector<1x18xf32> to vector<16x18xf32>
    %669 = arith.mulf %667, %668 : vector<16x18xf32>
    %670 = arith.addf %664, %669 : vector<16x18xf32>
    %671 = vector.extract_strided_slice %635 {offsets = [0, 0], sizes = [1, 18], strides = [1, 1]} : vector<1x128xf32> to vector<1x18xf32>
    %672 = vector.broadcast %671 : vector<1x18xf32> to vector<16x18xf32>
    %673 = arith.addf %670, %672 : vector<16x18xf32>
    %674 = vector.extract_strided_slice %673 {offsets = [0, 0], sizes = [16, 6], strides = [1, 1]} : vector<16x18xf32> to vector<16x6xf32>
    %675 = vector.extract_strided_slice %673 {offsets = [0, 6], sizes = [16, 6], strides = [1, 1]} : vector<16x18xf32> to vector<16x6xf32>
    %676 = vector.extract_strided_slice %673 {offsets = [0, 12], sizes = [16, 6], strides = [1, 1]} : vector<16x18xf32> to vector<16x6xf32>
    %677 = vector.shape_cast %675 : vector<16x6xf32> to vector<16x1x6xf32>
    %678 = vector.shape_cast %674 : vector<16x6xf32> to vector<1x16x6xf32>
    %679 = vector.broadcast %677 : vector<16x1x6xf32> to vector<16x16x6xf32>
    %680 = vector.broadcast %678 : vector<1x16x6xf32> to vector<16x16x6xf32>
    %681 = arith.mulf %679, %680 : vector<16x16x6xf32>
    %682 = arith.addf %681, %42 : vector<16x16x6xf32>
    %cst_85 = arith.constant dense<0xFF800000> : vector<16x6xf32>
    %683 = vector.multi_reduction <maximumf>, %682, %cst_85 [0] : vector<16x16x6xf32> to vector<16x6xf32>
    %684 = vector.shape_cast %683 : vector<16x6xf32> to vector<1x16x6xf32>
    %685 = vector.broadcast %684 : vector<1x16x6xf32> to vector<16x16x6xf32>
    %686 = arith.subf %682, %685 : vector<16x16x6xf32>
    %687 = math.exp %686 : vector<16x16x6xf32>
    %cst_86 = arith.constant dense<0.000000e+00> : vector<16x6xf32>
    %688 = vector.multi_reduction <add>, %687, %cst_86 [0] : vector<16x16x6xf32> to vector<16x6xf32>
    %689 = vector.shape_cast %676 : vector<16x6xf32> to vector<16x1x6xf32>
    %690 = vector.broadcast %689 : vector<16x1x6xf32> to vector<16x16x6xf32>
    %691 = arith.mulf %687, %690 : vector<16x16x6xf32>
    %cst_87 = arith.constant dense<0.000000e+00> : vector<16x6xf32>
    %692 = vector.multi_reduction <add>, %691, %cst_87 [0] : vector<16x16x6xf32> to vector<16x6xf32>
    %693 = tpu.reciprocal %688 {approx = true} : vector<16x6xf32> -> vector<16x6xf32>
    %694 = arith.mulf %692, %693 : vector<16x6xf32>
    %695 = vector.extract_strided_slice %694 {offsets = [0, 0], sizes = [16, 1], strides = [1, 1]} : vector<16x6xf32> to vector<16x1xf32>
    %696 = vector.extract_strided_slice %632 {offsets = [0, 0], sizes = [1, 6], strides = [1, 1]} : vector<6x6xf32> to vector<1x6xf32>
    %697 = vector.broadcast %695 : vector<16x1xf32> to vector<16x6xf32>
    %698 = vector.broadcast %696 : vector<1x6xf32> to vector<16x6xf32>
    %699 = arith.mulf %697, %698 : vector<16x6xf32>
    %700 = vector.extract_strided_slice %694 {offsets = [0, 1], sizes = [16, 1], strides = [1, 1]} : vector<16x6xf32> to vector<16x1xf32>
    %701 = vector.extract_strided_slice %632 {offsets = [1, 0], sizes = [1, 6], strides = [1, 1]} : vector<6x6xf32> to vector<1x6xf32>
    %702 = vector.broadcast %700 : vector<16x1xf32> to vector<16x6xf32>
    %703 = vector.broadcast %701 : vector<1x6xf32> to vector<16x6xf32>
    %704 = arith.mulf %702, %703 : vector<16x6xf32>
    %705 = arith.addf %699, %704 : vector<16x6xf32>
    %706 = vector.extract_strided_slice %694 {offsets = [0, 2], sizes = [16, 1], strides = [1, 1]} : vector<16x6xf32> to vector<16x1xf32>
    %707 = vector.extract_strided_slice %632 {offsets = [2, 0], sizes = [1, 6], strides = [1, 1]} : vector<6x6xf32> to vector<1x6xf32>
    %708 = vector.broadcast %706 : vector<16x1xf32> to vector<16x6xf32>
    %709 = vector.broadcast %707 : vector<1x6xf32> to vector<16x6xf32>
    %710 = arith.mulf %708, %709 : vector<16x6xf32>
    %711 = arith.addf %705, %710 : vector<16x6xf32>
    %712 = vector.extract_strided_slice %694 {offsets = [0, 3], sizes = [16, 1], strides = [1, 1]} : vector<16x6xf32> to vector<16x1xf32>
    %713 = vector.extract_strided_slice %632 {offsets = [3, 0], sizes = [1, 6], strides = [1, 1]} : vector<6x6xf32> to vector<1x6xf32>
    %714 = vector.broadcast %712 : vector<16x1xf32> to vector<16x6xf32>
    %715 = vector.broadcast %713 : vector<1x6xf32> to vector<16x6xf32>
    %716 = arith.mulf %714, %715 : vector<16x6xf32>
    %717 = arith.addf %711, %716 : vector<16x6xf32>
    %718 = vector.extract_strided_slice %694 {offsets = [0, 4], sizes = [16, 1], strides = [1, 1]} : vector<16x6xf32> to vector<16x1xf32>
    %719 = vector.extract_strided_slice %632 {offsets = [4, 0], sizes = [1, 6], strides = [1, 1]} : vector<6x6xf32> to vector<1x6xf32>
    %720 = vector.broadcast %718 : vector<16x1xf32> to vector<16x6xf32>
    %721 = vector.broadcast %719 : vector<1x6xf32> to vector<16x6xf32>
    %722 = arith.mulf %720, %721 : vector<16x6xf32>
    %723 = arith.addf %717, %722 : vector<16x6xf32>
    %724 = vector.extract_strided_slice %694 {offsets = [0, 5], sizes = [16, 1], strides = [1, 1]} : vector<16x6xf32> to vector<16x1xf32>
    %725 = vector.extract_strided_slice %632 {offsets = [5, 0], sizes = [1, 6], strides = [1, 1]} : vector<6x6xf32> to vector<1x6xf32>
    %726 = vector.broadcast %724 : vector<16x1xf32> to vector<16x6xf32>
    %727 = vector.broadcast %725 : vector<1x6xf32> to vector<16x6xf32>
    %728 = arith.mulf %726, %727 : vector<16x6xf32>
    %729 = arith.addf %723, %728 : vector<16x6xf32>
    %730 = vector.extract_strided_slice %635 {offsets = [0, 18], sizes = [1, 6], strides = [1, 1]} : vector<1x128xf32> to vector<1x6xf32>
    %731 = vector.broadcast %730 : vector<1x6xf32> to vector<16x6xf32>
    %732 = arith.addf %729, %731 : vector<16x6xf32>
    %733 = arith.addf %630, %732 : vector<16x6xf32>
    %734 = vector.extract_strided_slice %635 {offsets = [0, 54], sizes = [1, 6], strides = [1, 1]} : vector<1x128xf32> to vector<1x6xf32>
    %735 = vector.extract_strided_slice %635 {offsets = [0, 60], sizes = [1, 6], strides = [1, 1]} : vector<1x128xf32> to vector<1x6xf32>
    %cst_88 = arith.constant dense<0.000000e+00> : vector<16xf32>
    %736 = vector.multi_reduction <add>, %733, %cst_88 [1] : vector<16x6xf32> to vector<16xf32>
    %737 = vector.shape_cast %736 : vector<16xf32> to vector<16x1xf32>
    %cst_89 = arith.constant 6.000000e+00 : f32
    %738 = vector.broadcast %cst_89 : f32 to vector<16x1xf32>
    %739 = arith.divf %737, %738 : vector<16x1xf32>
    %740 = arith.mulf %733, %733 : vector<16x6xf32>
    %cst_90 = arith.constant dense<0.000000e+00> : vector<16xf32>
    %741 = vector.multi_reduction <add>, %740, %cst_90 [1] : vector<16x6xf32> to vector<16xf32>
    %742 = vector.shape_cast %741 : vector<16xf32> to vector<16x1xf32>
    %cst_91 = arith.constant 6.000000e+00 : f32
    %743 = vector.broadcast %cst_91 : f32 to vector<16x1xf32>
    %744 = arith.divf %742, %743 : vector<16x1xf32>
    %745 = arith.mulf %739, %739 : vector<16x1xf32>
    %746 = arith.subf %744, %745 : vector<16x1xf32>
    %747 = vector.broadcast %739 : vector<16x1xf32> to vector<16x6xf32>
    %748 = arith.subf %733, %747 : vector<16x6xf32>
    %cst_92 = arith.constant 9.99999974E-6 : f32
    %749 = vector.broadcast %cst_92 : f32 to vector<16x1xf32>
    %750 = arith.addf %746, %749 : vector<16x1xf32>
    %751 = math.rsqrt %750 : vector<16x1xf32>
    %752 = vector.broadcast %751 : vector<16x1xf32> to vector<16x6xf32>
    %753 = arith.mulf %748, %752 : vector<16x6xf32>
    %754 = vector.broadcast %734 : vector<1x6xf32> to vector<16x6xf32>
    %755 = arith.mulf %753, %754 : vector<16x6xf32>
    %756 = vector.broadcast %735 : vector<1x6xf32> to vector<16x6xf32>
    %757 = arith.addf %755, %756 : vector<16x6xf32>
    %758 = vector.extract_strided_slice %757 {offsets = [0, 0], sizes = [16, 1], strides = [1, 1]} : vector<16x6xf32> to vector<16x1xf32>
    %759 = vector.extract_strided_slice %633 {offsets = [0, 0], sizes = [1, 24], strides = [1, 1]} : vector<6x24xf32> to vector<1x24xf32>
    %760 = vector.broadcast %758 : vector<16x1xf32> to vector<16x24xf32>
    %761 = vector.broadcast %759 : vector<1x24xf32> to vector<16x24xf32>
    %762 = arith.mulf %760, %761 : vector<16x24xf32>
    %763 = vector.extract_strided_slice %757 {offsets = [0, 1], sizes = [16, 1], strides = [1, 1]} : vector<16x6xf32> to vector<16x1xf32>
    %764 = vector.extract_strided_slice %633 {offsets = [1, 0], sizes = [1, 24], strides = [1, 1]} : vector<6x24xf32> to vector<1x24xf32>
    %765 = vector.broadcast %763 : vector<16x1xf32> to vector<16x24xf32>
    %766 = vector.broadcast %764 : vector<1x24xf32> to vector<16x24xf32>
    %767 = arith.mulf %765, %766 : vector<16x24xf32>
    %768 = arith.addf %762, %767 : vector<16x24xf32>
    %769 = vector.extract_strided_slice %757 {offsets = [0, 2], sizes = [16, 1], strides = [1, 1]} : vector<16x6xf32> to vector<16x1xf32>
    %770 = vector.extract_strided_slice %633 {offsets = [2, 0], sizes = [1, 24], strides = [1, 1]} : vector<6x24xf32> to vector<1x24xf32>
    %771 = vector.broadcast %769 : vector<16x1xf32> to vector<16x24xf32>
    %772 = vector.broadcast %770 : vector<1x24xf32> to vector<16x24xf32>
    %773 = arith.mulf %771, %772 : vector<16x24xf32>
    %774 = arith.addf %768, %773 : vector<16x24xf32>
    %775 = vector.extract_strided_slice %757 {offsets = [0, 3], sizes = [16, 1], strides = [1, 1]} : vector<16x6xf32> to vector<16x1xf32>
    %776 = vector.extract_strided_slice %633 {offsets = [3, 0], sizes = [1, 24], strides = [1, 1]} : vector<6x24xf32> to vector<1x24xf32>
    %777 = vector.broadcast %775 : vector<16x1xf32> to vector<16x24xf32>
    %778 = vector.broadcast %776 : vector<1x24xf32> to vector<16x24xf32>
    %779 = arith.mulf %777, %778 : vector<16x24xf32>
    %780 = arith.addf %774, %779 : vector<16x24xf32>
    %781 = vector.extract_strided_slice %757 {offsets = [0, 4], sizes = [16, 1], strides = [1, 1]} : vector<16x6xf32> to vector<16x1xf32>
    %782 = vector.extract_strided_slice %633 {offsets = [4, 0], sizes = [1, 24], strides = [1, 1]} : vector<6x24xf32> to vector<1x24xf32>
    %783 = vector.broadcast %781 : vector<16x1xf32> to vector<16x24xf32>
    %784 = vector.broadcast %782 : vector<1x24xf32> to vector<16x24xf32>
    %785 = arith.mulf %783, %784 : vector<16x24xf32>
    %786 = arith.addf %780, %785 : vector<16x24xf32>
    %787 = vector.extract_strided_slice %757 {offsets = [0, 5], sizes = [16, 1], strides = [1, 1]} : vector<16x6xf32> to vector<16x1xf32>
    %788 = vector.extract_strided_slice %633 {offsets = [5, 0], sizes = [1, 24], strides = [1, 1]} : vector<6x24xf32> to vector<1x24xf32>
    %789 = vector.broadcast %787 : vector<16x1xf32> to vector<16x24xf32>
    %790 = vector.broadcast %788 : vector<1x24xf32> to vector<16x24xf32>
    %791 = arith.mulf %789, %790 : vector<16x24xf32>
    %792 = arith.addf %786, %791 : vector<16x24xf32>
    %793 = vector.extract_strided_slice %635 {offsets = [0, 24], sizes = [1, 24], strides = [1, 1]} : vector<1x128xf32> to vector<1x24xf32>
    %794 = vector.broadcast %793 : vector<1x24xf32> to vector<16x24xf32>
    %795 = arith.addf %792, %794 : vector<16x24xf32>
    %cst_93 = arith.constant 0.000000e+00 : f32
    %796 = vector.broadcast %cst_93 : f32 to vector<16x24xf32>
    %797 = arith.maximumf %795, %796 : vector<16x24xf32>
    %cst_94 = arith.constant dense<0.000000e+00> : vector<16x6xf32>
    %798 = tpu.matmul %797, %634, %cst_94 {dimension_numbers = #tpu.dot_dimension_numbers<[1], [0], [0], [1], [0, 0, 1, 1], [], []>} : vector<16x24xf32>, vector<24x6xf32>, vector<16x6xf32> -> vector<16x6xf32>
    %799 = vector.extract_strided_slice %635 {offsets = [0, 48], sizes = [1, 6], strides = [1, 1]} : vector<1x128xf32> to vector<1x6xf32>
    %800 = vector.broadcast %799 : vector<1x6xf32> to vector<16x6xf32>
    %801 = arith.addf %798, %800 : vector<16x6xf32>
    %802 = arith.addf %757, %801 : vector<16x6xf32>
    %803 = vector.extract_strided_slice %635 {offsets = [0, 66], sizes = [1, 6], strides = [1, 1]} : vector<1x128xf32> to vector<1x6xf32>
    %804 = vector.extract_strided_slice %635 {offsets = [0, 72], sizes = [1, 6], strides = [1, 1]} : vector<1x128xf32> to vector<1x6xf32>
    %cst_95 = arith.constant dense<0.000000e+00> : vector<16xf32>
    %805 = vector.multi_reduction <add>, %802, %cst_95 [1] : vector<16x6xf32> to vector<16xf32>
    %806 = vector.shape_cast %805 : vector<16xf32> to vector<16x1xf32>
    %cst_96 = arith.constant 6.000000e+00 : f32
    %807 = vector.broadcast %cst_96 : f32 to vector<16x1xf32>
    %808 = arith.divf %806, %807 : vector<16x1xf32>
    %809 = arith.mulf %802, %802 : vector<16x6xf32>
    %cst_97 = arith.constant dense<0.000000e+00> : vector<16xf32>
    %810 = vector.multi_reduction <add>, %809, %cst_97 [1] : vector<16x6xf32> to vector<16xf32>
    %811 = vector.shape_cast %810 : vector<16xf32> to vector<16x1xf32>
    %cst_98 = arith.constant 6.000000e+00 : f32
    %812 = vector.broadcast %cst_98 : f32 to vector<16x1xf32>
    %813 = arith.divf %811, %812 : vector<16x1xf32>
    %814 = arith.mulf %808, %808 : vector<16x1xf32>
    %815 = arith.subf %813, %814 : vector<16x1xf32>
    %816 = vector.broadcast %808 : vector<16x1xf32> to vector<16x6xf32>
    %817 = arith.subf %802, %816 : vector<16x6xf32>
    %cst_99 = arith.constant 9.99999974E-6 : f32
    %818 = vector.broadcast %cst_99 : f32 to vector<16x1xf32>
    %819 = arith.addf %815, %818 : vector<16x1xf32>
    %820 = math.rsqrt %819 : vector<16x1xf32>
    %821 = vector.broadcast %820 : vector<16x1xf32> to vector<16x6xf32>
    %822 = arith.mulf %817, %821 : vector<16x6xf32>
    %823 = vector.broadcast %803 : vector<1x6xf32> to vector<16x6xf32>
    %824 = arith.mulf %822, %823 : vector<16x6xf32>
    %825 = vector.broadcast %804 : vector<1x6xf32> to vector<16x6xf32>
    %826 = arith.addf %824, %825 : vector<16x6xf32>
    %c36 = arith.constant 36 : index
    %c0_100 = arith.constant 0 : index
    %827 = vector.load %arg1[%c36, %c0_100] : memref<56x128xf32, #tpu.memory_space<vmem>>, vector<1x6xf32>
    %c36_101 = arith.constant 36 : index
    %c6 = arith.constant 6 : index
    %828 = vector.load %arg1[%c36_101, %c6] : memref<56x128xf32, #tpu.memory_space<vmem>>, vector<1x1xf32>
    %829 = vector.broadcast %827 : vector<1x6xf32> to vector<16x6xf32>
    %830 = arith.mulf %826, %829 : vector<16x6xf32>
    %cst_102 = arith.constant dense<0.000000e+00> : vector<16xf32>
    %831 = vector.multi_reduction <add>, %830, %cst_102 [1] : vector<16x6xf32> to vector<16xf32>
    %832 = vector.shape_cast %831 : vector<16xf32> to vector<16x1xf32>
    %833 = vector.broadcast %828 : vector<1x1xf32> to vector<16x1xf32>
    %834 = arith.addf %832, %833 : vector<16x1xf32>
    %c0_103 = arith.constant 0 : index
    %c0_104 = arith.constant 0 : index
    %835 = vector.load %arg2[%c0_103, %c0_104] : memref<16x1xf32, #tpu.memory_space<vmem>>, vector<16x1xf32>
    tpu.vector_store %arg2[%c0_103, %c0_104], %834 {strides = array<i32>} : memref<16x1xf32, #tpu.memory_space<vmem>>, vector<16x1xf32>,
    return
  }
}

</mosaic_0001>

<llo_original>
// kernel: transformer_forward.1
$region0: #{transformer_forward.1}
  #allocation0 [shape = 'u32[]', space=smem, size = 0x4, offset = 0x4, fixed_abs, tag = 'smem constant byte address 0x4 - core index']
  #allocation1 [shape = 'u32[144,128]{1,0:T(1,128)}', space=vmem, size = 0x12000, scoped, tag = 'internal scratch']
  %s0 = inlined_call_operand.vmem [shape: f32[16,6], index: 0, kind: input, shape index: {}]
  %s1 = inlined_call_operand.hbm [shape: f32[56,128], index: 1, kind: input, shape index: {}]
  %s2 = inlined_call_operand.vmem [shape: f32[16,1], index: 2, kind: output, shape index: {}]
  %s3 = sld [smem:[#allocation0]]
  $region22: #{transformer_forward.1} parent=0
    _
  %s5 = ssub.s32 1, %s3
  %s6 = scalar_select 0, %s5, %s3
  $region1: #{transformer_forward.1} parent=0
    #allocation2 [shape = 'u8[28672]{0}', space=vmem, size = 0x7000, scoped, tag = 'input window, operand 1, single buffered']
    #allocation3 [shape = 's32[1]{0}', space=sflag, size = 0x4, scoped, tag = 'scoped memory for transformer_forward.1']
    %7 = vsyncpa [#allocation3], 0
    // Predicated region
    $region2: #{transformer_forward.1} parent=1 // pred_check
      _
    $region3: #{transformer_forward.1} parent=1 // pred_check_branch
      %9 = sbr.rel (0) target = $region5
    $region4: #{transformer_forward.1} parent=1 // pred_region
      _
    $region5: #{transformer_forward.1} parent=1 // pred_fallthru
      _
    // Predicated region
    $region6: #{transformer_forward.1} parent=1 // pred_check
      _
    $region7: #{transformer_forward.1} parent=1 // pred_check_branch
      %11 = sbr.rel (0) target = $region9
    $region8: #{transformer_forward.1} parent=1 // pred_region
      %s13 = ssub.s32 896, 896
      %14 = vsyncadd [#allocation3], %s13
      %s15 = sshll.u32 [#allocation2], 4
      %s16 = int_to_ptr.vmem [resolvable:$true] %s15
      %21 = dma.hbm_to_vmem [thread:$0]  %s1, 896, %s16, [#allocation3], 128, 128, 8
    $region9: #{transformer_forward.1} parent=1 // pred_fallthru
      _
    // Predicated region
    $region10: #{transformer_forward.1} parent=1 // pred_check
      _
    $region11: #{transformer_forward.1} parent=1 // pred_check_branch
      %23 = sbr.rel (0) target = $region13
    $region12: #{transformer_forward.1} parent=1 // pred_region
      %24 = dma.done [#allocation3], 896
    $region13: #{transformer_forward.1} parent=1 // pred_fallthru
      _
    %v25 = vld [vmem:[%s0] sm:$0xff]
    %v26 = vld [vmem:[%s0 + $0x8] sm:$0xff]
    %v27 = vld [vmem:[#allocation2 + $0x28] sm:$0xff]
    %v28 = vld [vmem:[#allocation2 + $0x30] sm:$0xff]
    %v29 = vadd.f32 %v25, %v27
    %v30 = vadd.f32 %v26, %v28
    %v31 = vlaneseq
    %v32 = vshrl.u32 %v31, 7
    %v33 = vadd.s32 %v32, 8
    %vm34 = vcmp.lt.s32.totalorder %v32, 0
    %v35 = vsub.s32 0, %v32
    %v36 = vsel %vm34, %v35, %v32
    %v37 = vshrl.u32 %v36, 1
    %v38 = vand.u32 %v36, 1
    %v39 = vsub.s32 0, %v38
    %v40 = vsel %vm34, %v39, %v38
    %vm41 = vcmp.lt.s32.totalorder %v33, 0
    %v42 = vsub.s32 0, %v33
    %v43 = vsel %vm41, %v42, %v33
    %v44 = vshrl.u32 %v43, 1
    %v45 = vand.u32 %v43, 1
    %v46 = vsub.s32 0, %v45
    %v47 = vsel %vm41, %v46, %v45
    %vm48 = vcmp.ne.s32.totalorder %v40, 0
    %vm49 = vcmp.ne.s32.totalorder %v47, 0
    %vm50 = vcmp.lt.s32.totalorder %v40, 0
    %vm51 = vcmp.lt.s32.totalorder %v47, 0
    %vm52 = vmand %vm50, %vm48
    %vm53 = vmand %vm51, %vm49
    %v54 = vadd.s32 %v40, 2
    %v55 = vadd.s32 %v47, 2
    %v56 = vsel %vm52, %v54, %v40
    %v57 = vsel %vm53, %v55, %v47
    %vm58 = vcmp.eq.s32.totalorder %v56, 0
    %vm59 = vcmp.eq.s32.totalorder %v57, 0
    %vm60 = vcmp.eq.s32.totalorder %v56, 1
    %vm61 = vcmp.eq.s32.totalorder %v57, 1
    %vm62 = vcmp.ge.s32.totalorder %v32, 0
    %vm63 = vcmp.ge.s32.totalorder %v33, 0
    %vm64 = vcmp.ge.s32.totalorder %v32, 1
    %vm65 = vcmp.ge.s32.totalorder %v33, 1
    %vm66 = vcmp.ge.s32.totalorder %v32, 2
    %vm67 = vcmp.ge.s32.totalorder %v33, 2
    %vm68 = vcmp.ge.s32.totalorder %v32, 3
    %vm69 = vcmp.ge.s32.totalorder %v33, 3
    %vm70 = vcmp.ge.s32.totalorder %v32, 4
    %vm71 = vcmp.ge.s32.totalorder %v33, 4
    %vm72 = vcmp.ge.s32.totalorder %v32, 5
    %vm73 = vcmp.ge.s32.totalorder %v33, 5
    %vm74 = vcmp.ge.s32.totalorder %v32, 6
    %vm75 = vcmp.ge.s32.totalorder %v33, 6
    %vm76 = vcmp.ge.s32.totalorder %v32, 7
    %vm77 = vcmp.ge.s32.totalorder %v33, 7
    %vm78 = vcmp.ge.s32.totalorder %v32, 8
    %vm79 = vcmp.ge.s32.totalorder %v33, 8
    %vm80 = vcmp.ge.s32.totalorder %v32, 9
    %vm81 = vcmp.ge.s32.totalorder %v33, 9
    %vm82 = vcmp.ge.s32.totalorder %v32, 10
    %vm83 = vcmp.ge.s32.totalorder %v33, 10
    %vm84 = vcmp.ge.s32.totalorder %v32, 11
    %vm85 = vcmp.ge.s32.totalorder %v33, 11
    %vm86 = vcmp.ge.s32.totalorder %v32, 12
    %vm87 = vcmp.ge.s32.totalorder %v33, 12
    %vm88 = vcmp.ge.s32.totalorder %v32, 13
    %vm89 = vcmp.ge.s32.totalorder %v33, 13
    %vm90 = vcmp.ge.s32.totalorder %v32, 14
    %vm91 = vcmp.ge.s32.totalorder %v33, 14
    %vm92 = vcmp.ge.s32.totalorder %v32, 15
    %vm93 = vcmp.ge.s32.totalorder %v33, 15
    %vm94 = vmand %vm58, %vm62
    %vm95 = vmand %vm59, %vm63
    %vm96 = vmand %vm60, %vm64
    %vm97 = vmand %vm61, %vm65
    %vm98 = vmand %vm58, %vm66
    %vm99 = vmand %vm59, %vm67
    %vm100 = vmand %vm60, %vm68
    %vm101 = vmand %vm61, %vm69
    %vm102 = vmand %vm58, %vm70
    %vm103 = vmand %vm59, %vm71
    %vm104 = vmand %vm60, %vm72
    %vm105 = vmand %vm61, %vm73
    %vm106 = vmand %vm58, %vm74
    %vm107 = vmand %vm59, %vm75
    %vm108 = vmand %vm60, %vm76
    %vm109 = vmand %vm61, %vm77
    %vm110 = vmand %vm58, %vm78
    %vm111 = vmand %vm59, %vm79
    %vm112 = vmand %vm60, %vm80
    %vm113 = vmand %vm61, %vm81
    %vm114 = vmand %vm58, %vm82
    %vm115 = vmand %vm59, %vm83
    %vm116 = vmand %vm60, %vm84
    %vm117 = vmand %vm61, %vm85
    %vm118 = vmand %vm58, %vm86
    %vm119 = vmand %vm59, %vm87
    %vm120 = vmand %vm60, %vm88
    %vm121 = vmand %vm61, %vm89
    %vm122 = vmand %vm58, %vm90
    %vm123 = vmand %vm59, %vm91
    %vm124 = vmand %vm60, %vm92
    %vm125 = vmand %vm61, %vm93
    %v126 = vsel %vm94, 0.0, -1e+09
    %v127 = vsel %vm95, 0.0, -1e+09
    %v128 = vsel %vm96, 0.0, -1e+09
    %v129 = vsel %vm97, 0.0, -1e+09
    %v130 = vsel %vm98, 0.0, -1e+09
    %v131 = vsel %vm99, 0.0, -1e+09
    %v132 = vsel %vm100, 0.0, -1e+09
    %v133 = vsel %vm101, 0.0, -1e+09
    %v134 = vsel %vm102, 0.0, -1e+09
    %v135 = vsel %vm103, 0.0, -1e+09
    %v136 = vsel %vm104, 0.0, -1e+09
    %v137 = vsel %vm105, 0.0, -1e+09
    %v138 = vsel %vm106, 0.0, -1e+09
    %v139 = vsel %vm107, 0.0, -1e+09
    %v140 = vsel %vm108, 0.0, -1e+09
    %v141 = vsel %vm109, 0.0, -1e+09
    %v142 = vsel %vm110, 0.0, -1e+09
    %v143 = vsel %vm111, 0.0, -1e+09
    %v144 = vsel %vm112, 0.0, -1e+09
    %v145 = vsel %vm113, 0.0, -1e+09
    %v146 = vsel %vm114, 0.0, -1e+09
    %v147 = vsel %vm115, 0.0, -1e+09
    %v148 = vsel %vm116, 0.0, -1e+09
    %v149 = vsel %vm117, 0.0, -1e+09
    %v150 = vsel %vm118, 0.0, -1e+09
    %v151 = vsel %vm119, 0.0, -1e+09
    %v152 = vsel %vm120, 0.0, -1e+09
    %v153 = vsel %vm121, 0.0, -1e+09
    %v154 = vsel %vm122, 0.0, -1e+09
    %v155 = vsel %vm123, 0.0, -1e+09
    %v156 = vsel %vm124, 0.0, -1e+09
    %v157 = vsel %vm125, 0.0, -1e+09
    %v158 = vld [vmem:[#allocation2] sm:$0x3f]
    %v159 = vld [vmem:[#allocation2] sm:$0xff]
    %v160 = vld [vmem:[#allocation2 + $0x8] sm:$0xff]
    %v161 = vld [vmem:[#allocation2 + $0x10] sm:$0xff]
    %v162 = vld [vmem:[#allocation2 + $0x20] sm:$0x1]
    %164 = vset.pattern.permute.xlu0 0
    %165 = vperm.xlu0 %164, %v29
    %v166 = vpop.permute.xlu0 %165
    %169 = vset.pattern.permute.xlu0 0
    %170 = vperm.xlu0 %169, %v30
    %v171 = vpop.permute.xlu0 %170
    %v173 = vlaneseq
    %v174 = vshrl.u32 %v173, 7
    %v175 = vsub.s32 0, %v174
    %v176 = vrot.slane %v158, %v175
    %v177 = vmul.f32 %v166, %v176
    %v178 = vmul.f32 %v171, %v176
    %179 = vset.pattern.permute.xlu0 1
    %180 = vperm.xlu0 %179, %v29
    %v181 = vpop.permute.xlu0 %180
    %183 = vset.pattern.permute.xlu0 1
    %184 = vperm.xlu0 %183, %v30
    %v185 = vpop.permute.xlu0 %184
    %v187 = vlaneseq
    %v188 = vshrl.u32 %v187, 7
    %v189 = vsub.s32 1, %v188
    %v190 = vrot.slane %v158, %v189
    %v191 = vmul.f32 %v181, %v190
    %v192 = vmul.f32 %v185, %v190
    %v193 = vadd.f32 %v177, %v191
    %v194 = vadd.f32 %v178, %v192
    %195 = vset.pattern.permute.xlu0 2
    %196 = vperm.xlu0 %195, %v29
    %v197 = vpop.permute.xlu0 %196
    %199 = vset.pattern.permute.xlu0 2
    %200 = vperm.xlu0 %199, %v30
    %v201 = vpop.permute.xlu0 %200
    %v203 = vlaneseq
    %v204 = vshrl.u32 %v203, 7
    %v205 = vsub.s32 2, %v204
    %v206 = vrot.slane %v158, %v205
    %v207 = vmul.f32 %v197, %v206
    %v208 = vmul.f32 %v201, %v206
    %v209 = vadd.f32 %v193, %v207
    %v210 = vadd.f32 %v194, %v208
    %211 = vset.pattern.permute.xlu0 3
    %212 = vperm.xlu0 %211, %v29
    %v213 = vpop.permute.xlu0 %212
    %215 = vset.pattern.permute.xlu0 3
    %216 = vperm.xlu0 %215, %v30
    %v217 = vpop.permute.xlu0 %216
    %v219 = vlaneseq
    %v220 = vshrl.u32 %v219, 7
    %v221 = vsub.s32 3, %v220
    %v222 = vrot.slane %v158, %v221
    %v223 = vmul.f32 %v213, %v222
    %v224 = vmul.f32 %v217, %v222
    %v225 = vadd.f32 %v209, %v223
    %v226 = vadd.f32 %v210, %v224
    %227 = vset.pattern.permute.xlu0 4
    %228 = vperm.xlu0 %227, %v29
    %v229 = vpop.permute.xlu0 %228
    %231 = vset.pattern.permute.xlu0 4
    %232 = vperm.xlu0 %231, %v30
    %v233 = vpop.permute.xlu0 %232
    %v235 = vlaneseq
    %v236 = vshrl.u32 %v235, 7
    %v237 = vsub.s32 4, %v236
    %v238 = vrot.slane %v158, %v237
    %v239 = vmul.f32 %v229, %v238
    %v240 = vmul.f32 %v233, %v238
    %v241 = vadd.f32 %v225, %v239
    %v242 = vadd.f32 %v226, %v240
    %243 = vset.pattern.permute.xlu0 5
    %244 = vperm.xlu0 %243, %v29
    %v245 = vpop.permute.xlu0 %244
    %247 = vset.pattern.permute.xlu0 5
    %248 = vperm.xlu0 %247, %v30
    %v249 = vpop.permute.xlu0 %248
    %v251 = vlaneseq
    %v252 = vshrl.u32 %v251, 7
    %v253 = vsub.s32 5, %v252
    %v254 = vrot.slane %v158, %v253
    %v255 = vmul.f32 %v245, %v254
    %v256 = vmul.f32 %v249, %v254
    %v257 = vadd.f32 %v241, %v255
    %v258 = vadd.f32 %v242, %v256
    %v259 = vlaneseq
    %v260 = vshrl.u32 %v259, 7
    %v261 = vsub.s32 0, %v260
    %v262 = vrot.slane %v162, %v261
    %v263 = vadd.f32 %v257, %v262
    %v264 = vadd.f32 %v258, %v262
    %v267 = vcombine.high %v263, %v263
    %v269 = vunpack.c.l.s4 1966171168
    %v270 = vunpack.c.0.s8 %v269
    %v271 = vlaneseq
    %v272 = vshrl.u32 %v271, 7
    %v273 = vsub.s32 %v270, %v272
    %v274 = vrot.slane %v263, %v273
    %v276 = vunpack.c.l.s4 1966171168
    %v277 = vunpack.c.0.s8 %v276
    %v278 = vlaneseq
    %v279 = vshrl.u32 %v278, 7
    %v280 = vsub.s32 %v277, %v279
    %v281 = vrot.slane %v267, %v280
    %v282 = vcombine.high %v274, %v274
    %v283 = vcombine.high %v281, %v281
    %v285 = vunpack.c.l.s4 1966171168
    %v286 = vunpack.c.0.s8 %v285
    %v287 = vlaneseq
    %v288 = vshrl.u32 %v287, 7
    %v289 = vsub.s32 %v286, %v288
    %v290 = vrot.slane %v274, %v289
    %v292 = vunpack.c.l.s4 1966171168
    %v293 = vunpack.c.0.s8 %v292
    %v294 = vlaneseq
    %v295 = vshrl.u32 %v294, 7
    %v296 = vsub.s32 %v293, %v295
    %v297 = vrot.slane %v281, %v296
    %v299 = vunpack.c.l.s4 1966171168
    %v300 = vunpack.c.0.s8 %v299
    %v301 = vlaneseq
    %v302 = vshrl.u32 %v301, 7
    %v303 = vsub.s32 %v300, %v302
    %v304 = vrot.slane %v282, %v303
    %v306 = vunpack.c.l.s4 1966171168
    %v307 = vunpack.c.0.s8 %v306
    %v308 = vlaneseq
    %v309 = vshrl.u32 %v308, 7
    %v310 = vsub.s32 %v307, %v309
    %v311 = vrot.slane %v283, %v310
    %v312 = vcombine.high %v290, %v290
    %v313 = vcombine.high %v297, %v297
    %v314 = vcombine.high %v304, %v304
    %v315 = vcombine.high %v311, %v311
    %v316 = vcombine.high %v264, %v264
    %v318 = vunpack.c.l.s4 1966171168
    %v319 = vunpack.c.0.s8 %v318
    %v320 = vlaneseq
    %v321 = vshrl.u32 %v320, 7
    %v322 = vsub.s32 %v319, %v321
    %v323 = vrot.slane %v264, %v322
    %v325 = vunpack.c.l.s4 1966171168
    %v326 = vunpack.c.0.s8 %v325
    %v327 = vlaneseq
    %v328 = vshrl.u32 %v327, 7
    %v329 = vsub.s32 %v326, %v328
    %v330 = vrot.slane %v316, %v329
    %v331 = vcombine.high %v323, %v323
    %v332 = vcombine.high %v330, %v330
    %v334 = vunpack.c.l.s4 1966171168
    %v335 = vunpack.c.0.s8 %v334
    %v336 = vlaneseq
    %v337 = vshrl.u32 %v336, 7
    %v338 = vsub.s32 %v335, %v337
    %v339 = vrot.slane %v323, %v338
    %v341 = vunpack.c.l.s4 1966171168
    %v342 = vunpack.c.0.s8 %v341
    %v343 = vlaneseq
    %v344 = vshrl.u32 %v343, 7
    %v345 = vsub.s32 %v342, %v344
    %v346 = vrot.slane %v330, %v345
    %v348 = vunpack.c.l.s4 1966171168
    %v349 = vunpack.c.0.s8 %v348
    %v350 = vlaneseq
    %v351 = vshrl.u32 %v350, 7
    %v352 = vsub.s32 %v349, %v351
    %v353 = vrot.slane %v331, %v352
    %v355 = vunpack.c.l.s4 1966171168
    %v356 = vunpack.c.0.s8 %v355
    %v357 = vlaneseq
    %v358 = vshrl.u32 %v357, 7
    %v359 = vsub.s32 %v356, %v358
    %v360 = vrot.slane %v332, %v359
    %v361 = vcombine.high %v339, %v339
    %v362 = vcombine.high %v346, %v346
    %v363 = vcombine.high %v353, %v353
    %v364 = vcombine.high %v360, %v360
    %v365 = vlaneseq
    %v366 = vshrl.u32 %v365, 7
    %v367 = vsub.s32 0, %v366
    %v368 = vrot.slane %v290, %v367
    %v369 = vlaneseq
    %v370 = vshrl.u32 %v369, 7
    %v371 = vsub.s32 0, %v370
    %v372 = vrot.slane %v304, %v371
    %v373 = vlaneseq
    %v374 = vshrl.u32 %v373, 7
    %v375 = vsub.s32 0, %v374
    %v376 = vrot.slane %v312, %v375
    %v377 = vlaneseq
    %v378 = vshrl.u32 %v377, 7
    %v379 = vsub.s32 0, %v378
    %v380 = vrot.slane %v314, %v379
    %v381 = vlaneseq
    %v382 = vshrl.u32 %v381, 7
    %v383 = vsub.s32 0, %v382
    %v384 = vrot.slane %v297, %v383
    %v385 = vlaneseq
    %v386 = vshrl.u32 %v385, 7
    %v387 = vsub.s32 0, %v386
    %v388 = vrot.slane %v311, %v387
    %v389 = vlaneseq
    %v390 = vshrl.u32 %v389, 7
    %v391 = vsub.s32 0, %v390
    %v392 = vrot.slane %v313, %v391
    %v393 = vlaneseq
    %v394 = vshrl.u32 %v393, 7
    %v395 = vsub.s32 0, %v394
    %v396 = vrot.slane %v315, %v395
    %v397 = vlaneseq
    %v398 = vshrl.u32 %v397, 7
    %v399 = vsub.s32 0, %v398
    %v400 = vrot.slane %v339, %v399
    %v401 = vlaneseq
    %v402 = vshrl.u32 %v401, 7
    %v403 = vsub.s32 0, %v402
    %v404 = vrot.slane %v353, %v403
    %v405 = vlaneseq
    %v406 = vshrl.u32 %v405, 7
    %v407 = vsub.s32 0, %v406
    %v408 = vrot.slane %v361, %v407
    %v409 = vlaneseq
    %v410 = vshrl.u32 %v409, 7
    %v411 = vsub.s32 0, %v410
    %v412 = vrot.slane %v363, %v411
    %v413 = vlaneseq
    %v414 = vshrl.u32 %v413, 7
    %v415 = vsub.s32 0, %v414
    %v416 = vrot.slane %v346, %v415
    %v417 = vlaneseq
    %v418 = vshrl.u32 %v417, 7
    %v419 = vsub.s32 0, %v418
    %v420 = vrot.slane %v360, %v419
    %v421 = vlaneseq
    %v422 = vshrl.u32 %v421, 7
    %v423 = vsub.s32 0, %v422
    %v424 = vrot.slane %v362, %v423
    %v425 = vlaneseq
    %v426 = vshrl.u32 %v425, 7
    %v427 = vsub.s32 0, %v426
    %v428 = vrot.slane %v364, %v427
    %445 = vrot.lane.b32.xlu0 %v263, 6
    %v446 = vpop.permute.xlu0 %445
    %447 = vrot.lane.b32.xlu0 %v264, 6
    %v448 = vpop.permute.xlu0 %447
    %v451 = vmul.f32 %v368, %v446
    %v452 = vmul.f32 %v368, %v448
    %v453 = vmul.f32 %v372, %v446
    %v454 = vmul.f32 %v372, %v448
    %v455 = vmul.f32 %v376, %v446
    %v456 = vmul.f32 %v376, %v448
    %v457 = vmul.f32 %v380, %v446
    %v458 = vmul.f32 %v380, %v448
    %v459 = vmul.f32 %v384, %v446
    %v460 = vmul.f32 %v384, %v448
    %v461 = vmul.f32 %v388, %v446
    %v462 = vmul.f32 %v388, %v448
    %v463 = vmul.f32 %v392, %v446
    %v464 = vmul.f32 %v392, %v448
    %v465 = vmul.f32 %v396, %v446
    %v466 = vmul.f32 %v396, %v448
    %v467 = vmul.f32 %v400, %v446
    %v468 = vmul.f32 %v400, %v448
    %v469 = vmul.f32 %v404, %v446
    %v470 = vmul.f32 %v404, %v448
    %v471 = vmul.f32 %v408, %v446
    %v472 = vmul.f32 %v408, %v448
    %v473 = vmul.f32 %v412, %v446
    %v474 = vmul.f32 %v412, %v448
    %v475 = vmul.f32 %v416, %v446
    %v476 = vmul.f32 %v416, %v448
    %v477 = vmul.f32 %v420, %v446
    %v478 = vmul.f32 %v420, %v448
    %v479 = vmul.f32 %v424, %v446
    %v480 = vmul.f32 %v424, %v448
    %v481 = vmul.f32 %v428, %v446
    %v482 = vmul.f32 %v428, %v448
    %v483 = vadd.f32 %v451, %v126
    %v484 = vadd.f32 %v452, %v127
    %v485 = vadd.f32 %v453, %v128
    %v486 = vadd.f32 %v454, %v129
    %v487 = vadd.f32 %v455, %v130
    %v488 = vadd.f32 %v456, %v131
    %v489 = vadd.f32 %v457, %v132
    %v490 = vadd.f32 %v458, %v133
    %v491 = vadd.f32 %v459, %v134
    %v492 = vadd.f32 %v460, %v135
    %v493 = vadd.f32 %v461, %v136
    %v494 = vadd.f32 %v462, %v137
    %v495 = vadd.f32 %v463, %v138
    %v496 = vadd.f32 %v464, %v139
    %v497 = vadd.f32 %v465, %v140
    %v498 = vadd.f32 %v466, %v141
    %v499 = vadd.f32 %v467, %v142
    %v500 = vadd.f32 %v468, %v143
    %v501 = vadd.f32 %v469, %v144
    %v502 = vadd.f32 %v470, %v145
    %v503 = vadd.f32 %v471, %v146
    %v504 = vadd.f32 %v472, %v147
    %v505 = vadd.f32 %v473, %v148
    %v506 = vadd.f32 %v474, %v149
    %v507 = vadd.f32 %v475, %v150
    %v508 = vadd.f32 %v476, %v151
    %v509 = vadd.f32 %v477, %v152
    %v510 = vadd.f32 %v478, %v153
    %v511 = vadd.f32 %v479, %v154
    %v512 = vadd.f32 %v480, %v155
    %v513 = vadd.f32 %v481, %v156
    %v514 = vadd.f32 %v482, %v157
    %vm515 = vcmask 97328
    %v516 = vsel %vm515, %v483, -inf
    %v517 = vsel %vm515, %v485, -inf
    %v518 = vsel %vm515, %v487, -inf
    %v519 = vmax.f32 %v516, %v518
    %v520 = vsel %vm515, %v489, -inf
    %v521 = vmax.f32 %v517, %v520
    %v522 = vsel %vm515, %v491, -inf
    %v523 = vmax.f32 %v519, %v522
    %v524 = vsel %vm515, %v493, -inf
    %v525 = vmax.f32 %v521, %v524
    %v526 = vsel %vm515, %v495, -inf
    %v527 = vmax.f32 %v523, %v526
    %v528 = vsel %vm515, %v497, -inf
    %v529 = vmax.f32 %v525, %v528
    %v530 = vsel %vm515, %v499, -inf
    %v531 = vmax.f32 %v527, %v530
    %v532 = vsel %vm515, %v501, -inf
    %v533 = vmax.f32 %v529, %v532
    %v534 = vsel %vm515, %v503, -inf
    %v535 = vmax.f32 %v531, %v534
    %v536 = vsel %vm515, %v505, -inf
    %v537 = vmax.f32 %v533, %v536
    %v538 = vsel %vm515, %v507, -inf
    %v539 = vmax.f32 %v535, %v538
    %v540 = vsel %vm515, %v509, -inf
    %v541 = vmax.f32 %v537, %v540
    %v542 = vsel %vm515, %v511, -inf
    %v543 = vmax.f32 %v539, %v542
    %v544 = vsel %vm515, %v513, -inf
    %v545 = vmax.f32 %v541, %v544
    %v546 = vmax.f32 %v543, %v545
    %v547 = vsel %vm515, %v484, -inf
    %v548 = vsel %vm515, %v486, -inf
    %v549 = vsel %vm515, %v488, -inf
    %v550 = vmax.f32 %v547, %v549
    %v551 = vsel %vm515, %v490, -inf
    %v552 = vmax.f32 %v548, %v551
    %v553 = vsel %vm515, %v492, -inf
    %v554 = vmax.f32 %v550, %v553
    %v555 = vsel %vm515, %v494, -inf
    %v556 = vmax.f32 %v552, %v555
    %v557 = vsel %vm515, %v496, -inf
    %v558 = vmax.f32 %v554, %v557
    %v559 = vsel %vm515, %v498, -inf
    %v560 = vmax.f32 %v556, %v559
    %v561 = vsel %vm515, %v500, -inf
    %v562 = vmax.f32 %v558, %v561
    %v563 = vsel %vm515, %v502, -inf
    %v564 = vmax.f32 %v560, %v563
    %v565 = vsel %vm515, %v504, -inf
    %v566 = vmax.f32 %v562, %v565
    %v567 = vsel %vm515, %v506, -inf
    %v568 = vmax.f32 %v564, %v567
    %v569 = vsel %vm515, %v508, -inf
    %v570 = vmax.f32 %v566, %v569
    %v571 = vsel %vm515, %v510, -inf
    %v572 = vmax.f32 %v568, %v571
    %v573 = vsel %vm515, %v512, -inf
    %v574 = vmax.f32 %v570, %v573
    %v575 = vsel %vm515, %v514, -inf
    %v576 = vmax.f32 %v572, %v575
    %v577 = vmax.f32 %v574, %v576
    %v578 = vsub.f32 %v483, %v546
    %v579 = vsub.f32 %v484, %v577
    %v580 = vsub.f32 %v485, %v546
    %v581 = vsub.f32 %v486, %v577
    %v582 = vsub.f32 %v487, %v546
    %v583 = vsub.f32 %v488, %v577
    %v584 = vsub.f32 %v489, %v546
    %v585 = vsub.f32 %v490, %v577
    %v586 = vsub.f32 %v491, %v546
    %v587 = vsub.f32 %v492, %v577
    %v588 = vsub.f32 %v493, %v546
    %v589 = vsub.f32 %v494, %v577
    %v590 = vsub.f32 %v495, %v546
    %v591 = vsub.f32 %v496, %v577
    %v592 = vsub.f32 %v497, %v546
    %v593 = vsub.f32 %v498, %v577
    %v594 = vsub.f32 %v499, %v546
    %v595 = vsub.f32 %v500, %v577
    %v596 = vsub.f32 %v501, %v546
    %v597 = vsub.f32 %v502, %v577
    %v598 = vsub.f32 %v503, %v546
    %v599 = vsub.f32 %v504, %v577
    %v600 = vsub.f32 %v505, %v546
    %v601 = vsub.f32 %v506, %v577
    %v602 = vsub.f32 %v507, %v546
    %v603 = vsub.f32 %v508, %v577
    %v604 = vsub.f32 %v509, %v546
    %v605 = vsub.f32 %v510, %v577
    %v606 = vsub.f32 %v511, %v546
    %v607 = vsub.f32 %v512, %v577
    %v608 = vsub.f32 %v513, %v546
    %v609 = vsub.f32 %v514, %v577
    %v610 = vmul.f32 %v578, 1.442695
    %v611 = vpow.pop %v610
    %v612 = vmul.f32 %v579, 1.442695
    %v613 = vpow.pop %v612
    %v614 = vmul.f32 %v580, 1.442695
    %v615 = vpow.pop %v614
    %v616 = vmul.f32 %v581, 1.442695
    %v617 = vpow.pop %v616
    %v618 = vmul.f32 %v582, 1.442695
    %v619 = vpow.pop %v618
    %v620 = vmul.f32 %v583, 1.442695
    %v621 = vpow.pop %v620
    %v622 = vmul.f32 %v584, 1.442695
    %v623 = vpow.pop %v622
    %v624 = vmul.f32 %v585, 1.442695
    %v625 = vpow.pop %v624
    %v626 = vmul.f32 %v586, 1.442695
    %v627 = vpow.pop %v626
    %v628 = vmul.f32 %v587, 1.442695
    %v629 = vpow.pop %v628
    %v630 = vmul.f32 %v588, 1.442695
    %v631 = vpow.pop %v630
    %v632 = vmul.f32 %v589, 1.442695
    %v633 = vpow.pop %v632
    %v634 = vmul.f32 %v590, 1.442695
    %v635 = vpow.pop %v634
    %v636 = vmul.f32 %v591, 1.442695
    %v637 = vpow.pop %v636
    %v638 = vmul.f32 %v592, 1.442695
    %v639 = vpow.pop %v638
    %v640 = vmul.f32 %v593, 1.442695
    %v641 = vpow.pop %v640
    %v642 = vmul.f32 %v594, 1.442695
    %v643 = vpow.pop %v642
    %v644 = vmul.f32 %v595, 1.442695
    %v645 = vpow.pop %v644
    %v646 = vmul.f32 %v596, 1.442695
    %v647 = vpow.pop %v646
    %v648 = vmul.f32 %v597, 1.442695
    %v649 = vpow.pop %v648
    %v650 = vmul.f32 %v598, 1.442695
    %v651 = vpow.pop %v650
    %v652 = vmul.f32 %v599, 1.442695
    %v653 = vpow.pop %v652
    %v654 = vmul.f32 %v600, 1.442695
    %v655 = vpow.pop %v654
    %v656 = vmul.f32 %v601, 1.442695
    %v657 = vpow.pop %v656
    %v658 = vmul.f32 %v602, 1.442695
    %v659 = vpow.pop %v658
    %v660 = vmul.f32 %v603, 1.442695
    %v661 = vpow.pop %v660
    %v662 = vmul.f32 %v604, 1.442695
    %v663 = vpow.pop %v662
    %v664 = vmul.f32 %v605, 1.442695
    %v665 = vpow.pop %v664
    %v666 = vmul.f32 %v606, 1.442695
    %v667 = vpow.pop %v666
    %v668 = vmul.f32 %v607, 1.442695
    %v669 = vpow.pop %v668
    %v670 = vmul.f32 %v608, 1.442695
    %v671 = vpow.pop %v670
    %v672 = vmul.f32 %v609, 1.442695
    %v673 = vpow.pop %v672
    %v674 = vsel %vm515, %v611, 0.0
    %v675 = vsel %vm515, %v615, 0.0
    %v676 = vadd.f32 %v674, %v675
    %v677 = vsel %vm515, %v619, 0.0
    %v678 = vadd.f32 %v676, %v677
    %v679 = vsel %vm515, %v623, 0.0
    %v680 = vadd.f32 %v678, %v679
    %v681 = vsel %vm515, %v627, 0.0
    %v682 = vadd.f32 %v680, %v681
    %v683 = vsel %vm515, %v631, 0.0
    %v684 = vadd.f32 %v682, %v683
    %v685 = vsel %vm515, %v635, 0.0
    %v686 = vadd.f32 %v684, %v685
    %v687 = vsel %vm515, %v639, 0.0
    %v688 = vadd.f32 %v686, %v687
    %v689 = vsel %vm515, %v643, 0.0
    %v690 = vadd.f32 %v688, %v689
    %v691 = vsel %vm515, %v647, 0.0
    %v692 = vadd.f32 %v690, %v691
    %v693 = vsel %vm515, %v651, 0.0
    %v694 = vadd.f32 %v692, %v693
    %v695 = vsel %vm515, %v655, 0.0
    %v696 = vadd.f32 %v694, %v695
    %v697 = vsel %vm515, %v659, 0.0
    %v698 = vadd.f32 %v696, %v697
    %v699 = vsel %vm515, %v663, 0.0
    %v700 = vadd.f32 %v698, %v699
    %v701 = vsel %vm515, %v667, 0.0
    %v702 = vadd.f32 %v700, %v701
    %v703 = vsel %vm515, %v671, 0.0
    %v704 = vadd.f32 %v702, %v703
    %v705 = vsel %vm515, %v613, 0.0
    %v706 = vsel %vm515, %v617, 0.0
    %v707 = vadd.f32 %v705, %v706
    %v708 = vsel %vm515, %v621, 0.0
    %v709 = vadd.f32 %v707, %v708
    %v710 = vsel %vm515, %v625, 0.0
    %v711 = vadd.f32 %v709, %v710
    %v712 = vsel %vm515, %v629, 0.0
    %v713 = vadd.f32 %v711, %v712
    %v714 = vsel %vm515, %v633, 0.0
    %v715 = vadd.f32 %v713, %v714
    %v716 = vsel %vm515, %v637, 0.0
    %v717 = vadd.f32 %v715, %v716
    %v718 = vsel %vm515, %v641, 0.0
    %v719 = vadd.f32 %v717, %v718
    %v720 = vsel %vm515, %v645, 0.0
    %v721 = vadd.f32 %v719, %v720
    %v722 = vsel %vm515, %v649, 0.0
    %v723 = vadd.f32 %v721, %v722
    %v724 = vsel %vm515, %v653, 0.0
    %v725 = vadd.f32 %v723, %v724
    %v726 = vsel %vm515, %v657, 0.0
    %v727 = vadd.f32 %v725, %v726
    %v728 = vsel %vm515, %v661, 0.0
    %v729 = vadd.f32 %v727, %v728
    %v730 = vsel %vm515, %v665, 0.0
    %v731 = vadd.f32 %v729, %v730
    %v732 = vsel %vm515, %v669, 0.0
    %v733 = vadd.f32 %v731, %v732
    %v734 = vsel %vm515, %v673, 0.0
    %v735 = vadd.f32 %v733, %v734
    %736 = vrot.lane.b32.xlu0 %v368, 122
    %v737 = vpop.permute.xlu0 %736
    %738 = vrot.lane.b32.xlu0 %v372, 122
    %v739 = vpop.permute.xlu0 %738
    %740 = vrot.lane.b32.xlu0 %v376, 122
    %v741 = vpop.permute.xlu0 %740
    %742 = vrot.lane.b32.xlu0 %v380, 122
    %v743 = vpop.permute.xlu0 %742
    %744 = vrot.lane.b32.xlu0 %v384, 122
    %v745 = vpop.permute.xlu0 %744
    %746 = vrot.lane.b32.xlu0 %v388, 122
    %v747 = vpop.permute.xlu0 %746
    %748 = vrot.lane.b32.xlu0 %v392, 122
    %v749 = vpop.permute.xlu0 %748
    %750 = vrot.lane.b32.xlu0 %v396, 122
    %v751 = vpop.permute.xlu0 %750
    %752 = vrot.lane.b32.xlu0 %v400, 122
    %v753 = vpop.permute.xlu0 %752
    %754 = vrot.lane.b32.xlu0 %v404, 122
    %v755 = vpop.permute.xlu0 %754
    %756 = vrot.lane.b32.xlu0 %v408, 122
    %v757 = vpop.permute.xlu0 %756
    %758 = vrot.lane.b32.xlu0 %v412, 122
    %v759 = vpop.permute.xlu0 %758
    %760 = vrot.lane.b32.xlu0 %v416, 122
    %v761 = vpop.permute.xlu0 %760
    %762 = vrot.lane.b32.xlu0 %v420, 122
    %v763 = vpop.permute.xlu0 %762
    %764 = vrot.lane.b32.xlu0 %v424, 122
    %v765 = vpop.permute.xlu0 %764
    %766 = vrot.lane.b32.xlu0 %v428, 122
    %v767 = vpop.permute.xlu0 %766
    %v784 = vmul.f32 %v611, %v737
    %v785 = vmul.f32 %v613, %v737
    %v786 = vmul.f32 %v615, %v739
    %v787 = vmul.f32 %v617, %v739
    %v788 = vmul.f32 %v619, %v741
    %v789 = vmul.f32 %v621, %v741
    %v790 = vmul.f32 %v623, %v743
    %v791 = vmul.f32 %v625, %v743
    %v792 = vmul.f32 %v627, %v745
    %v793 = vmul.f32 %v629, %v745
    %v794 = vmul.f32 %v631, %v747
    %v795 = vmul.f32 %v633, %v747
    %v796 = vmul.f32 %v635, %v749
    %v797 = vmul.f32 %v637, %v749
    %v798 = vmul.f32 %v639, %v751
    %v799 = vmul.f32 %v641, %v751
    %v800 = vmul.f32 %v643, %v753
    %v801 = vmul.f32 %v645, %v753
    %v802 = vmul.f32 %v647, %v755
    %v803 = vmul.f32 %v649, %v755
    %v804 = vmul.f32 %v651, %v757
    %v805 = vmul.f32 %v653, %v757
    %v806 = vmul.f32 %v655, %v759
    %v807 = vmul.f32 %v657, %v759
    %v808 = vmul.f32 %v659, %v761
    %v809 = vmul.f32 %v661, %v761
    %v810 = vmul.f32 %v663, %v763
    %v811 = vmul.f32 %v665, %v763
    %v812 = vmul.f32 %v667, %v765
    %v813 = vmul.f32 %v669, %v765
    %v814 = vmul.f32 %v671, %v767
    %v815 = vmul.f32 %v673, %v767
    %v816 = vsel %vm515, %v784, 0.0
    %v817 = vsel %vm515, %v786, 0.0
    %v818 = vadd.f32 %v816, %v817
    %v819 = vsel %vm515, %v788, 0.0
    %v820 = vadd.f32 %v818, %v819
    %v821 = vsel %vm515, %v790, 0.0
    %v822 = vadd.f32 %v820, %v821
    %v823 = vsel %vm515, %v792, 0.0
    %v824 = vadd.f32 %v822, %v823
    %v825 = vsel %vm515, %v794, 0.0
    %v826 = vadd.f32 %v824, %v825
    %v827 = vsel %vm515, %v796, 0.0
    %v828 = vadd.f32 %v826, %v827
    %v829 = vsel %vm515, %v798, 0.0
    %v830 = vadd.f32 %v828, %v829
    %v831 = vsel %vm515, %v800, 0.0
    %v832 = vadd.f32 %v830, %v831
    %v833 = vsel %vm515, %v802, 0.0
    %v834 = vadd.f32 %v832, %v833
    %v835 = vsel %vm515, %v804, 0.0
    %v836 = vadd.f32 %v834, %v835
    %v837 = vsel %vm515, %v806, 0.0
    %v838 = vadd.f32 %v836, %v837
    %v839 = vsel %vm515, %v808, 0.0
    %v840 = vadd.f32 %v838, %v839
    %v841 = vsel %vm515, %v810, 0.0
    %v842 = vadd.f32 %v840, %v841
    %v843 = vsel %vm515, %v812, 0.0
    %v844 = vadd.f32 %v842, %v843
    %v845 = vsel %vm515, %v814, 0.0
    %v846 = vadd.f32 %v844, %v845
    %v847 = vsel %vm515, %v785, 0.0
    %v848 = vsel %vm515, %v787, 0.0
    %v849 = vadd.f32 %v847, %v848
    %v850 = vsel %vm515, %v789, 0.0
    %v851 = vadd.f32 %v849, %v850
    %v852 = vsel %vm515, %v791, 0.0
    %v853 = vadd.f32 %v851, %v852
    %v854 = vsel %vm515, %v793, 0.0
    %v855 = vadd.f32 %v853, %v854
    %v856 = vsel %vm515, %v795, 0.0
    %v857 = vadd.f32 %v855, %v856
    %v858 = vsel %vm515, %v797, 0.0
    %v859 = vadd.f32 %v857, %v858
    %v860 = vsel %vm515, %v799, 0.0
    %v861 = vadd.f32 %v859, %v860
    %v862 = vsel %vm515, %v801, 0.0
    %v863 = vadd.f32 %v861, %v862
    %v864 = vsel %vm515, %v803, 0.0
    %v865 = vadd.f32 %v863, %v864
    %v866 = vsel %vm515, %v805, 0.0
    %v867 = vadd.f32 %v865, %v866
    %v868 = vsel %vm515, %v807, 0.0
    %v869 = vadd.f32 %v867, %v868
    %v870 = vsel %vm515, %v809, 0.0
    %v871 = vadd.f32 %v869, %v870
    %v872 = vsel %vm515, %v811, 0.0
    %v873 = vadd.f32 %v871, %v872
    %v874 = vsel %vm515, %v813, 0.0
    %v875 = vadd.f32 %v873, %v874
    %v876 = vsel %vm515, %v815, 0.0
    %v877 = vadd.f32 %v875, %v876
    %v878 = vrcp.pop %v704
    %v879 = vrcp.pop %v735
    %v880 = vmul.f32 %v846, %v878
    %v881 = vmul.f32 %v877, %v879
    %883 = vset.pattern.permute.xlu0 6
    %884 = vperm.xlu0 %883, %v880
    %v885 = vpop.permute.xlu0 %884
    %888 = vset.pattern.permute.xlu0 6
    %889 = vperm.xlu0 %888, %v881
    %v890 = vpop.permute.xlu0 %889
    %v892 = vmul.f32 %v885, %v176
    %v893 = vmul.f32 %v890, %v176
    %894 = vset.pattern.permute.xlu0 7
    %895 = vperm.xlu0 %894, %v880
    %v896 = vpop.permute.xlu0 %895
    %898 = vset.pattern.permute.xlu0 7
    %899 = vperm.xlu0 %898, %v881
    %v900 = vpop.permute.xlu0 %899
    %v902 = vmul.f32 %v896, %v190
    %v903 = vmul.f32 %v900, %v190
    %v904 = vadd.f32 %v892, %v902
    %v905 = vadd.f32 %v893, %v903
    %906 = vset.pattern.permute.xlu0 8
    %907 = vperm.xlu0 %906, %v880
    %v908 = vpop.permute.xlu0 %907
    %910 = vset.pattern.permute.xlu0 8
    %911 = vperm.xlu0 %910, %v881
    %v912 = vpop.permute.xlu0 %911
    %v914 = vmul.f32 %v908, %v206
    %v915 = vmul.f32 %v912, %v206
    %v916 = vadd.f32 %v904, %v914
    %v917 = vadd.f32 %v905, %v915
    %918 = vset.pattern.permute.xlu0 9
    %919 = vperm.xlu0 %918, %v880
    %v920 = vpop.permute.xlu0 %919
    %922 = vset.pattern.permute.xlu0 9
    %923 = vperm.xlu0 %922, %v881
    %v924 = vpop.permute.xlu0 %923
    %v926 = vmul.f32 %v920, %v222
    %v927 = vmul.f32 %v924, %v222
    %v928 = vadd.f32 %v916, %v926
    %v929 = vadd.f32 %v917, %v927
    %930 = vset.pattern.permute.xlu0 10
    %931 = vperm.xlu0 %930, %v880
    %v932 = vpop.permute.xlu0 %931
    %934 = vset.pattern.permute.xlu0 10
    %935 = vperm.xlu0 %934, %v881
    %v936 = vpop.permute.xlu0 %935
    %v938 = vmul.f32 %v932, %v238
    %v939 = vmul.f32 %v936, %v238
    %v940 = vadd.f32 %v928, %v938
    %v941 = vadd.f32 %v929, %v939
    %942 = vset.pattern.permute.xlu0 11
    %943 = vperm.xlu0 %942, %v880
    %v944 = vpop.permute.xlu0 %943
    %946 = vset.pattern.permute.xlu0 11
    %947 = vperm.xlu0 %946, %v881
    %v948 = vpop.permute.xlu0 %947
    %v950 = vmul.f32 %v944, %v254
    %v951 = vmul.f32 %v948, %v254
    %v952 = vadd.f32 %v940, %v950
    %v953 = vadd.f32 %v941, %v951
    %v954 = vadd.f32 %v952, %v262
    %v955 = vadd.f32 %v953, %v262
    %958 = vrot.lane.b32.xlu0 %v954, 110
    %v959 = vpop.permute.xlu0 %958
    %960 = vrot.lane.b32.xlu0 %v955, 110
    %v961 = vpop.permute.xlu0 %960
    %v964 = vadd.f32 %v29, %v959
    %v965 = vadd.f32 %v30, %v961
    %vm966 = vcmask 48128
    %v967 = vsel %vm966, %v964, 0.0
    %968 = vadd.xlane.f32.xlu0 %v967
    %v969 = vpop.xlane.xlu0 %968
    %v970 = vsel %vm966, %v965, 0.0
    %971 = vadd.xlane.f32.xlu0 %v970
    %v972 = vpop.xlane.xlu0 %971
    %v973 = vrcp.pop 6.0
    %v974 = vmul.f32 %v969, %v973
    %v975 = vmul.f32 %v972, %v973
    %v976 = vmul.f32 %v964, %v964
    %v977 = vmul.f32 %v965, %v965
    %v978 = vsel %vm966, %v976, 0.0
    %979 = vadd.xlane.f32.xlu0 %v978
    %v980 = vpop.xlane.xlu0 %979
    %v981 = vsel %vm966, %v977, 0.0
    %982 = vadd.xlane.f32.xlu0 %v981
    %v983 = vpop.xlane.xlu0 %982
    %v984 = vmul.f32 %v980, %v973
    %v985 = vmul.f32 %v983, %v973
    %v986 = vmul.f32 %v974, %v974
    %v987 = vmul.f32 %v975, %v975
    %v988 = vsub.f32 %v984, %v986
    %v989 = vsub.f32 %v985, %v987
    %v990 = vsub.f32 %v964, %v974
    %v991 = vsub.f32 %v965, %v975
    %v992 = vadd.f32 %v988, 1e-05
    %v993 = vadd.f32 %v989, 1e-05
    %v994 = vrsqrt.pop %v992
    %v995 = vrsqrt.pop %v993
    %v996 = vmul.f32 %v990, %v994
    %v997 = vmul.f32 %v991, %v995
    %999 = vrot.lane.b32.xlu0 %v262, 74
    %v1000 = vpop.permute.xlu0 %999
    %v1002 = vmul.f32 %v996, %v1000
    %v1003 = vmul.f32 %v997, %v1000
    %1004 = vrot.lane.b32.xlu0 %v262, 68
    %v1005 = vpop.permute.xlu0 %1004
    %v1007 = vadd.f32 %v1002, %v1005
    %v1008 = vadd.f32 %v1003, %v1005
    %1010 = vset.pattern.permute.xlu0 0
    %1011 = vperm.xlu0 %1010, %v1007
    %v1012 = vpop.permute.xlu0 %1011
    %1015 = vset.pattern.permute.xlu0 0
    %1016 = vperm.xlu0 %1015, %v1008
    %v1017 = vpop.permute.xlu0 %1016
    %v1019 = vmul.f32 %v1012, %v176
    %v1020 = vmul.f32 %v1017, %v176
    %1021 = vset.pattern.permute.xlu0 1
    %1022 = vperm.xlu0 %1021, %v1007
    %v1023 = vpop.permute.xlu0 %1022
    %1025 = vset.pattern.permute.xlu0 1
    %1026 = vperm.xlu0 %1025, %v1008
    %v1027 = vpop.permute.xlu0 %1026
    %v1029 = vmul.f32 %v1023, %v190
    %v1030 = vmul.f32 %v1027, %v190
    %v1031 = vadd.f32 %v1019, %v1029
    %v1032 = vadd.f32 %v1020, %v1030
    %1033 = vset.pattern.permute.xlu0 2
    %1034 = vperm.xlu0 %1033, %v1007
    %v1035 = vpop.permute.xlu0 %1034
    %1037 = vset.pattern.permute.xlu0 2
    %1038 = vperm.xlu0 %1037, %v1008
    %v1039 = vpop.permute.xlu0 %1038
    %v1041 = vmul.f32 %v1035, %v206
    %v1042 = vmul.f32 %v1039, %v206
    %v1043 = vadd.f32 %v1031, %v1041
    %v1044 = vadd.f32 %v1032, %v1042
    %1045 = vset.pattern.permute.xlu0 3
    %1046 = vperm.xlu0 %1045, %v1007
    %v1047 = vpop.permute.xlu0 %1046
    %1049 = vset.pattern.permute.xlu0 3
    %1050 = vperm.xlu0 %1049, %v1008
    %v1051 = vpop.permute.xlu0 %1050
    %v1053 = vmul.f32 %v1047, %v222
    %v1054 = vmul.f32 %v1051, %v222
    %v1055 = vadd.f32 %v1043, %v1053
    %v1056 = vadd.f32 %v1044, %v1054
    %1057 = vset.pattern.permute.xlu0 4
    %1058 = vperm.xlu0 %1057, %v1007
    %v1059 = vpop.permute.xlu0 %1058
    %1061 = vset.pattern.permute.xlu0 4
    %1062 = vperm.xlu0 %1061, %v1008
    %v1063 = vpop.permute.xlu0 %1062
    %v1065 = vmul.f32 %v1059, %v238
    %v1066 = vmul.f32 %v1063, %v238
    %v1067 = vadd.f32 %v1055, %v1065
    %v1068 = vadd.f32 %v1056, %v1066
    %1069 = vset.pattern.permute.xlu0 5
    %1070 = vperm.xlu0 %1069, %v1007
    %v1071 = vpop.permute.xlu0 %1070
    %1073 = vset.pattern.permute.xlu0 5
    %1074 = vperm.xlu0 %1073, %v1008
    %v1075 = vpop.permute.xlu0 %1074
    %v1077 = vmul.f32 %v1071, %v254
    %v1078 = vmul.f32 %v1075, %v254
    %v1079 = vadd.f32 %v1067, %v1077
    %v1080 = vadd.f32 %v1068, %v1078
    %v1081 = vadd.f32 %v1079, %v262
    %v1082 = vadd.f32 %v1080, %v262
    %v1083 = vmax.f32 %v1081, 0.0
    %v1084 = vmax.f32 %v1082, 0.0
    %1087 = vrot.lane.b32.xlu0 %v1083, 104
    %v1088 = vpop.permute.xlu0 %1087
    %1089 = vrot.lane.b32.xlu0 %v1084, 104
    %v1090 = vpop.permute.xlu0 %1089
    %1094 = vrot.lane.b32.xlu0 %v159, 80
    %v1095 = vpop.permute.xlu0 %1094
    %1096 = vrot.lane.b32.xlu0 %v160, 80
    %v1097 = vpop.permute.xlu0 %1096
    %1098 = vrot.lane.b32.xlu0 %v161, 80
    %v1099 = vpop.permute.xlu0 %1098
    %1103 = vrot.lane.b32.xlu0 %v262, 80
    %v1104 = vpop.permute.xlu0 %1103
    %vm1106 = vcmask 195584
    %v1107 = vsel %vm1106, %v1088, 0
    %v1109 = vsel %vm1106, %v1090, 0
    %1111 = vmatprep.subr.mxu0 0.0
    %1112 = vmatpush1.msra.mxu0 %v1095
    %1113 = vmatprep.subr.mxu0 0.0
    %1114 = vmatpush1.msra.mxu0 %v1097
    %1115 = vmatprep.subr.mxu0 0.0
    %1116 = vmatpush1.msra.mxu0 %v1099
    %1117 = vmatprep.subr.mxu0 0.0
    %1118 = vmatpush1.msra.mxu0 0.0
    %1119 = vmatprep.subr.mxu0 0.0
    %1120 = vmatpush1.msra.mxu0 0.0
    %1121 = vmatprep.subr.mxu0 0.0
    %1122 = vmatpush1.msra.mxu0 0.0
    %1123 = vmatprep.subr.mxu0 0.0
    %1124 = vmatpush1.msra.mxu0 0.0
    %1125 = vmatprep.subr.mxu0 0.0
    %1126 = vmatpush1.msra.mxu0 0.0
    %1127 = vmatprep.subr.mxu0 0.0
    %1128 = vmatpush1.msra.mxu0 0.0
    %1129 = vmatprep.subr.mxu0 0.0
    %1130 = vmatpush1.msra.mxu0 0.0
    %1131 = vmatprep.subr.mxu0 0.0
    %1132 = vmatpush1.msra.mxu0 0.0
    %1133 = vmatprep.subr.mxu0 0.0
    %1134 = vmatpush1.msra.mxu0 0.0
    %1135 = vmatprep.subr.mxu0 0.0
    %1136 = vmatpush1.msra.mxu0 0.0
    %1137 = vmatprep.subr.mxu0 0.0
    %1138 = vmatpush1.msra.mxu0 0.0
    %1139 = vmatprep.subr.mxu0 0.0
    %1140 = vmatpush1.msra.mxu0 0.0
    %1141 = vmatprep.subr.mxu0 0.0
    %1142 = vmatpush1.msra.mxu0 0.0
    %1143 = vmatprep.subr.mxu0 0.0
    %1144 = vmatpush1.msra.mxu0 0.0
    %1145 = vmatprep.subr.mxu0 0.0
    %1146 = vmatpush1.msra.mxu0 0.0
    %1147 = vmatprep.subr.mxu0 0.0
    %1148 = vmatpush1.msra.mxu0 0.0
    %1149 = vmatprep.subr.mxu0 0.0
    %1150 = vmatpush1.msra.mxu0 0.0
    %1151 = vmatprep.subr.mxu0 0.0
    %1152 = vmatpush1.msra.mxu0 0.0
    %1153 = vmatprep.subr.mxu0 0.0
    %1154 = vmatpush1.msra.mxu0 0.0
    %1155 = vmatprep.subr.mxu0 0.0
    %1156 = vmatpush1.msra.mxu0 0.0
    %1157 = vmatprep.subr.mxu0 0.0
    %1158 = vmatpush1.msra.mxu0 0.0
    %1159 = vmatprep.subr.mxu0 0.0
    %1160 = vmatpush1.msra.mxu0 0.0
    %1161 = vmatprep.subr.mxu0 0.0
    %1162 = vmatpush1.msra.mxu0 0.0
    %1163 = vmatprep.subr.mxu0 0.0
    %1164 = vmatpush1.msra.mxu0 0.0
    %1165 = vmatprep.subr.mxu0 0.0
    %1166 = vmatpush1.msra.mxu0 0.0
    %1167 = vmatprep.subr.mxu0 0.0
    %1168 = vmatpush1.msra.mxu0 0.0
    %1169 = vmatprep.subr.mxu0 0.0
    %1170 = vmatpush1.msra.mxu0 0.0
    %1171 = vmatprep.subr.mxu0 0.0
    %1172 = vmatpush1.msra.mxu0 0.0
    %1173 = vmatprep.subr.mxu0 0.0
    %1174 = vmatpush1.msra.mxu0 0.0
    %1175 = vmatprep.mubr.f32.mxu0 0.0
    %1176 = vmatmul.mubr.f32.gmra.mrb[0].mxu0 %v1107
    %v1177 = vpop.f32.mrb[0].mxu0
    %v1178 = vadd.f32 %v1104, %v1177
    %v1179 = vpop.f32.mrb[0].mxu0
    %1180 = vmatprep.mubr.f32.mxu0 0.0
    %1181 = vmatmul.mubr.f32.gmra.mrb[0].mxu0 %v1109
    %v1182 = vpop.f32.mrb[0].mxu0
    %v1183 = vadd.f32 %v1104, %v1182
    %v1184 = vpop.f32.mrb[0].mxu0
    %1185 = vdwg.mxu0
    %v1186 = vadd.f32 %v1007, %v1178
    %v1187 = vadd.f32 %v1008, %v1183
    %v1188 = vsel %vm966, %v1186, 0.0
    %1189 = vadd.xlane.f32.xlu0 %v1188
    %v1190 = vpop.xlane.xlu0 %1189
    %v1191 = vsel %vm966, %v1187, 0.0
    %1192 = vadd.xlane.f32.xlu0 %v1191
    %v1193 = vpop.xlane.xlu0 %1192
    %v1194 = vmul.f32 %v1190, %v973
    %v1195 = vmul.f32 %v1193, %v973
    %v1196 = vmul.f32 %v1186, %v1186
    %v1197 = vmul.f32 %v1187, %v1187
    %v1198 = vsel %vm966, %v1196, 0.0
    %1199 = vadd.xlane.f32.xlu0 %v1198
    %v1200 = vpop.xlane.xlu0 %1199
    %v1201 = vsel %vm966, %v1197, 0.0
    %1202 = vadd.xlane.f32.xlu0 %v1201
    %v1203 = vpop.xlane.xlu0 %1202
    %v1204 = vmul.f32 %v1200, %v973
    %v1205 = vmul.f32 %v1203, %v973
    %v1206 = vmul.f32 %v1194, %v1194
    %v1207 = vmul.f32 %v1195, %v1195
    %v1208 = vsub.f32 %v1204, %v1206
    %v1209 = vsub.f32 %v1205, %v1207
    %v1210 = vsub.f32 %v1186, %v1194
    %v1211 = vsub.f32 %v1187, %v1195
    %v1212 = vadd.f32 %v1208, 1e-05
    %v1213 = vadd.f32 %v1209, 1e-05
    %v1214 = vrsqrt.pop %v1212
    %v1215 = vrsqrt.pop %v1213
    %v1216 = vmul.f32 %v1210, %v1214
    %v1217 = vmul.f32 %v1211, %v1215
    %1218 = vrot.lane.b32.xlu0 %v262, 62
    %v1219 = vpop.permute.xlu0 %1218
    %v1221 = vmul.f32 %v1216, %v1219
    %v1222 = vmul.f32 %v1217, %v1219
    %1223 = vrot.lane.b32.xlu0 %v262, 56
    %v1224 = vpop.permute.xlu0 %1223
    %v1226 = vadd.f32 %v1221, %v1224
    %v1227 = vadd.f32 %v1222, %v1224
    %v1228 = vld [vmem:[#allocation2 + $0x8] sm:$0x3f]
    %v1229 = vld [vmem:[#allocation2] sm:$0xff]
    %v1230 = vld [vmem:[#allocation2 + $0x8] sm:$0xff]
    %v1231 = vld [vmem:[#allocation2 + $0x10] sm:$0xff]
    %v1232 = vld [vmem:[#allocation2 + $0x21] sm:$0x1]
    %1234 = vset.pattern.permute.xlu0 0
    %1235 = vperm.xlu0 %1234, %v1226
    %v1236 = vpop.permute.xlu0 %1235
    %1239 = vset.pattern.permute.xlu0 0
    %1240 = vperm.xlu0 %1239, %v1227
    %v1241 = vpop.permute.xlu0 %1240
    %v1243 = vlaneseq
    %v1244 = vshrl.u32 %v1243, 7
    %v1245 = vsub.s32 0, %v1244
    %v1246 = vrot.slane %v1228, %v1245
    %v1247 = vmul.f32 %v1236, %v1246
    %v1248 = vmul.f32 %v1241, %v1246
    %1249 = vset.pattern.permute.xlu0 1
    %1250 = vperm.xlu0 %1249, %v1226
    %v1251 = vpop.permute.xlu0 %1250
    %1253 = vset.pattern.permute.xlu0 1
    %1254 = vperm.xlu0 %1253, %v1227
    %v1255 = vpop.permute.xlu0 %1254
    %v1257 = vlaneseq
    %v1258 = vshrl.u32 %v1257, 7
    %v1259 = vsub.s32 1, %v1258
    %v1260 = vrot.slane %v1228, %v1259
    %v1261 = vmul.f32 %v1251, %v1260
    %v1262 = vmul.f32 %v1255, %v1260
    %v1263 = vadd.f32 %v1247, %v1261
    %v1264 = vadd.f32 %v1248, %v1262
    %1265 = vset.pattern.permute.xlu0 2
    %1266 = vperm.xlu0 %1265, %v1226
    %v1267 = vpop.permute.xlu0 %1266
    %1269 = vset.pattern.permute.xlu0 2
    %1270 = vperm.xlu0 %1269, %v1227
    %v1271 = vpop.permute.xlu0 %1270
    %v1273 = vlaneseq
    %v1274 = vshrl.u32 %v1273, 7
    %v1275 = vsub.s32 2, %v1274
    %v1276 = vrot.slane %v1228, %v1275
    %v1277 = vmul.f32 %v1267, %v1276
    %v1278 = vmul.f32 %v1271, %v1276
    %v1279 = vadd.f32 %v1263, %v1277
    %v1280 = vadd.f32 %v1264, %v1278
    %1281 = vset.pattern.permute.xlu0 3
    %1282 = vperm.xlu0 %1281, %v1226
    %v1283 = vpop.permute.xlu0 %1282
    %1285 = vset.pattern.permute.xlu0 3
    %1286 = vperm.xlu0 %1285, %v1227
    %v1287 = vpop.permute.xlu0 %1286
    %v1289 = vlaneseq
    %v1290 = vshrl.u32 %v1289, 7
    %v1291 = vsub.s32 3, %v1290
    %v1292 = vrot.slane %v1228, %v1291
    %v1293 = vmul.f32 %v1283, %v1292
    %v1294 = vmul.f32 %v1287, %v1292
    %v1295 = vadd.f32 %v1279, %v1293
    %v1296 = vadd.f32 %v1280, %v1294
    %1297 = vset.pattern.permute.xlu0 4
    %1298 = vperm.xlu0 %1297, %v1226
    %v1299 = vpop.permute.xlu0 %1298
    %1301 = vset.pattern.permute.xlu0 4
    %1302 = vperm.xlu0 %1301, %v1227
    %v1303 = vpop.permute.xlu0 %1302
    %v1305 = vlaneseq
    %v1306 = vshrl.u32 %v1305, 7
    %v1307 = vsub.s32 4, %v1306
    %v1308 = vrot.slane %v1228, %v1307
    %v1309 = vmul.f32 %v1299, %v1308
    %v1310 = vmul.f32 %v1303, %v1308
    %v1311 = vadd.f32 %v1295, %v1309
    %v1312 = vadd.f32 %v1296, %v1310
    %1313 = vset.pattern.permute.xlu0 5
    %1314 = vperm.xlu0 %1313, %v1226
    %v1315 = vpop.permute.xlu0 %1314
    %1317 = vset.pattern.permute.xlu0 5
    %1318 = vperm.xlu0 %1317, %v1227
    %v1319 = vpop.permute.xlu0 %1318
    %v1321 = vlaneseq
    %v1322 = vshrl.u32 %v1321, 7
    %v1323 = vsub.s32 5, %v1322
    %v1324 = vrot.slane %v1228, %v1323
    %v1325 = vmul.f32 %v1315, %v1324
    %v1326 = vmul.f32 %v1319, %v1324
    %v1327 = vadd.f32 %v1311, %v1325
    %v1328 = vadd.f32 %v1312, %v1326
    %v1329 = vlaneseq
    %v1330 = vshrl.u32 %v1329, 7
    %v1331 = vsub.s32 0, %v1330
    %v1332 = vrot.slane %v1232, %v1331
    %v1333 = vadd.f32 %v1327, %v1332
    %v1334 = vadd.f32 %v1328, %v1332
    %v1337 = vcombine.high %v1333, %v1333
    %v1339 = vunpack.c.l.s4 1966171168
    %v1340 = vunpack.c.0.s8 %v1339
    %v1341 = vlaneseq
    %v1342 = vshrl.u32 %v1341, 7
    %v1343 = vsub.s32 %v1340, %v1342
    %v1344 = vrot.slane %v1333, %v1343
    %v1346 = vunpack.c.l.s4 1966171168
    %v1347 = vunpack.c.0.s8 %v1346
    %v1348 = vlaneseq
    %v1349 = vshrl.u32 %v1348, 7
    %v1350 = vsub.s32 %v1347, %v1349
    %v1351 = vrot.slane %v1337, %v1350
    %v1352 = vcombine.high %v1344, %v1344
    %v1353 = vcombine.high %v1351, %v1351
    %v1355 = vunpack.c.l.s4 1966171168
    %v1356 = vunpack.c.0.s8 %v1355
    %v1357 = vlaneseq
    %v1358 = vshrl.u32 %v1357, 7
    %v1359 = vsub.s32 %v1356, %v1358
    %v1360 = vrot.slane %v1344, %v1359
    %v1362 = vunpack.c.l.s4 1966171168
    %v1363 = vunpack.c.0.s8 %v1362
    %v1364 = vlaneseq
    %v1365 = vshrl.u32 %v1364, 7
    %v1366 = vsub.s32 %v1363, %v1365
    %v1367 = vrot.slane %v1351, %v1366
    %v1369 = vunpack.c.l.s4 1966171168
    %v1370 = vunpack.c.0.s8 %v1369
    %v1371 = vlaneseq
    %v1372 = vshrl.u32 %v1371, 7
    %v1373 = vsub.s32 %v1370, %v1372
    %v1374 = vrot.slane %v1352, %v1373
    %v1376 = vunpack.c.l.s4 1966171168
    %v1377 = vunpack.c.0.s8 %v1376
    %v1378 = vlaneseq
    %v1379 = vshrl.u32 %v1378, 7
    %v1380 = vsub.s32 %v1377, %v1379
    %v1381 = vrot.slane %v1353, %v1380
    %v1382 = vcombine.high %v1360, %v1360
    %v1383 = vcombine.high %v1367, %v1367
    %v1384 = vcombine.high %v1374, %v1374
    %v1385 = vcombine.high %v1381, %v1381
    %v1386 = vcombine.high %v1334, %v1334
    %v1388 = vunpack.c.l.s4 1966171168
    %v1389 = vunpack.c.0.s8 %v1388
    %v1390 = vlaneseq
    %v1391 = vshrl.u32 %v1390, 7
    %v1392 = vsub.s32 %v1389, %v1391
    %v1393 = vrot.slane %v1334, %v1392
    %v1395 = vunpack.c.l.s4 1966171168
    %v1396 = vunpack.c.0.s8 %v1395
    %v1397 = vlaneseq
    %v1398 = vshrl.u32 %v1397, 7
    %v1399 = vsub.s32 %v1396, %v1398
    %v1400 = vrot.slane %v1386, %v1399
    %v1401 = vcombine.high %v1393, %v1393
    %v1402 = vcombine.high %v1400, %v1400
    %v1404 = vunpack.c.l.s4 1966171168
    %v1405 = vunpack.c.0.s8 %v1404
    %v1406 = vlaneseq
    %v1407 = vshrl.u32 %v1406, 7
    %v1408 = vsub.s32 %v1405, %v1407
    %v1409 = vrot.slane %v1393, %v1408
    %v1411 = vunpack.c.l.s4 1966171168
    %v1412 = vunpack.c.0.s8 %v1411
    %v1413 = vlaneseq
    %v1414 = vshrl.u32 %v1413, 7
    %v1415 = vsub.s32 %v1412, %v1414
    %v1416 = vrot.slane %v1400, %v1415
    %v1418 = vunpack.c.l.s4 1966171168
    %v1419 = vunpack.c.0.s8 %v1418
    %v1420 = vlaneseq
    %v1421 = vshrl.u32 %v1420, 7
    %v1422 = vsub.s32 %v1419, %v1421
    %v1423 = vrot.slane %v1401, %v1422
    %v1425 = vunpack.c.l.s4 1966171168
    %v1426 = vunpack.c.0.s8 %v1425
    %v1427 = vlaneseq
    %v1428 = vshrl.u32 %v1427, 7
    %v1429 = vsub.s32 %v1426, %v1428
    %v1430 = vrot.slane %v1402, %v1429
    %v1431 = vcombine.high %v1409, %v1409
    %v1432 = vcombine.high %v1416, %v1416
    %v1433 = vcombine.high %v1423, %v1423
    %v1434 = vcombine.high %v1430, %v1430
    %v1435 = vlaneseq
    %v1436 = vshrl.u32 %v1435, 7
    %v1437 = vsub.s32 0, %v1436
    %v1438 = vrot.slane %v1360, %v1437
    %v1439 = vlaneseq
    %v1440 = vshrl.u32 %v1439, 7
    %v1441 = vsub.s32 0, %v1440
    %v1442 = vrot.slane %v1374, %v1441
    %v1443 = vlaneseq
    %v1444 = vshrl.u32 %v1443, 7
    %v1445 = vsub.s32 0, %v1444
    %v1446 = vrot.slane %v1382, %v1445
    %v1447 = vlaneseq
    %v1448 = vshrl.u32 %v1447, 7
    %v1449 = vsub.s32 0, %v1448
    %v1450 = vrot.slane %v1384, %v1449
    %v1451 = vlaneseq
    %v1452 = vshrl.u32 %v1451, 7
    %v1453 = vsub.s32 0, %v1452
    %v1454 = vrot.slane %v1367, %v1453
    %v1455 = vlaneseq
    %v1456 = vshrl.u32 %v1455, 7
    %v1457 = vsub.s32 0, %v1456
    %v1458 = vrot.slane %v1381, %v1457
    %v1459 = vlaneseq
    %v1460 = vshrl.u32 %v1459, 7
    %v1461 = vsub.s32 0, %v1460
    %v1462 = vrot.slane %v1383, %v1461
    %v1463 = vlaneseq
    %v1464 = vshrl.u32 %v1463, 7
    %v1465 = vsub.s32 0, %v1464
    %v1466 = vrot.slane %v1385, %v1465
    %v1467 = vlaneseq
    %v1468 = vshrl.u32 %v1467, 7
    %v1469 = vsub.s32 0, %v1468
    %v1470 = vrot.slane %v1409, %v1469
    %v1471 = vlaneseq
    %v1472 = vshrl.u32 %v1471, 7
    %v1473 = vsub.s32 0, %v1472
    %v1474 = vrot.slane %v1423, %v1473
    %v1475 = vlaneseq
    %v1476 = vshrl.u32 %v1475, 7
    %v1477 = vsub.s32 0, %v1476
    %v1478 = vrot.slane %v1431, %v1477
    %v1479 = vlaneseq
    %v1480 = vshrl.u32 %v1479, 7
    %v1481 = vsub.s32 0, %v1480
    %v1482 = vrot.slane %v1433, %v1481
    %v1483 = vlaneseq
    %v1484 = vshrl.u32 %v1483, 7
    %v1485 = vsub.s32 0, %v1484
    %v1486 = vrot.slane %v1416, %v1485
    %v1487 = vlaneseq
    %v1488 = vshrl.u32 %v1487, 7
    %v1489 = vsub.s32 0, %v1488
    %v1490 = vrot.slane %v1430, %v1489
    %v1491 = vlaneseq
    %v1492 = vshrl.u32 %v1491, 7
    %v1493 = vsub.s32 0, %v1492
    %v1494 = vrot.slane %v1432, %v1493
    %v1495 = vlaneseq
    %v1496 = vshrl.u32 %v1495, 7
    %v1497 = vsub.s32 0, %v1496
    %v1498 = vrot.slane %v1434, %v1497
    %1515 = vrot.lane.b32.xlu0 %v1333, 6
    %v1516 = vpop.permute.xlu0 %1515
    %1517 = vrot.lane.b32.xlu0 %v1334, 6
    %v1518 = vpop.permute.xlu0 %1517
    %v1521 = vmul.f32 %v1438, %v1516
    %v1522 = vmul.f32 %v1438, %v1518
    %v1523 = vmul.f32 %v1442, %v1516
    %v1524 = vmul.f32 %v1442, %v1518
    %v1525 = vmul.f32 %v1446, %v1516
    %v1526 = vmul.f32 %v1446, %v1518
    %v1527 = vmul.f32 %v1450, %v1516
    %v1528 = vmul.f32 %v1450, %v1518
    %v1529 = vmul.f32 %v1454, %v1516
    %v1530 = vmul.f32 %v1454, %v1518
    %v1531 = vmul.f32 %v1458, %v1516
    %v1532 = vmul.f32 %v1458, %v1518
    %v1533 = vmul.f32 %v1462, %v1516
    %v1534 = vmul.f32 %v1462, %v1518
    %v1535 = vmul.f32 %v1466, %v1516
    %v1536 = vmul.f32 %v1466, %v1518
    %v1537 = vmul.f32 %v1470, %v1516
    %v1538 = vmul.f32 %v1470, %v1518
    %v1539 = vmul.f32 %v1474, %v1516
    %v1540 = vmul.f32 %v1474, %v1518
    %v1541 = vmul.f32 %v1478, %v1516
    %v1542 = vmul.f32 %v1478, %v1518
    %v1543 = vmul.f32 %v1482, %v1516
    %v1544 = vmul.f32 %v1482, %v1518
    %v1545 = vmul.f32 %v1486, %v1516
    %v1546 = vmul.f32 %v1486, %v1518
    %v1547 = vmul.f32 %v1490, %v1516
    %v1548 = vmul.f32 %v1490, %v1518
    %v1549 = vmul.f32 %v1494, %v1516
    %v1550 = vmul.f32 %v1494, %v1518
    %v1551 = vmul.f32 %v1498, %v1516
    %v1552 = vmul.f32 %v1498, %v1518
    %v1553 = vadd.f32 %v1521, %v126
    %v1554 = vadd.f32 %v1522, %v127
    %v1555 = vadd.f32 %v1523, %v128
    %v1556 = vadd.f32 %v1524, %v129
    %v1557 = vadd.f32 %v1525, %v130
    %v1558 = vadd.f32 %v1526, %v131
    %v1559 = vadd.f32 %v1527, %v132
    %v1560 = vadd.f32 %v1528, %v133
    %v1561 = vadd.f32 %v1529, %v134
    %v1562 = vadd.f32 %v1530, %v135
    %v1563 = vadd.f32 %v1531, %v136
    %v1564 = vadd.f32 %v1532, %v137
    %v1565 = vadd.f32 %v1533, %v138
    %v1566 = vadd.f32 %v1534, %v139
    %v1567 = vadd.f32 %v1535, %v140
    %v1568 = vadd.f32 %v1536, %v141
    %v1569 = vadd.f32 %v1537, %v142
    %v1570 = vadd.f32 %v1538, %v143
    %v1571 = vadd.f32 %v1539, %v144
    %v1572 = vadd.f32 %v1540, %v145
    %v1573 = vadd.f32 %v1541, %v146
    %v1574 = vadd.f32 %v1542, %v147
    %v1575 = vadd.f32 %v1543, %v148
    %v1576 = vadd.f32 %v1544, %v149
    %v1577 = vadd.f32 %v1545, %v150
    %v1578 = vadd.f32 %v1546, %v151
    %v1579 = vadd.f32 %v1547, %v152
    %v1580 = vadd.f32 %v1548, %v153
    %v1581 = vadd.f32 %v1549, %v154
    %v1582 = vadd.f32 %v1550, %v155
    %v1583 = vadd.f32 %v1551, %v156
    %v1584 = vadd.f32 %v1552, %v157
    %v1585 = vsel %vm515, %v1553, -inf
    %v1586 = vsel %vm515, %v1555, -inf
    %v1587 = vsel %vm515, %v1557, -inf
    %v1588 = vmax.f32 %v1585, %v1587
    %v1589 = vsel %vm515, %v1559, -inf
    %v1590 = vmax.f32 %v1586, %v1589
    %v1591 = vsel %vm515, %v1561, -inf
    %v1592 = vmax.f32 %v1588, %v1591
    %v1593 = vsel %vm515, %v1563, -inf
    %v1594 = vmax.f32 %v1590, %v1593
    %v1595 = vsel %vm515, %v1565, -inf
    %v1596 = vmax.f32 %v1592, %v1595
    %v1597 = vsel %vm515, %v1567, -inf
    %v1598 = vmax.f32 %v1594, %v1597
    %v1599 = vsel %vm515, %v1569, -inf
    %v1600 = vmax.f32 %v1596, %v1599
    %v1601 = vsel %vm515, %v1571, -inf
    %v1602 = vmax.f32 %v1598, %v1601
    %v1603 = vsel %vm515, %v1573, -inf
    %v1604 = vmax.f32 %v1600, %v1603
    %v1605 = vsel %vm515, %v1575, -inf
    %v1606 = vmax.f32 %v1602, %v1605
    %v1607 = vsel %vm515, %v1577, -inf
    %v1608 = vmax.f32 %v1604, %v1607
    %v1609 = vsel %vm515, %v1579, -inf
    %v1610 = vmax.f32 %v1606, %v1609
    %v1611 = vsel %vm515, %v1581, -inf
    %v1612 = vmax.f32 %v1608, %v1611
    %v1613 = vsel %vm515, %v1583, -inf
    %v1614 = vmax.f32 %v1610, %v1613
    %v1615 = vmax.f32 %v1612, %v1614
    %v1616 = vsel %vm515, %v1554, -inf
    %v1617 = vsel %vm515, %v1556, -inf
    %v1618 = vsel %vm515, %v1558, -inf
    %v1619 = vmax.f32 %v1616, %v1618
    %v1620 = vsel %vm515, %v1560, -inf
    %v1621 = vmax.f32 %v1617, %v1620
    %v1622 = vsel %vm515, %v1562, -inf
    %v1623 = vmax.f32 %v1619, %v1622
    %v1624 = vsel %vm515, %v1564, -inf
    %v1625 = vmax.f32 %v1621, %v1624
    %v1626 = vsel %vm515, %v1566, -inf
    %v1627 = vmax.f32 %v1623, %v1626
    %v1628 = vsel %vm515, %v1568, -inf
    %v1629 = vmax.f32 %v1625, %v1628
    %v1630 = vsel %vm515, %v1570, -inf
    %v1631 = vmax.f32 %v1627, %v1630
    %v1632 = vsel %vm515, %v1572, -inf
    %v1633 = vmax.f32 %v1629, %v1632
    %v1634 = vsel %vm515, %v1574, -inf
    %v1635 = vmax.f32 %v1631, %v1634
    %v1636 = vsel %vm515, %v1576, -inf
    %v1637 = vmax.f32 %v1633, %v1636
    %v1638 = vsel %vm515, %v1578, -inf
    %v1639 = vmax.f32 %v1635, %v1638
    %v1640 = vsel %vm515, %v1580, -inf
    %v1641 = vmax.f32 %v1637, %v1640
    %v1642 = vsel %vm515, %v1582, -inf
    %v1643 = vmax.f32 %v1639, %v1642
    %v1644 = vsel %vm515, %v1584, -inf
    %v1645 = vmax.f32 %v1641, %v1644
    %v1646 = vmax.f32 %v1643, %v1645
    %v1647 = vsub.f32 %v1553, %v1615
    %v1648 = vsub.f32 %v1554, %v1646
    %v1649 = vsub.f32 %v1555, %v1615
    %v1650 = vsub.f32 %v1556, %v1646
    %v1651 = vsub.f32 %v1557, %v1615
    %v1652 = vsub.f32 %v1558, %v1646
    %v1653 = vsub.f32 %v1559, %v1615
    %v1654 = vsub.f32 %v1560, %v1646
    %v1655 = vsub.f32 %v1561, %v1615
    %v1656 = vsub.f32 %v1562, %v1646
    %v1657 = vsub.f32 %v1563, %v1615
    %v1658 = vsub.f32 %v1564, %v1646
    %v1659 = vsub.f32 %v1565, %v1615
    %v1660 = vsub.f32 %v1566, %v1646
    %v1661 = vsub.f32 %v1567, %v1615
    %v1662 = vsub.f32 %v1568, %v1646
    %v1663 = vsub.f32 %v1569, %v1615
    %v1664 = vsub.f32 %v1570, %v1646
    %v1665 = vsub.f32 %v1571, %v1615
    %v1666 = vsub.f32 %v1572, %v1646
    %v1667 = vsub.f32 %v1573, %v1615
    %v1668 = vsub.f32 %v1574, %v1646
    %v1669 = vsub.f32 %v1575, %v1615
    %v1670 = vsub.f32 %v1576, %v1646
    %v1671 = vsub.f32 %v1577, %v1615
    %v1672 = vsub.f32 %v1578, %v1646
    %v1673 = vsub.f32 %v1579, %v1615
    %v1674 = vsub.f32 %v1580, %v1646
    %v1675 = vsub.f32 %v1581, %v1615
    %v1676 = vsub.f32 %v1582, %v1646
    %v1677 = vsub.f32 %v1583, %v1615
    %v1678 = vsub.f32 %v1584, %v1646
    %v1679 = vmul.f32 %v1647, 1.442695
    %v1680 = vpow.pop %v1679
    %v1681 = vmul.f32 %v1648, 1.442695
    %v1682 = vpow.pop %v1681
    %v1683 = vmul.f32 %v1649, 1.442695
    %v1684 = vpow.pop %v1683
    %v1685 = vmul.f32 %v1650, 1.442695
    %v1686 = vpow.pop %v1685
    %v1687 = vmul.f32 %v1651, 1.442695
    %v1688 = vpow.pop %v1687
    %v1689 = vmul.f32 %v1652, 1.442695
    %v1690 = vpow.pop %v1689
    %v1691 = vmul.f32 %v1653, 1.442695
    %v1692 = vpow.pop %v1691
    %v1693 = vmul.f32 %v1654, 1.442695
    %v1694 = vpow.pop %v1693
    %v1695 = vmul.f32 %v1655, 1.442695
    %v1696 = vpow.pop %v1695
    %v1697 = vmul.f32 %v1656, 1.442695
    %v1698 = vpow.pop %v1697
    %v1699 = vmul.f32 %v1657, 1.442695
    %v1700 = vpow.pop %v1699
    %v1701 = vmul.f32 %v1658, 1.442695
    %v1702 = vpow.pop %v1701
    %v1703 = vmul.f32 %v1659, 1.442695
    %v1704 = vpow.pop %v1703
    %v1705 = vmul.f32 %v1660, 1.442695
    %v1706 = vpow.pop %v1705
    %v1707 = vmul.f32 %v1661, 1.442695
    %v1708 = vpow.pop %v1707
    %v1709 = vmul.f32 %v1662, 1.442695
    %v1710 = vpow.pop %v1709
    %v1711 = vmul.f32 %v1663, 1.442695
    %v1712 = vpow.pop %v1711
    %v1713 = vmul.f32 %v1664, 1.442695
    %v1714 = vpow.pop %v1713
    %v1715 = vmul.f32 %v1665, 1.442695
    %v1716 = vpow.pop %v1715
    %v1717 = vmul.f32 %v1666, 1.442695
    %v1718 = vpow.pop %v1717
    %v1719 = vmul.f32 %v1667, 1.442695
    %v1720 = vpow.pop %v1719
    %v1721 = vmul.f32 %v1668, 1.442695
    %v1722 = vpow.pop %v1721
    %v1723 = vmul.f32 %v1669, 1.442695
    %v1724 = vpow.pop %v1723
    %v1725 = vmul.f32 %v1670, 1.442695
    %v1726 = vpow.pop %v1725
    %v1727 = vmul.f32 %v1671, 1.442695
    %v1728 = vpow.pop %v1727
    %v1729 = vmul.f32 %v1672, 1.442695
    %v1730 = vpow.pop %v1729
    %v1731 = vmul.f32 %v1673, 1.442695
    %v1732 = vpow.pop %v1731
    %v1733 = vmul.f32 %v1674, 1.442695
    %v1734 = vpow.pop %v1733
    %v1735 = vmul.f32 %v1675, 1.442695
    %v1736 = vpow.pop %v1735
    %v1737 = vmul.f32 %v1676, 1.442695
    %v1738 = vpow.pop %v1737
    %v1739 = vmul.f32 %v1677, 1.442695
    %v1740 = vpow.pop %v1739
    %v1741 = vmul.f32 %v1678, 1.442695
    %v1742 = vpow.pop %v1741
    %v1743 = vsel %vm515, %v1680, 0.0
    %v1744 = vsel %vm515, %v1684, 0.0
    %v1745 = vadd.f32 %v1743, %v1744
    %v1746 = vsel %vm515, %v1688, 0.0
    %v1747 = vadd.f32 %v1745, %v1746
    %v1748 = vsel %vm515, %v1692, 0.0
    %v1749 = vadd.f32 %v1747, %v1748
    %v1750 = vsel %vm515, %v1696, 0.0
    %v1751 = vadd.f32 %v1749, %v1750
    %v1752 = vsel %vm515, %v1700, 0.0
    %v1753 = vadd.f32 %v1751, %v1752
    %v1754 = vsel %vm515, %v1704, 0.0
    %v1755 = vadd.f32 %v1753, %v1754
    %v1756 = vsel %vm515, %v1708, 0.0
    %v1757 = vadd.f32 %v1755, %v1756
    %v1758 = vsel %vm515, %v1712, 0.0
    %v1759 = vadd.f32 %v1757, %v1758
    %v1760 = vsel %vm515, %v1716, 0.0
    %v1761 = vadd.f32 %v1759, %v1760
    %v1762 = vsel %vm515, %v1720, 0.0
    %v1763 = vadd.f32 %v1761, %v1762
    %v1764 = vsel %vm515, %v1724, 0.0
    %v1765 = vadd.f32 %v1763, %v1764
    %v1766 = vsel %vm515, %v1728, 0.0
    %v1767 = vadd.f32 %v1765, %v1766
    %v1768 = vsel %vm515, %v1732, 0.0
    %v1769 = vadd.f32 %v1767, %v1768
    %v1770 = vsel %vm515, %v1736, 0.0
    %v1771 = vadd.f32 %v1769, %v1770
    %v1772 = vsel %vm515, %v1740, 0.0
    %v1773 = vadd.f32 %v1771, %v1772
    %v1774 = vsel %vm515, %v1682, 0.0
    %v1775 = vsel %vm515, %v1686, 0.0
    %v1776 = vadd.f32 %v1774, %v1775
    %v1777 = vsel %vm515, %v1690, 0.0
    %v1778 = vadd.f32 %v1776, %v1777
    %v1779 = vsel %vm515, %v1694, 0.0
    %v1780 = vadd.f32 %v1778, %v1779
    %v1781 = vsel %vm515, %v1698, 0.0
    %v1782 = vadd.f32 %v1780, %v1781
    %v1783 = vsel %vm515, %v1702, 0.0
    %v1784 = vadd.f32 %v1782, %v1783
    %v1785 = vsel %vm515, %v1706, 0.0
    %v1786 = vadd.f32 %v1784, %v1785
    %v1787 = vsel %vm515, %v1710, 0.0
    %v1788 = vadd.f32 %v1786, %v1787
    %v1789 = vsel %vm515, %v1714, 0.0
    %v1790 = vadd.f32 %v1788, %v1789
    %v1791 = vsel %vm515, %v1718, 0.0
    %v1792 = vadd.f32 %v1790, %v1791
    %v1793 = vsel %vm515, %v1722, 0.0
    %v1794 = vadd.f32 %v1792, %v1793
    %v1795 = vsel %vm515, %v1726, 0.0
    %v1796 = vadd.f32 %v1794, %v1795
    %v1797 = vsel %vm515, %v1730, 0.0
    %v1798 = vadd.f32 %v1796, %v1797
    %v1799 = vsel %vm515, %v1734, 0.0
    %v1800 = vadd.f32 %v1798, %v1799
    %v1801 = vsel %vm515, %v1738, 0.0
    %v1802 = vadd.f32 %v1800, %v1801
    %v1803 = vsel %vm515, %v1742, 0.0
    %v1804 = vadd.f32 %v1802, %v1803
    %1805 = vrot.lane.b32.xlu0 %v1438, 122
    %v1806 = vpop.permute.xlu0 %1805
    %1807 = vrot.lane.b32.xlu0 %v1442, 122
    %v1808 = vpop.permute.xlu0 %1807
    %1809 = vrot.lane.b32.xlu0 %v1446, 122
    %v1810 = vpop.permute.xlu0 %1809
    %1811 = vrot.lane.b32.xlu0 %v1450, 122
    %v1812 = vpop.permute.xlu0 %1811
    %1813 = vrot.lane.b32.xlu0 %v1454, 122
    %v1814 = vpop.permute.xlu0 %1813
    %1815 = vrot.lane.b32.xlu0 %v1458, 122
    %v1816 = vpop.permute.xlu0 %1815
    %1817 = vrot.lane.b32.xlu0 %v1462, 122
    %v1818 = vpop.permute.xlu0 %1817
    %1819 = vrot.lane.b32.xlu0 %v1466, 122
    %v1820 = vpop.permute.xlu0 %1819
    %1821 = vrot.lane.b32.xlu0 %v1470, 122
    %v1822 = vpop.permute.xlu0 %1821
    %1823 = vrot.lane.b32.xlu0 %v1474, 122
    %v1824 = vpop.permute.xlu0 %1823
    %1825 = vrot.lane.b32.xlu0 %v1478, 122
    %v1826 = vpop.permute.xlu0 %1825
    %1827 = vrot.lane.b32.xlu0 %v1482, 122
    %v1828 = vpop.permute.xlu0 %1827
    %1829 = vrot.lane.b32.xlu0 %v1486, 122
    %v1830 = vpop.permute.xlu0 %1829
    %1831 = vrot.lane.b32.xlu0 %v1490, 122
    %v1832 = vpop.permute.xlu0 %1831
    %1833 = vrot.lane.b32.xlu0 %v1494, 122
    %v1834 = vpop.permute.xlu0 %1833
    %1835 = vrot.lane.b32.xlu0 %v1498, 122
    %v1836 = vpop.permute.xlu0 %1835
    %v1853 = vmul.f32 %v1680, %v1806
    %v1854 = vmul.f32 %v1682, %v1806
    %v1855 = vmul.f32 %v1684, %v1808
    %v1856 = vmul.f32 %v1686, %v1808
    %v1857 = vmul.f32 %v1688, %v1810
    %v1858 = vmul.f32 %v1690, %v1810
    %v1859 = vmul.f32 %v1692, %v1812
    %v1860 = vmul.f32 %v1694, %v1812
    %v1861 = vmul.f32 %v1696, %v1814
    %v1862 = vmul.f32 %v1698, %v1814
    %v1863 = vmul.f32 %v1700, %v1816
    %v1864 = vmul.f32 %v1702, %v1816
    %v1865 = vmul.f32 %v1704, %v1818
    %v1866 = vmul.f32 %v1706, %v1818
    %v1867 = vmul.f32 %v1708, %v1820
    %v1868 = vmul.f32 %v1710, %v1820
    %v1869 = vmul.f32 %v1712, %v1822
    %v1870 = vmul.f32 %v1714, %v1822
    %v1871 = vmul.f32 %v1716, %v1824
    %v1872 = vmul.f32 %v1718, %v1824
    %v1873 = vmul.f32 %v1720, %v1826
    %v1874 = vmul.f32 %v1722, %v1826
    %v1875 = vmul.f32 %v1724, %v1828
    %v1876 = vmul.f32 %v1726, %v1828
    %v1877 = vmul.f32 %v1728, %v1830
    %v1878 = vmul.f32 %v1730, %v1830
    %v1879 = vmul.f32 %v1732, %v1832
    %v1880 = vmul.f32 %v1734, %v1832
    %v1881 = vmul.f32 %v1736, %v1834
    %v1882 = vmul.f32 %v1738, %v1834
    %v1883 = vmul.f32 %v1740, %v1836
    %v1884 = vmul.f32 %v1742, %v1836
    %v1885 = vsel %vm515, %v1853, 0.0
    %v1886 = vsel %vm515, %v1855, 0.0
    %v1887 = vadd.f32 %v1885, %v1886
    %v1888 = vsel %vm515, %v1857, 0.0
    %v1889 = vadd.f32 %v1887, %v1888
    %v1890 = vsel %vm515, %v1859, 0.0
    %v1891 = vadd.f32 %v1889, %v1890
    %v1892 = vsel %vm515, %v1861, 0.0
    %v1893 = vadd.f32 %v1891, %v1892
    %v1894 = vsel %vm515, %v1863, 0.0
    %v1895 = vadd.f32 %v1893, %v1894
    %v1896 = vsel %vm515, %v1865, 0.0
    %v1897 = vadd.f32 %v1895, %v1896
    %v1898 = vsel %vm515, %v1867, 0.0
    %v1899 = vadd.f32 %v1897, %v1898
    %v1900 = vsel %vm515, %v1869, 0.0
    %v1901 = vadd.f32 %v1899, %v1900
    %v1902 = vsel %vm515, %v1871, 0.0
    %v1903 = vadd.f32 %v1901, %v1902
    %v1904 = vsel %vm515, %v1873, 0.0
    %v1905 = vadd.f32 %v1903, %v1904
    %v1906 = vsel %vm515, %v1875, 0.0
    %v1907 = vadd.f32 %v1905, %v1906
    %v1908 = vsel %vm515, %v1877, 0.0
    %v1909 = vadd.f32 %v1907, %v1908
    %v1910 = vsel %vm515, %v1879, 0.0
    %v1911 = vadd.f32 %v1909, %v1910
    %v1912 = vsel %vm515, %v1881, 0.0
    %v1913 = vadd.f32 %v1911, %v1912
    %v1914 = vsel %vm515, %v1883, 0.0
    %v1915 = vadd.f32 %v1913, %v1914
    %v1916 = vsel %vm515, %v1854, 0.0
    %v1917 = vsel %vm515, %v1856, 0.0
    %v1918 = vadd.f32 %v1916, %v1917
    %v1919 = vsel %vm515, %v1858, 0.0
    %v1920 = vadd.f32 %v1918, %v1919
    %v1921 = vsel %vm515, %v1860, 0.0
    %v1922 = vadd.f32 %v1920, %v1921
    %v1923 = vsel %vm515, %v1862, 0.0
    %v1924 = vadd.f32 %v1922, %v1923
    %v1925 = vsel %vm515, %v1864, 0.0
    %v1926 = vadd.f32 %v1924, %v1925
    %v1927 = vsel %vm515, %v1866, 0.0
    %v1928 = vadd.f32 %v1926, %v1927
    %v1929 = vsel %vm515, %v1868, 0.0
    %v1930 = vadd.f32 %v1928, %v1929
    %v1931 = vsel %vm515, %v1870, 0.0
    %v1932 = vadd.f32 %v1930, %v1931
    %v1933 = vsel %vm515, %v1872, 0.0
    %v1934 = vadd.f32 %v1932, %v1933
    %v1935 = vsel %vm515, %v1874, 0.0
    %v1936 = vadd.f32 %v1934, %v1935
    %v1937 = vsel %vm515, %v1876, 0.0
    %v1938 = vadd.f32 %v1936, %v1937
    %v1939 = vsel %vm515, %v1878, 0.0
    %v1940 = vadd.f32 %v1938, %v1939
    %v1941 = vsel %vm515, %v1880, 0.0
    %v1942 = vadd.f32 %v1940, %v1941
    %v1943 = vsel %vm515, %v1882, 0.0
    %v1944 = vadd.f32 %v1942, %v1943
    %v1945 = vsel %vm515, %v1884, 0.0
    %v1946 = vadd.f32 %v1944, %v1945
    %v1947 = vrcp.pop %v1773
    %v1948 = vrcp.pop %v1804
    %v1949 = vmul.f32 %v1915, %v1947
    %v1950 = vmul.f32 %v1946, %v1948
    %1952 = vset.pattern.permute.xlu0 6
    %1953 = vperm.xlu0 %1952, %v1949
    %v1954 = vpop.permute.xlu0 %1953
    %1957 = vset.pattern.permute.xlu0 6
    %1958 = vperm.xlu0 %1957, %v1950
    %v1959 = vpop.permute.xlu0 %1958
    %v1961 = vmul.f32 %v1954, %v1246
    %v1962 = vmul.f32 %v1959, %v1246
    %1963 = vset.pattern.permute.xlu0 7
    %1964 = vperm.xlu0 %1963, %v1949
    %v1965 = vpop.permute.xlu0 %1964
    %1967 = vset.pattern.permute.xlu0 7
    %1968 = vperm.xlu0 %1967, %v1950
    %v1969 = vpop.permute.xlu0 %1968
    %v1971 = vmul.f32 %v1965, %v1260
    %v1972 = vmul.f32 %v1969, %v1260
    %v1973 = vadd.f32 %v1961, %v1971
    %v1974 = vadd.f32 %v1962, %v1972
    %1975 = vset.pattern.permute.xlu0 8
    %1976 = vperm.xlu0 %1975, %v1949
    %v1977 = vpop.permute.xlu0 %1976
    %1979 = vset.pattern.permute.xlu0 8
    %1980 = vperm.xlu0 %1979, %v1950
    %v1981 = vpop.permute.xlu0 %1980
    %v1983 = vmul.f32 %v1977, %v1276
    %v1984 = vmul.f32 %v1981, %v1276
    %v1985 = vadd.f32 %v1973, %v1983
    %v1986 = vadd.f32 %v1974, %v1984
    %1987 = vset.pattern.permute.xlu0 9
    %1988 = vperm.xlu0 %1987, %v1949
    %v1989 = vpop.permute.xlu0 %1988
    %1991 = vset.pattern.permute.xlu0 9
    %1992 = vperm.xlu0 %1991, %v1950
    %v1993 = vpop.permute.xlu0 %1992
    %v1995 = vmul.f32 %v1989, %v1292
    %v1996 = vmul.f32 %v1993, %v1292
    %v1997 = vadd.f32 %v1985, %v1995
    %v1998 = vadd.f32 %v1986, %v1996
    %1999 = vset.pattern.permute.xlu0 10
    %2000 = vperm.xlu0 %1999, %v1949
    %v2001 = vpop.permute.xlu0 %2000
    %2003 = vset.pattern.permute.xlu0 10
    %2004 = vperm.xlu0 %2003, %v1950
    %v2005 = vpop.permute.xlu0 %2004
    %v2007 = vmul.f32 %v2001, %v1308
    %v2008 = vmul.f32 %v2005, %v1308
    %v2009 = vadd.f32 %v1997, %v2007
    %v2010 = vadd.f32 %v1998, %v2008
    %2011 = vset.pattern.permute.xlu0 11
    %2012 = vperm.xlu0 %2011, %v1949
    %v2013 = vpop.permute.xlu0 %2012
    %2015 = vset.pattern.permute.xlu0 11
    %2016 = vperm.xlu0 %2015, %v1950
    %v2017 = vpop.permute.xlu0 %2016
    %v2019 = vmul.f32 %v2013, %v1324
    %v2020 = vmul.f32 %v2017, %v1324
    %v2021 = vadd.f32 %v2009, %v2019
    %v2022 = vadd.f32 %v2010, %v2020
    %v2023 = vadd.f32 %v2021, %v1332
    %v2024 = vadd.f32 %v2022, %v1332
    %2027 = vrot.lane.b32.xlu0 %v2023, 110
    %v2028 = vpop.permute.xlu0 %2027
    %2029 = vrot.lane.b32.xlu0 %v2024, 110
    %v2030 = vpop.permute.xlu0 %2029
    %v2033 = vadd.f32 %v1226, %v2028
    %v2034 = vadd.f32 %v1227, %v2030
    %v2035 = vsel %vm966, %v2033, 0.0
    %2036 = vadd.xlane.f32.xlu0 %v2035
    %v2037 = vpop.xlane.xlu0 %2036
    %v2038 = vsel %vm966, %v2034, 0.0
    %2039 = vadd.xlane.f32.xlu0 %v2038
    %v2040 = vpop.xlane.xlu0 %2039
    %v2041 = vmul.f32 %v2037, %v973
    %v2042 = vmul.f32 %v2040, %v973
    %v2043 = vmul.f32 %v2033, %v2033
    %v2044 = vmul.f32 %v2034, %v2034
    %v2045 = vsel %vm966, %v2043, 0.0
    %2046 = vadd.xlane.f32.xlu0 %v2045
    %v2047 = vpop.xlane.xlu0 %2046
    %v2048 = vsel %vm966, %v2044, 0.0
    %2049 = vadd.xlane.f32.xlu0 %v2048
    %v2050 = vpop.xlane.xlu0 %2049
    %v2051 = vmul.f32 %v2047, %v973
    %v2052 = vmul.f32 %v2050, %v973
    %v2053 = vmul.f32 %v2041, %v2041
    %v2054 = vmul.f32 %v2042, %v2042
    %v2055 = vsub.f32 %v2051, %v2053
    %v2056 = vsub.f32 %v2052, %v2054
    %v2057 = vsub.f32 %v2033, %v2041
    %v2058 = vsub.f32 %v2034, %v2042
    %v2059 = vadd.f32 %v2055, 1e-05
    %v2060 = vadd.f32 %v2056, 1e-05
    %v2061 = vrsqrt.pop %v2059
    %v2062 = vrsqrt.pop %v2060
    %v2063 = vmul.f32 %v2057, %v2061
    %v2064 = vmul.f32 %v2058, %v2062
    %2066 = vrot.lane.b32.xlu0 %v1332, 74
    %v2067 = vpop.permute.xlu0 %2066
    %v2069 = vmul.f32 %v2063, %v2067
    %v2070 = vmul.f32 %v2064, %v2067
    %2071 = vrot.lane.b32.xlu0 %v1332, 68
    %v2072 = vpop.permute.xlu0 %2071
    %v2074 = vadd.f32 %v2069, %v2072
    %v2075 = vadd.f32 %v2070, %v2072
    %2077 = vset.pattern.permute.xlu0 0
    %2078 = vperm.xlu0 %2077, %v2074
    %v2079 = vpop.permute.xlu0 %2078
    %2082 = vset.pattern.permute.xlu0 0
    %2083 = vperm.xlu0 %2082, %v2075
    %v2084 = vpop.permute.xlu0 %2083
    %v2086 = vmul.f32 %v2079, %v1246
    %v2087 = vmul.f32 %v2084, %v1246
    %2088 = vset.pattern.permute.xlu0 1
    %2089 = vperm.xlu0 %2088, %v2074
    %v2090 = vpop.permute.xlu0 %2089
    %2092 = vset.pattern.permute.xlu0 1
    %2093 = vperm.xlu0 %2092, %v2075
    %v2094 = vpop.permute.xlu0 %2093
    %v2096 = vmul.f32 %v2090, %v1260
    %v2097 = vmul.f32 %v2094, %v1260
    %v2098 = vadd.f32 %v2086, %v2096
    %v2099 = vadd.f32 %v2087, %v2097
    %2100 = vset.pattern.permute.xlu0 2
    %2101 = vperm.xlu0 %2100, %v2074
    %v2102 = vpop.permute.xlu0 %2101
    %2104 = vset.pattern.permute.xlu0 2
    %2105 = vperm.xlu0 %2104, %v2075
    %v2106 = vpop.permute.xlu0 %2105
    %v2108 = vmul.f32 %v2102, %v1276
    %v2109 = vmul.f32 %v2106, %v1276
    %v2110 = vadd.f32 %v2098, %v2108
    %v2111 = vadd.f32 %v2099, %v2109
    %2112 = vset.pattern.permute.xlu0 3
    %2113 = vperm.xlu0 %2112, %v2074
    %v2114 = vpop.permute.xlu0 %2113
    %2116 = vset.pattern.permute.xlu0 3
    %2117 = vperm.xlu0 %2116, %v2075
    %v2118 = vpop.permute.xlu0 %2117
    %v2120 = vmul.f32 %v2114, %v1292
    %v2121 = vmul.f32 %v2118, %v1292
    %v2122 = vadd.f32 %v2110, %v2120
    %v2123 = vadd.f32 %v2111, %v2121
    %2124 = vset.pattern.permute.xlu0 4
    %2125 = vperm.xlu0 %2124, %v2074
    %v2126 = vpop.permute.xlu0 %2125
    %2128 = vset.pattern.permute.xlu0 4
    %2129 = vperm.xlu0 %2128, %v2075
    %v2130 = vpop.permute.xlu0 %2129
    %v2132 = vmul.f32 %v2126, %v1308
    %v2133 = vmul.f32 %v2130, %v1308
    %v2134 = vadd.f32 %v2122, %v2132
    %v2135 = vadd.f32 %v2123, %v2133
    %2136 = vset.pattern.permute.xlu0 5
    %2137 = vperm.xlu0 %2136, %v2074
    %v2138 = vpop.permute.xlu0 %2137
    %2140 = vset.pattern.permute.xlu0 5
    %2141 = vperm.xlu0 %2140, %v2075
    %v2142 = vpop.permute.xlu0 %2141
    %v2144 = vmul.f32 %v2138, %v1324
    %v2145 = vmul.f32 %v2142, %v1324
    %v2146 = vadd.f32 %v2134, %v2144
    %v2147 = vadd.f32 %v2135, %v2145
    %v2148 = vadd.f32 %v2146, %v1332
    %v2149 = vadd.f32 %v2147, %v1332
    %v2150 = vmax.f32 %v2148, 0.0
    %v2151 = vmax.f32 %v2149, 0.0
    %2154 = vrot.lane.b32.xlu0 %v2150, 104
    %v2155 = vpop.permute.xlu0 %2154
    %2156 = vrot.lane.b32.xlu0 %v2151, 104
    %v2157 = vpop.permute.xlu0 %2156
    %2161 = vrot.lane.b32.xlu0 %v1229, 74
    %v2162 = vpop.permute.xlu0 %2161
    %2163 = vrot.lane.b32.xlu0 %v1230, 74
    %v2164 = vpop.permute.xlu0 %2163
    %2165 = vrot.lane.b32.xlu0 %v1231, 74
    %v2166 = vpop.permute.xlu0 %2165
    %2170 = vrot.lane.b32.xlu0 %v1332, 80
    %v2171 = vpop.permute.xlu0 %2170
    %v2173 = vsel %vm1106, %v2155, 0
    %v2175 = vsel %vm1106, %v2157, 0
    %2177 = vmatprep.subr.mxu0 0.0
    %2178 = vmatpush1.msra.mxu0 %v2162
    %2179 = vmatprep.subr.mxu0 0.0
    %2180 = vmatpush1.msra.mxu0 %v2164
    %2181 = vmatprep.subr.mxu0 0.0
    %2182 = vmatpush1.msra.mxu0 %v2166
    %2183 = vmatprep.subr.mxu0 0.0
    %2184 = vmatpush1.msra.mxu0 0.0
    %2185 = vmatprep.subr.mxu0 0.0
    %2186 = vmatpush1.msra.mxu0 0.0
    %2187 = vmatprep.subr.mxu0 0.0
    %2188 = vmatpush1.msra.mxu0 0.0
    %2189 = vmatprep.subr.mxu0 0.0
    %2190 = vmatpush1.msra.mxu0 0.0
    %2191 = vmatprep.subr.mxu0 0.0
    %2192 = vmatpush1.msra.mxu0 0.0
    %2193 = vmatprep.subr.mxu0 0.0
    %2194 = vmatpush1.msra.mxu0 0.0
    %2195 = vmatprep.subr.mxu0 0.0
    %2196 = vmatpush1.msra.mxu0 0.0
    %2197 = vmatprep.subr.mxu0 0.0
    %2198 = vmatpush1.msra.mxu0 0.0
    %2199 = vmatprep.subr.mxu0 0.0
    %2200 = vmatpush1.msra.mxu0 0.0
    %2201 = vmatprep.subr.mxu0 0.0
    %2202 = vmatpush1.msra.mxu0 0.0
    %2203 = vmatprep.subr.mxu0 0.0
    %2204 = vmatpush1.msra.mxu0 0.0
    %2205 = vmatprep.subr.mxu0 0.0
    %2206 = vmatpush1.msra.mxu0 0.0
    %2207 = vmatprep.subr.mxu0 0.0
    %2208 = vmatpush1.msra.mxu0 0.0
    %2209 = vmatprep.subr.mxu0 0.0
    %2210 = vmatpush1.msra.mxu0 0.0
    %2211 = vmatprep.subr.mxu0 0.0
    %2212 = vmatpush1.msra.mxu0 0.0
    %2213 = vmatprep.subr.mxu0 0.0
    %2214 = vmatpush1.msra.mxu0 0.0
    %2215 = vmatprep.subr.mxu0 0.0
    %2216 = vmatpush1.msra.mxu0 0.0
    %2217 = vmatprep.subr.mxu0 0.0
    %2218 = vmatpush1.msra.mxu0 0.0
    %2219 = vmatprep.subr.mxu0 0.0
    %2220 = vmatpush1.msra.mxu0 0.0
    %2221 = vmatprep.subr.mxu0 0.0
    %2222 = vmatpush1.msra.mxu0 0.0
    %2223 = vmatprep.subr.mxu0 0.0
    %2224 = vmatpush1.msra.mxu0 0.0
    %2225 = vmatprep.subr.mxu0 0.0
    %2226 = vmatpush1.msra.mxu0 0.0
    %2227 = vmatprep.subr.mxu0 0.0
    %2228 = vmatpush1.msra.mxu0 0.0
    %2229 = vmatprep.subr.mxu0 0.0
    %2230 = vmatpush1.msra.mxu0 0.0
    %2231 = vmatprep.subr.mxu0 0.0
    %2232 = vmatpush1.msra.mxu0 0.0
    %2233 = vmatprep.subr.mxu0 0.0
    %2234 = vmatpush1.msra.mxu0 0.0
    %2235 = vmatprep.subr.mxu0 0.0
    %2236 = vmatpush1.msra.mxu0 0.0
    %2237 = vmatprep.subr.mxu0 0.0
    %2238 = vmatpush1.msra.mxu0 0.0
    %2239 = vmatprep.subr.mxu0 0.0
    %2240 = vmatpush1.msra.mxu0 0.0
    %2241 = vmatprep.mubr.f32.mxu0 0.0
    %2242 = vmatmul.mubr.f32.gmra.mrb[0].mxu0 %v2173
    %v2243 = vpop.f32.mrb[0].mxu0
    %v2244 = vadd.f32 %v2171, %v2243
    %v2245 = vpop.f32.mrb[0].mxu0
    %2246 = vmatprep.mubr.f32.mxu0 0.0
    %2247 = vmatmul.mubr.f32.gmra.mrb[0].mxu0 %v2175
    %v2248 = vpop.f32.mrb[0].mxu0
    %v2249 = vadd.f32 %v2171, %v2248
    %v2250 = vpop.f32.mrb[0].mxu0
    %2251 = vdwg.mxu0
    %v2252 = vadd.f32 %v2074, %v2244
    %v2253 = vadd.f32 %v2075, %v2249
    %v2254 = vsel %vm966, %v2252, 0.0
    %2255 = vadd.xlane.f32.xlu0 %v2254
    %v2256 = vpop.xlane.xlu0 %2255
    %v2257 = vsel %vm966, %v2253, 0.0
    %2258 = vadd.xlane.f32.xlu0 %v2257
    %v2259 = vpop.xlane.xlu0 %2258
    %v2260 = vmul.f32 %v2256, %v973
    %v2261 = vmul.f32 %v2259, %v973
    %v2262 = vmul.f32 %v2252, %v2252
    %v2263 = vmul.f32 %v2253, %v2253
    %v2264 = vsel %vm966, %v2262, 0.0
    %2265 = vadd.xlane.f32.xlu0 %v2264
    %v2266 = vpop.xlane.xlu0 %2265
    %v2267 = vsel %vm966, %v2263, 0.0
    %2268 = vadd.xlane.f32.xlu0 %v2267
    %v2269 = vpop.xlane.xlu0 %2268
    %v2270 = vmul.f32 %v2266, %v973
    %v2271 = vmul.f32 %v2269, %v973
    %v2272 = vmul.f32 %v2260, %v2260
    %v2273 = vmul.f32 %v2261, %v2261
    %v2274 = vsub.f32 %v2270, %v2272
    %v2275 = vsub.f32 %v2271, %v2273
    %v2276 = vsub.f32 %v2252, %v2260
    %v2277 = vsub.f32 %v2253, %v2261
    %v2278 = vadd.f32 %v2274, 1e-05
    %v2279 = vadd.f32 %v2275, 1e-05
    %v2280 = vrsqrt.pop %v2278
    %v2281 = vrsqrt.pop %v2279
    %v2282 = vmul.f32 %v2276, %v2280
    %v2283 = vmul.f32 %v2277, %v2281
    %2284 = vrot.lane.b32.xlu0 %v1332, 62
    %v2285 = vpop.permute.xlu0 %2284
    %v2287 = vmul.f32 %v2282, %v2285
    %v2288 = vmul.f32 %v2283, %v2285
    %2289 = vrot.lane.b32.xlu0 %v1332, 56
    %v2290 = vpop.permute.xlu0 %2289
    %v2292 = vadd.f32 %v2287, %v2290
    %v2293 = vadd.f32 %v2288, %v2290
    %v2294 = vld [vmem:[#allocation2 + $0x10] sm:$0x3f]
    %v2295 = vld [vmem:[#allocation2] sm:$0xff]
    %v2296 = vld [vmem:[#allocation2 + $0x8] sm:$0xff]
    %v2297 = vld [vmem:[#allocation2 + $0x10] sm:$0xff]
    %v2298 = vld [vmem:[#allocation2 + $0x22] sm:$0x1]
    %2300 = vset.pattern.permute.xlu0 0
    %2301 = vperm.xlu0 %2300, %v2292
    %v2302 = vpop.permute.xlu0 %2301
    %2305 = vset.pattern.permute.xlu0 0
    %2306 = vperm.xlu0 %2305, %v2293
    %v2307 = vpop.permute.xlu0 %2306
    %v2309 = vlaneseq
    %v2310 = vshrl.u32 %v2309, 7
    %v2311 = vsub.s32 0, %v2310
    %v2312 = vrot.slane %v2294, %v2311
    %v2313 = vmul.f32 %v2302, %v2312
    %v2314 = vmul.f32 %v2307, %v2312
    %2315 = vset.pattern.permute.xlu0 1
    %2316 = vperm.xlu0 %2315, %v2292
    %v2317 = vpop.permute.xlu0 %2316
    %2319 = vset.pattern.permute.xlu0 1
    %2320 = vperm.xlu0 %2319, %v2293
    %v2321 = vpop.permute.xlu0 %2320
    %v2323 = vlaneseq
    %v2324 = vshrl.u32 %v2323, 7
    %v2325 = vsub.s32 1, %v2324
    %v2326 = vrot.slane %v2294, %v2325
    %v2327 = vmul.f32 %v2317, %v2326
    %v2328 = vmul.f32 %v2321, %v2326
    %v2329 = vadd.f32 %v2313, %v2327
    %v2330 = vadd.f32 %v2314, %v2328
    %2331 = vset.pattern.permute.xlu0 2
    %2332 = vperm.xlu0 %2331, %v2292
    %v2333 = vpop.permute.xlu0 %2332
    %2335 = vset.pattern.permute.xlu0 2
    %2336 = vperm.xlu0 %2335, %v2293
    %v2337 = vpop.permute.xlu0 %2336
    %v2339 = vlaneseq
    %v2340 = vshrl.u32 %v2339, 7
    %v2341 = vsub.s32 2, %v2340
    %v2342 = vrot.slane %v2294, %v2341
    %v2343 = vmul.f32 %v2333, %v2342
    %v2344 = vmul.f32 %v2337, %v2342
    %v2345 = vadd.f32 %v2329, %v2343
    %v2346 = vadd.f32 %v2330, %v2344
    %2347 = vset.pattern.permute.xlu0 3
    %2348 = vperm.xlu0 %2347, %v2292
    %v2349 = vpop.permute.xlu0 %2348
    %2351 = vset.pattern.permute.xlu0 3
    %2352 = vperm.xlu0 %2351, %v2293
    %v2353 = vpop.permute.xlu0 %2352
    %v2355 = vlaneseq
    %v2356 = vshrl.u32 %v2355, 7
    %v2357 = vsub.s32 3, %v2356
    %v2358 = vrot.slane %v2294, %v2357
    %v2359 = vmul.f32 %v2349, %v2358
    %v2360 = vmul.f32 %v2353, %v2358
    %v2361 = vadd.f32 %v2345, %v2359
    %v2362 = vadd.f32 %v2346, %v2360
    %2363 = vset.pattern.permute.xlu0 4
    %2364 = vperm.xlu0 %2363, %v2292
    %v2365 = vpop.permute.xlu0 %2364
    %2367 = vset.pattern.permute.xlu0 4
    %2368 = vperm.xlu0 %2367, %v2293
    %v2369 = vpop.permute.xlu0 %2368
    %v2371 = vlaneseq
    %v2372 = vshrl.u32 %v2371, 7
    %v2373 = vsub.s32 4, %v2372
    %v2374 = vrot.slane %v2294, %v2373
    %v2375 = vmul.f32 %v2365, %v2374
    %v2376 = vmul.f32 %v2369, %v2374
    %v2377 = vadd.f32 %v2361, %v2375
    %v2378 = vadd.f32 %v2362, %v2376
    %2379 = vset.pattern.permute.xlu0 5
    %2380 = vperm.xlu0 %2379, %v2292
    %v2381 = vpop.permute.xlu0 %2380
    %2383 = vset.pattern.permute.xlu0 5
    %2384 = vperm.xlu0 %2383, %v2293
    %v2385 = vpop.permute.xlu0 %2384
    %v2387 = vlaneseq
    %v2388 = vshrl.u32 %v2387, 7
    %v2389 = vsub.s32 5, %v2388
    %v2390 = vrot.slane %v2294, %v2389
    %v2391 = vmul.f32 %v2381, %v2390
    %v2392 = vmul.f32 %v2385, %v2390
    %v2393 = vadd.f32 %v2377, %v2391
    %v2394 = vadd.f32 %v2378, %v2392
    %v2395 = vlaneseq
    %v2396 = vshrl.u32 %v2395, 7
    %v2397 = vsub.s32 0, %v2396
    %v2398 = vrot.slane %v2298, %v2397
    %v2399 = vadd.f32 %v2393, %v2398
    %v2400 = vadd.f32 %v2394, %v2398
    %v2403 = vcombine.high %v2399, %v2399
    %v2405 = vunpack.c.l.s4 1966171168
    %v2406 = vunpack.c.0.s8 %v2405
    %v2407 = vlaneseq
    %v2408 = vshrl.u32 %v2407, 7
    %v2409 = vsub.s32 %v2406, %v2408
    %v2410 = vrot.slane %v2399, %v2409
    %v2412 = vunpack.c.l.s4 1966171168
    %v2413 = vunpack.c.0.s8 %v2412
    %v2414 = vlaneseq
    %v2415 = vshrl.u32 %v2414, 7
    %v2416 = vsub.s32 %v2413, %v2415
    %v2417 = vrot.slane %v2403, %v2416
    %v2418 = vcombine.high %v2410, %v2410
    %v2419 = vcombine.high %v2417, %v2417
    %v2421 = vunpack.c.l.s4 1966171168
    %v2422 = vunpack.c.0.s8 %v2421
    %v2423 = vlaneseq
    %v2424 = vshrl.u32 %v2423, 7
    %v2425 = vsub.s32 %v2422, %v2424
    %v2426 = vrot.slane %v2410, %v2425
    %v2428 = vunpack.c.l.s4 1966171168
    %v2429 = vunpack.c.0.s8 %v2428
    %v2430 = vlaneseq
    %v2431 = vshrl.u32 %v2430, 7
    %v2432 = vsub.s32 %v2429, %v2431
    %v2433 = vrot.slane %v2417, %v2432
    %v2435 = vunpack.c.l.s4 1966171168
    %v2436 = vunpack.c.0.s8 %v2435
    %v2437 = vlaneseq
    %v2438 = vshrl.u32 %v2437, 7
    %v2439 = vsub.s32 %v2436, %v2438
    %v2440 = vrot.slane %v2418, %v2439
    %v2442 = vunpack.c.l.s4 1966171168
    %v2443 = vunpack.c.0.s8 %v2442
    %v2444 = vlaneseq
    %v2445 = vshrl.u32 %v2444, 7
    %v2446 = vsub.s32 %v2443, %v2445
    %v2447 = vrot.slane %v2419, %v2446
    %v2448 = vcombine.high %v2426, %v2426
    %v2449 = vcombine.high %v2433, %v2433
    %v2450 = vcombine.high %v2440, %v2440
    %v2451 = vcombine.high %v2447, %v2447
    %v2452 = vcombine.high %v2400, %v2400
    %v2454 = vunpack.c.l.s4 1966171168
    %v2455 = vunpack.c.0.s8 %v2454
    %v2456 = vlaneseq
    %v2457 = vshrl.u32 %v2456, 7
    %v2458 = vsub.s32 %v2455, %v2457
    %v2459 = vrot.slane %v2400, %v2458
    %v2461 = vunpack.c.l.s4 1966171168
    %v2462 = vunpack.c.0.s8 %v2461
    %v2463 = vlaneseq
    %v2464 = vshrl.u32 %v2463, 7
    %v2465 = vsub.s32 %v2462, %v2464
    %v2466 = vrot.slane %v2452, %v2465
    %v2467 = vcombine.high %v2459, %v2459
    %v2468 = vcombine.high %v2466, %v2466
    %v2470 = vunpack.c.l.s4 1966171168
    %v2471 = vunpack.c.0.s8 %v2470
    %v2472 = vlaneseq
    %v2473 = vshrl.u32 %v2472, 7
    %v2474 = vsub.s32 %v2471, %v2473
    %v2475 = vrot.slane %v2459, %v2474
    %v2477 = vunpack.c.l.s4 1966171168
    %v2478 = vunpack.c.0.s8 %v2477
    %v2479 = vlaneseq
    %v2480 = vshrl.u32 %v2479, 7
    %v2481 = vsub.s32 %v2478, %v2480
    %v2482 = vrot.slane %v2466, %v2481
    %v2484 = vunpack.c.l.s4 1966171168
    %v2485 = vunpack.c.0.s8 %v2484
    %v2486 = vlaneseq
    %v2487 = vshrl.u32 %v2486, 7
    %v2488 = vsub.s32 %v2485, %v2487
    %v2489 = vrot.slane %v2467, %v2488
    %v2491 = vunpack.c.l.s4 1966171168
    %v2492 = vunpack.c.0.s8 %v2491
    %v2493 = vlaneseq
    %v2494 = vshrl.u32 %v2493, 7
    %v2495 = vsub.s32 %v2492, %v2494
    %v2496 = vrot.slane %v2468, %v2495
    %v2497 = vcombine.high %v2475, %v2475
    %v2498 = vcombine.high %v2482, %v2482
    %v2499 = vcombine.high %v2489, %v2489
    %v2500 = vcombine.high %v2496, %v2496
    %v2501 = vlaneseq
    %v2502 = vshrl.u32 %v2501, 7
    %v2503 = vsub.s32 0, %v2502
    %v2504 = vrot.slane %v2426, %v2503
    %v2505 = vlaneseq
    %v2506 = vshrl.u32 %v2505, 7
    %v2507 = vsub.s32 0, %v2506
    %v2508 = vrot.slane %v2440, %v2507
    %v2509 = vlaneseq
    %v2510 = vshrl.u32 %v2509, 7
    %v2511 = vsub.s32 0, %v2510
    %v2512 = vrot.slane %v2448, %v2511
    %v2513 = vlaneseq
    %v2514 = vshrl.u32 %v2513, 7
    %v2515 = vsub.s32 0, %v2514
    %v2516 = vrot.slane %v2450, %v2515
    %v2517 = vlaneseq
    %v2518 = vshrl.u32 %v2517, 7
    %v2519 = vsub.s32 0, %v2518
    %v2520 = vrot.slane %v2433, %v2519
    %v2521 = vlaneseq
    %v2522 = vshrl.u32 %v2521, 7
    %v2523 = vsub.s32 0, %v2522
    %v2524 = vrot.slane %v2447, %v2523
    %v2525 = vlaneseq
    %v2526 = vshrl.u32 %v2525, 7
    %v2527 = vsub.s32 0, %v2526
    %v2528 = vrot.slane %v2449, %v2527
    %v2529 = vlaneseq
    %v2530 = vshrl.u32 %v2529, 7
    %v2531 = vsub.s32 0, %v2530
    %v2532 = vrot.slane %v2451, %v2531
    %v2533 = vlaneseq
    %v2534 = vshrl.u32 %v2533, 7
    %v2535 = vsub.s32 0, %v2534
    %v2536 = vrot.slane %v2475, %v2535
    %v2537 = vlaneseq
    %v2538 = vshrl.u32 %v2537, 7
    %v2539 = vsub.s32 0, %v2538
    %v2540 = vrot.slane %v2489, %v2539
    %v2541 = vlaneseq
    %v2542 = vshrl.u32 %v2541, 7
    %v2543 = vsub.s32 0, %v2542
    %v2544 = vrot.slane %v2497, %v2543
    %v2545 = vlaneseq
    %v2546 = vshrl.u32 %v2545, 7
    %v2547 = vsub.s32 0, %v2546
    %v2548 = vrot.slane %v2499, %v2547
    %v2549 = vlaneseq
    %v2550 = vshrl.u32 %v2549, 7
    %v2551 = vsub.s32 0, %v2550
    %v2552 = vrot.slane %v2482, %v2551
    %v2553 = vlaneseq
    %v2554 = vshrl.u32 %v2553, 7
    %v2555 = vsub.s32 0, %v2554
    %v2556 = vrot.slane %v2496, %v2555
    %v2557 = vlaneseq
    %v2558 = vshrl.u32 %v2557, 7
    %v2559 = vsub.s32 0, %v2558
    %v2560 = vrot.slane %v2498, %v2559
    %v2561 = vlaneseq
    %v2562 = vshrl.u32 %v2561, 7
    %v2563 = vsub.s32 0, %v2562
    %v2564 = vrot.slane %v2500, %v2563
    %2581 = vrot.lane.b32.xlu0 %v2399, 6
    %v2582 = vpop.permute.xlu0 %2581
    %2583 = vrot.lane.b32.xlu0 %v2400, 6
    %v2584 = vpop.permute.xlu0 %2583
    %v2587 = vmul.f32 %v2504, %v2582
    %v2588 = vmul.f32 %v2504, %v2584
    %v2589 = vmul.f32 %v2508, %v2582
    %v2590 = vmul.f32 %v2508, %v2584
    %v2591 = vmul.f32 %v2512, %v2582
    %v2592 = vmul.f32 %v2512, %v2584
    %v2593 = vmul.f32 %v2516, %v2582
    %v2594 = vmul.f32 %v2516, %v2584
    %v2595 = vmul.f32 %v2520, %v2582
    %v2596 = vmul.f32 %v2520, %v2584
    %v2597 = vmul.f32 %v2524, %v2582
    %v2598 = vmul.f32 %v2524, %v2584
    %v2599 = vmul.f32 %v2528, %v2582
    %v2600 = vmul.f32 %v2528, %v2584
    %v2601 = vmul.f32 %v2532, %v2582
    %v2602 = vmul.f32 %v2532, %v2584
    %v2603 = vmul.f32 %v2536, %v2582
    %v2604 = vmul.f32 %v2536, %v2584
    %v2605 = vmul.f32 %v2540, %v2582
    %v2606 = vmul.f32 %v2540, %v2584
    %v2607 = vmul.f32 %v2544, %v2582
    %v2608 = vmul.f32 %v2544, %v2584
    %v2609 = vmul.f32 %v2548, %v2582
    %v2610 = vmul.f32 %v2548, %v2584
    %v2611 = vmul.f32 %v2552, %v2582
    %v2612 = vmul.f32 %v2552, %v2584
    %v2613 = vmul.f32 %v2556, %v2582
    %v2614 = vmul.f32 %v2556, %v2584
    %v2615 = vmul.f32 %v2560, %v2582
    %v2616 = vmul.f32 %v2560, %v2584
    %v2617 = vmul.f32 %v2564, %v2582
    %v2618 = vmul.f32 %v2564, %v2584
    %v2619 = vadd.f32 %v2587, %v126
    %v2620 = vadd.f32 %v2588, %v127
    %v2621 = vadd.f32 %v2589, %v128
    %v2622 = vadd.f32 %v2590, %v129
    %v2623 = vadd.f32 %v2591, %v130
    %v2624 = vadd.f32 %v2592, %v131
    %v2625 = vadd.f32 %v2593, %v132
    %v2626 = vadd.f32 %v2594, %v133
    %v2627 = vadd.f32 %v2595, %v134
    %v2628 = vadd.f32 %v2596, %v135
    %v2629 = vadd.f32 %v2597, %v136
    %v2630 = vadd.f32 %v2598, %v137
    %v2631 = vadd.f32 %v2599, %v138
    %v2632 = vadd.f32 %v2600, %v139
    %v2633 = vadd.f32 %v2601, %v140
    %v2634 = vadd.f32 %v2602, %v141
    %v2635 = vadd.f32 %v2603, %v142
    %v2636 = vadd.f32 %v2604, %v143
    %v2637 = vadd.f32 %v2605, %v144
    %v2638 = vadd.f32 %v2606, %v145
    %v2639 = vadd.f32 %v2607, %v146
    %v2640 = vadd.f32 %v2608, %v147
    %v2641 = vadd.f32 %v2609, %v148
    %v2642 = vadd.f32 %v2610, %v149
    %v2643 = vadd.f32 %v2611, %v150
    %v2644 = vadd.f32 %v2612, %v151
    %v2645 = vadd.f32 %v2613, %v152
    %v2646 = vadd.f32 %v2614, %v153
    %v2647 = vadd.f32 %v2615, %v154
    %v2648 = vadd.f32 %v2616, %v155
    %v2649 = vadd.f32 %v2617, %v156
    %v2650 = vadd.f32 %v2618, %v157
    %v2651 = vsel %vm515, %v2619, -inf
    %v2652 = vsel %vm515, %v2621, -inf
    %v2653 = vsel %vm515, %v2623, -inf
    %v2654 = vmax.f32 %v2651, %v2653
    %v2655 = vsel %vm515, %v2625, -inf
    %v2656 = vmax.f32 %v2652, %v2655
    %v2657 = vsel %vm515, %v2627, -inf
    %v2658 = vmax.f32 %v2654, %v2657
    %v2659 = vsel %vm515, %v2629, -inf
    %v2660 = vmax.f32 %v2656, %v2659
    %v2661 = vsel %vm515, %v2631, -inf
    %v2662 = vmax.f32 %v2658, %v2661
    %v2663 = vsel %vm515, %v2633, -inf
    %v2664 = vmax.f32 %v2660, %v2663
    %v2665 = vsel %vm515, %v2635, -inf
    %v2666 = vmax.f32 %v2662, %v2665
    %v2667 = vsel %vm515, %v2637, -inf
    %v2668 = vmax.f32 %v2664, %v2667
    %v2669 = vsel %vm515, %v2639, -inf
    %v2670 = vmax.f32 %v2666, %v2669
    %v2671 = vsel %vm515, %v2641, -inf
    %v2672 = vmax.f32 %v2668, %v2671
    %v2673 = vsel %vm515, %v2643, -inf
    %v2674 = vmax.f32 %v2670, %v2673
    %v2675 = vsel %vm515, %v2645, -inf
    %v2676 = vmax.f32 %v2672, %v2675
    %v2677 = vsel %vm515, %v2647, -inf
    %v2678 = vmax.f32 %v2674, %v2677
    %v2679 = vsel %vm515, %v2649, -inf
    %v2680 = vmax.f32 %v2676, %v2679
    %v2681 = vmax.f32 %v2678, %v2680
    %v2682 = vsel %vm515, %v2620, -inf
    %v2683 = vsel %vm515, %v2622, -inf
    %v2684 = vsel %vm515, %v2624, -inf
    %v2685 = vmax.f32 %v2682, %v2684
    %v2686 = vsel %vm515, %v2626, -inf
    %v2687 = vmax.f32 %v2683, %v2686
    %v2688 = vsel %vm515, %v2628, -inf
    %v2689 = vmax.f32 %v2685, %v2688
    %v2690 = vsel %vm515, %v2630, -inf
    %v2691 = vmax.f32 %v2687, %v2690
    %v2692 = vsel %vm515, %v2632, -inf
    %v2693 = vmax.f32 %v2689, %v2692
    %v2694 = vsel %vm515, %v2634, -inf
    %v2695 = vmax.f32 %v2691, %v2694
    %v2696 = vsel %vm515, %v2636, -inf
    %v2697 = vmax.f32 %v2693, %v2696
    %v2698 = vsel %vm515, %v2638, -inf
    %v2699 = vmax.f32 %v2695, %v2698
    %v2700 = vsel %vm515, %v2640, -inf
    %v2701 = vmax.f32 %v2697, %v2700
    %v2702 = vsel %vm515, %v2642, -inf
    %v2703 = vmax.f32 %v2699, %v2702
    %v2704 = vsel %vm515, %v2644, -inf
    %v2705 = vmax.f32 %v2701, %v2704
    %v2706 = vsel %vm515, %v2646, -inf
    %v2707 = vmax.f32 %v2703, %v2706
    %v2708 = vsel %vm515, %v2648, -inf
    %v2709 = vmax.f32 %v2705, %v2708
    %v2710 = vsel %vm515, %v2650, -inf
    %v2711 = vmax.f32 %v2707, %v2710
    %v2712 = vmax.f32 %v2709, %v2711
    %v2713 = vsub.f32 %v2619, %v2681
    %v2714 = vsub.f32 %v2620, %v2712
    %v2715 = vsub.f32 %v2621, %v2681
    %v2716 = vsub.f32 %v2622, %v2712
    %v2717 = vsub.f32 %v2623, %v2681
    %v2718 = vsub.f32 %v2624, %v2712
    %v2719 = vsub.f32 %v2625, %v2681
    %v2720 = vsub.f32 %v2626, %v2712
    %v2721 = vsub.f32 %v2627, %v2681
    %v2722 = vsub.f32 %v2628, %v2712
    %v2723 = vsub.f32 %v2629, %v2681
    %v2724 = vsub.f32 %v2630, %v2712
    %v2725 = vsub.f32 %v2631, %v2681
    %v2726 = vsub.f32 %v2632, %v2712
    %v2727 = vsub.f32 %v2633, %v2681
    %v2728 = vsub.f32 %v2634, %v2712
    %v2729 = vsub.f32 %v2635, %v2681
    %v2730 = vsub.f32 %v2636, %v2712
    %v2731 = vsub.f32 %v2637, %v2681
    %v2732 = vsub.f32 %v2638, %v2712
    %v2733 = vsub.f32 %v2639, %v2681
    %v2734 = vsub.f32 %v2640, %v2712
    %v2735 = vsub.f32 %v2641, %v2681
    %v2736 = vsub.f32 %v2642, %v2712
    %v2737 = vsub.f32 %v2643, %v2681
    %v2738 = vsub.f32 %v2644, %v2712
    %v2739 = vsub.f32 %v2645, %v2681
    %v2740 = vsub.f32 %v2646, %v2712
    %v2741 = vsub.f32 %v2647, %v2681
    %v2742 = vsub.f32 %v2648, %v2712
    %v2743 = vsub.f32 %v2649, %v2681
    %v2744 = vsub.f32 %v2650, %v2712
    %v2745 = vmul.f32 %v2713, 1.442695
    %v2746 = vpow.pop %v2745
    %v2747 = vmul.f32 %v2714, 1.442695
    %v2748 = vpow.pop %v2747
    %v2749 = vmul.f32 %v2715, 1.442695
    %v2750 = vpow.pop %v2749
    %v2751 = vmul.f32 %v2716, 1.442695
    %v2752 = vpow.pop %v2751
    %v2753 = vmul.f32 %v2717, 1.442695
    %v2754 = vpow.pop %v2753
    %v2755 = vmul.f32 %v2718, 1.442695
    %v2756 = vpow.pop %v2755
    %v2757 = vmul.f32 %v2719, 1.442695
    %v2758 = vpow.pop %v2757
    %v2759 = vmul.f32 %v2720, 1.442695
    %v2760 = vpow.pop %v2759
    %v2761 = vmul.f32 %v2721, 1.442695
    %v2762 = vpow.pop %v2761
    %v2763 = vmul.f32 %v2722, 1.442695
    %v2764 = vpow.pop %v2763
    %v2765 = vmul.f32 %v2723, 1.442695
    %v2766 = vpow.pop %v2765
    %v2767 = vmul.f32 %v2724, 1.442695
    %v2768 = vpow.pop %v2767
    %v2769 = vmul.f32 %v2725, 1.442695
    %v2770 = vpow.pop %v2769
    %v2771 = vmul.f32 %v2726, 1.442695
    %v2772 = vpow.pop %v2771
    %v2773 = vmul.f32 %v2727, 1.442695
    %v2774 = vpow.pop %v2773
    %v2775 = vmul.f32 %v2728, 1.442695
    %v2776 = vpow.pop %v2775
    %v2777 = vmul.f32 %v2729, 1.442695
    %v2778 = vpow.pop %v2777
    %v2779 = vmul.f32 %v2730, 1.442695
    %v2780 = vpow.pop %v2779
    %v2781 = vmul.f32 %v2731, 1.442695
    %v2782 = vpow.pop %v2781
    %v2783 = vmul.f32 %v2732, 1.442695
    %v2784 = vpow.pop %v2783
    %v2785 = vmul.f32 %v2733, 1.442695
    %v2786 = vpow.pop %v2785
    %v2787 = vmul.f32 %v2734, 1.442695
    %v2788 = vpow.pop %v2787
    %v2789 = vmul.f32 %v2735, 1.442695
    %v2790 = vpow.pop %v2789
    %v2791 = vmul.f32 %v2736, 1.442695
    %v2792 = vpow.pop %v2791
    %v2793 = vmul.f32 %v2737, 1.442695
    %v2794 = vpow.pop %v2793
    %v2795 = vmul.f32 %v2738, 1.442695
    %v2796 = vpow.pop %v2795
    %v2797 = vmul.f32 %v2739, 1.442695
    %v2798 = vpow.pop %v2797
    %v2799 = vmul.f32 %v2740, 1.442695
    %v2800 = vpow.pop %v2799
    %v2801 = vmul.f32 %v2741, 1.442695
    %v2802 = vpow.pop %v2801
    %v2803 = vmul.f32 %v2742, 1.442695
    %v2804 = vpow.pop %v2803
    %v2805 = vmul.f32 %v2743, 1.442695
    %v2806 = vpow.pop %v2805
    %v2807 = vmul.f32 %v2744, 1.442695
    %v2808 = vpow.pop %v2807
    %v2809 = vsel %vm515, %v2746, 0.0
    %v2810 = vsel %vm515, %v2750, 0.0
    %v2811 = vadd.f32 %v2809, %v2810
    %v2812 = vsel %vm515, %v2754, 0.0
    %v2813 = vadd.f32 %v2811, %v2812
    %v2814 = vsel %vm515, %v2758, 0.0
    %v2815 = vadd.f32 %v2813, %v2814
    %v2816 = vsel %vm515, %v2762, 0.0
    %v2817 = vadd.f32 %v2815, %v2816
    %v2818 = vsel %vm515, %v2766, 0.0
    %v2819 = vadd.f32 %v2817, %v2818
    %v2820 = vsel %vm515, %v2770, 0.0
    %v2821 = vadd.f32 %v2819, %v2820
    %v2822 = vsel %vm515, %v2774, 0.0
    %v2823 = vadd.f32 %v2821, %v2822
    %v2824 = vsel %vm515, %v2778, 0.0
    %v2825 = vadd.f32 %v2823, %v2824
    %v2826 = vsel %vm515, %v2782, 0.0
    %v2827 = vadd.f32 %v2825, %v2826
    %v2828 = vsel %vm515, %v2786, 0.0
    %v2829 = vadd.f32 %v2827, %v2828
    %v2830 = vsel %vm515, %v2790, 0.0
    %v2831 = vadd.f32 %v2829, %v2830
    %v2832 = vsel %vm515, %v2794, 0.0
    %v2833 = vadd.f32 %v2831, %v2832
    %v2834 = vsel %vm515, %v2798, 0.0
    %v2835 = vadd.f32 %v2833, %v2834
    %v2836 = vsel %vm515, %v2802, 0.0
    %v2837 = vadd.f32 %v2835, %v2836
    %v2838 = vsel %vm515, %v2806, 0.0
    %v2839 = vadd.f32 %v2837, %v2838
    %v2840 = vsel %vm515, %v2748, 0.0
    %v2841 = vsel %vm515, %v2752, 0.0
    %v2842 = vadd.f32 %v2840, %v2841
    %v2843 = vsel %vm515, %v2756, 0.0
    %v2844 = vadd.f32 %v2842, %v2843
    %v2845 = vsel %vm515, %v2760, 0.0
    %v2846 = vadd.f32 %v2844, %v2845
    %v2847 = vsel %vm515, %v2764, 0.0
    %v2848 = vadd.f32 %v2846, %v2847
    %v2849 = vsel %vm515, %v2768, 0.0
    %v2850 = vadd.f32 %v2848, %v2849
    %v2851 = vsel %vm515, %v2772, 0.0
    %v2852 = vadd.f32 %v2850, %v2851
    %v2853 = vsel %vm515, %v2776, 0.0
    %v2854 = vadd.f32 %v2852, %v2853
    %v2855 = vsel %vm515, %v2780, 0.0
    %v2856 = vadd.f32 %v2854, %v2855
    %v2857 = vsel %vm515, %v2784, 0.0
    %v2858 = vadd.f32 %v2856, %v2857
    %v2859 = vsel %vm515, %v2788, 0.0
    %v2860 = vadd.f32 %v2858, %v2859
    %v2861 = vsel %vm515, %v2792, 0.0
    %v2862 = vadd.f32 %v2860, %v2861
    %v2863 = vsel %vm515, %v2796, 0.0
    %v2864 = vadd.f32 %v2862, %v2863
    %v2865 = vsel %vm515, %v2800, 0.0
    %v2866 = vadd.f32 %v2864, %v2865
    %v2867 = vsel %vm515, %v2804, 0.0
    %v2868 = vadd.f32 %v2866, %v2867
    %v2869 = vsel %vm515, %v2808, 0.0
    %v2870 = vadd.f32 %v2868, %v2869
    %2871 = vrot.lane.b32.xlu0 %v2504, 122
    %v2872 = vpop.permute.xlu0 %2871
    %2873 = vrot.lane.b32.xlu0 %v2508, 122
    %v2874 = vpop.permute.xlu0 %2873
    %2875 = vrot.lane.b32.xlu0 %v2512, 122
    %v2876 = vpop.permute.xlu0 %2875
    %2877 = vrot.lane.b32.xlu0 %v2516, 122
    %v2878 = vpop.permute.xlu0 %2877
    %2879 = vrot.lane.b32.xlu0 %v2520, 122
    %v2880 = vpop.permute.xlu0 %2879
    %2881 = vrot.lane.b32.xlu0 %v2524, 122
    %v2882 = vpop.permute.xlu0 %2881
    %2883 = vrot.lane.b32.xlu0 %v2528, 122
    %v2884 = vpop.permute.xlu0 %2883
    %2885 = vrot.lane.b32.xlu0 %v2532, 122
    %v2886 = vpop.permute.xlu0 %2885
    %2887 = vrot.lane.b32.xlu0 %v2536, 122
    %v2888 = vpop.permute.xlu0 %2887
    %2889 = vrot.lane.b32.xlu0 %v2540, 122
    %v2890 = vpop.permute.xlu0 %2889
    %2891 = vrot.lane.b32.xlu0 %v2544, 122
    %v2892 = vpop.permute.xlu0 %2891
    %2893 = vrot.lane.b32.xlu0 %v2548, 122
    %v2894 = vpop.permute.xlu0 %2893
    %2895 = vrot.lane.b32.xlu0 %v2552, 122
    %v2896 = vpop.permute.xlu0 %2895
    %2897 = vrot.lane.b32.xlu0 %v2556, 122
    %v2898 = vpop.permute.xlu0 %2897
    %2899 = vrot.lane.b32.xlu0 %v2560, 122
    %v2900 = vpop.permute.xlu0 %2899
    %2901 = vrot.lane.b32.xlu0 %v2564, 122
    %v2902 = vpop.permute.xlu0 %2901
    %v2919 = vmul.f32 %v2746, %v2872
    %v2920 = vmul.f32 %v2748, %v2872
    %v2921 = vmul.f32 %v2750, %v2874
    %v2922 = vmul.f32 %v2752, %v2874
    %v2923 = vmul.f32 %v2754, %v2876
    %v2924 = vmul.f32 %v2756, %v2876
    %v2925 = vmul.f32 %v2758, %v2878
    %v2926 = vmul.f32 %v2760, %v2878
    %v2927 = vmul.f32 %v2762, %v2880
    %v2928 = vmul.f32 %v2764, %v2880
    %v2929 = vmul.f32 %v2766, %v2882
    %v2930 = vmul.f32 %v2768, %v2882
    %v2931 = vmul.f32 %v2770, %v2884
    %v2932 = vmul.f32 %v2772, %v2884
    %v2933 = vmul.f32 %v2774, %v2886
    %v2934 = vmul.f32 %v2776, %v2886
    %v2935 = vmul.f32 %v2778, %v2888
    %v2936 = vmul.f32 %v2780, %v2888
    %v2937 = vmul.f32 %v2782, %v2890
    %v2938 = vmul.f32 %v2784, %v2890
    %v2939 = vmul.f32 %v2786, %v2892
    %v2940 = vmul.f32 %v2788, %v2892
    %v2941 = vmul.f32 %v2790, %v2894
    %v2942 = vmul.f32 %v2792, %v2894
    %v2943 = vmul.f32 %v2794, %v2896
    %v2944 = vmul.f32 %v2796, %v2896
    %v2945 = vmul.f32 %v2798, %v2898
    %v2946 = vmul.f32 %v2800, %v2898
    %v2947 = vmul.f32 %v2802, %v2900
    %v2948 = vmul.f32 %v2804, %v2900
    %v2949 = vmul.f32 %v2806, %v2902
    %v2950 = vmul.f32 %v2808, %v2902
    %v2951 = vsel %vm515, %v2919, 0.0
    %v2952 = vsel %vm515, %v2921, 0.0
    %v2953 = vadd.f32 %v2951, %v2952
    %v2954 = vsel %vm515, %v2923, 0.0
    %v2955 = vadd.f32 %v2953, %v2954
    %v2956 = vsel %vm515, %v2925, 0.0
    %v2957 = vadd.f32 %v2955, %v2956
    %v2958 = vsel %vm515, %v2927, 0.0
    %v2959 = vadd.f32 %v2957, %v2958
    %v2960 = vsel %vm515, %v2929, 0.0
    %v2961 = vadd.f32 %v2959, %v2960
    %v2962 = vsel %vm515, %v2931, 0.0
    %v2963 = vadd.f32 %v2961, %v2962
    %v2964 = vsel %vm515, %v2933, 0.0
    %v2965 = vadd.f32 %v2963, %v2964
    %v2966 = vsel %vm515, %v2935, 0.0
    %v2967 = vadd.f32 %v2965, %v2966
    %v2968 = vsel %vm515, %v2937, 0.0
    %v2969 = vadd.f32 %v2967, %v2968
    %v2970 = vsel %vm515, %v2939, 0.0
    %v2971 = vadd.f32 %v2969, %v2970
    %v2972 = vsel %vm515, %v2941, 0.0
    %v2973 = vadd.f32 %v2971, %v2972
    %v2974 = vsel %vm515, %v2943, 0.0
    %v2975 = vadd.f32 %v2973, %v2974
    %v2976 = vsel %vm515, %v2945, 0.0
    %v2977 = vadd.f32 %v2975, %v2976
    %v2978 = vsel %vm515, %v2947, 0.0
    %v2979 = vadd.f32 %v2977, %v2978
    %v2980 = vsel %vm515, %v2949, 0.0
    %v2981 = vadd.f32 %v2979, %v2980
    %v2982 = vsel %vm515, %v2920, 0.0
    %v2983 = vsel %vm515, %v2922, 0.0
    %v2984 = vadd.f32 %v2982, %v2983
    %v2985 = vsel %vm515, %v2924, 0.0
    %v2986 = vadd.f32 %v2984, %v2985
    %v2987 = vsel %vm515, %v2926, 0.0
    %v2988 = vadd.f32 %v2986, %v2987
    %v2989 = vsel %vm515, %v2928, 0.0
    %v2990 = vadd.f32 %v2988, %v2989
    %v2991 = vsel %vm515, %v2930, 0.0
    %v2992 = vadd.f32 %v2990, %v2991
    %v2993 = vsel %vm515, %v2932, 0.0
    %v2994 = vadd.f32 %v2992, %v2993
    %v2995 = vsel %vm515, %v2934, 0.0
    %v2996 = vadd.f32 %v2994, %v2995
    %v2997 = vsel %vm515, %v2936, 0.0
    %v2998 = vadd.f32 %v2996, %v2997
    %v2999 = vsel %vm515, %v2938, 0.0
    %v3000 = vadd.f32 %v2998, %v2999
    %v3001 = vsel %vm515, %v2940, 0.0
    %v3002 = vadd.f32 %v3000, %v3001
    %v3003 = vsel %vm515, %v2942, 0.0
    %v3004 = vadd.f32 %v3002, %v3003
    %v3005 = vsel %vm515, %v2944, 0.0
    %v3006 = vadd.f32 %v3004, %v3005
    %v3007 = vsel %vm515, %v2946, 0.0
    %v3008 = vadd.f32 %v3006, %v3007
    %v3009 = vsel %vm515, %v2948, 0.0
    %v3010 = vadd.f32 %v3008, %v3009
    %v3011 = vsel %vm515, %v2950, 0.0
    %v3012 = vadd.f32 %v3010, %v3011
    %v3013 = vrcp.pop %v2839
    %v3014 = vrcp.pop %v2870
    %v3015 = vmul.f32 %v2981, %v3013
    %v3016 = vmul.f32 %v3012, %v3014
    %3018 = vset.pattern.permute.xlu0 6
    %3019 = vperm.xlu0 %3018, %v3015
    %v3020 = vpop.permute.xlu0 %3019
    %3023 = vset.pattern.permute.xlu0 6
    %3024 = vperm.xlu0 %3023, %v3016
    %v3025 = vpop.permute.xlu0 %3024
    %v3027 = vmul.f32 %v3020, %v2312
    %v3028 = vmul.f32 %v3025, %v2312
    %3029 = vset.pattern.permute.xlu0 7
    %3030 = vperm.xlu0 %3029, %v3015
    %v3031 = vpop.permute.xlu0 %3030
    %3033 = vset.pattern.permute.xlu0 7
    %3034 = vperm.xlu0 %3033, %v3016
    %v3035 = vpop.permute.xlu0 %3034
    %v3037 = vmul.f32 %v3031, %v2326
    %v3038 = vmul.f32 %v3035, %v2326
    %v3039 = vadd.f32 %v3027, %v3037
    %v3040 = vadd.f32 %v3028, %v3038
    %3041 = vset.pattern.permute.xlu0 8
    %3042 = vperm.xlu0 %3041, %v3015
    %v3043 = vpop.permute.xlu0 %3042
    %3045 = vset.pattern.permute.xlu0 8
    %3046 = vperm.xlu0 %3045, %v3016
    %v3047 = vpop.permute.xlu0 %3046
    %v3049 = vmul.f32 %v3043, %v2342
    %v3050 = vmul.f32 %v3047, %v2342
    %v3051 = vadd.f32 %v3039, %v3049
    %v3052 = vadd.f32 %v3040, %v3050
    %3053 = vset.pattern.permute.xlu0 9
    %3054 = vperm.xlu0 %3053, %v3015
    %v3055 = vpop.permute.xlu0 %3054
    %3057 = vset.pattern.permute.xlu0 9
    %3058 = vperm.xlu0 %3057, %v3016
    %v3059 = vpop.permute.xlu0 %3058
    %v3061 = vmul.f32 %v3055, %v2358
    %v3062 = vmul.f32 %v3059, %v2358
    %v3063 = vadd.f32 %v3051, %v3061
    %v3064 = vadd.f32 %v3052, %v3062
    %3065 = vset.pattern.permute.xlu0 10
    %3066 = vperm.xlu0 %3065, %v3015
    %v3067 = vpop.permute.xlu0 %3066
    %3069 = vset.pattern.permute.xlu0 10
    %3070 = vperm.xlu0 %3069, %v3016
    %v3071 = vpop.permute.xlu0 %3070
    %v3073 = vmul.f32 %v3067, %v2374
    %v3074 = vmul.f32 %v3071, %v2374
    %v3075 = vadd.f32 %v3063, %v3073
    %v3076 = vadd.f32 %v3064, %v3074
    %3077 = vset.pattern.permute.xlu0 11
    %3078 = vperm.xlu0 %3077, %v3015
    %v3079 = vpop.permute.xlu0 %3078
    %3081 = vset.pattern.permute.xlu0 11
    %3082 = vperm.xlu0 %3081, %v3016
    %v3083 = vpop.permute.xlu0 %3082
    %v3085 = vmul.f32 %v3079, %v2390
    %v3086 = vmul.f32 %v3083, %v2390
    %v3087 = vadd.f32 %v3075, %v3085
    %v3088 = vadd.f32 %v3076, %v3086
    %v3089 = vadd.f32 %v3087, %v2398
    %v3090 = vadd.f32 %v3088, %v2398
    %3093 = vrot.lane.b32.xlu0 %v3089, 110
    %v3094 = vpop.permute.xlu0 %3093
    %3095 = vrot.lane.b32.xlu0 %v3090, 110
    %v3096 = vpop.permute.xlu0 %3095
    %v3099 = vadd.f32 %v2292, %v3094
    %v3100 = vadd.f32 %v2293, %v3096
    %v3101 = vsel %vm966, %v3099, 0.0
    %3102 = vadd.xlane.f32.xlu0 %v3101
    %v3103 = vpop.xlane.xlu0 %3102
    %v3104 = vsel %vm966, %v3100, 0.0
    %3105 = vadd.xlane.f32.xlu0 %v3104
    %v3106 = vpop.xlane.xlu0 %3105
    %v3107 = vmul.f32 %v3103, %v973
    %v3108 = vmul.f32 %v3106, %v973
    %v3109 = vmul.f32 %v3099, %v3099
    %v3110 = vmul.f32 %v3100, %v3100
    %v3111 = vsel %vm966, %v3109, 0.0
    %3112 = vadd.xlane.f32.xlu0 %v3111
    %v3113 = vpop.xlane.xlu0 %3112
    %v3114 = vsel %vm966, %v3110, 0.0
    %3115 = vadd.xlane.f32.xlu0 %v3114
    %v3116 = vpop.xlane.xlu0 %3115
    %v3117 = vmul.f32 %v3113, %v973
    %v3118 = vmul.f32 %v3116, %v973
    %v3119 = vmul.f32 %v3107, %v3107
    %v3120 = vmul.f32 %v3108, %v3108
    %v3121 = vsub.f32 %v3117, %v3119
    %v3122 = vsub.f32 %v3118, %v3120
    %v3123 = vsub.f32 %v3099, %v3107
    %v3124 = vsub.f32 %v3100, %v3108
    %v3125 = vadd.f32 %v3121, 1e-05
    %v3126 = vadd.f32 %v3122, 1e-05
    %v3127 = vrsqrt.pop %v3125
    %v3128 = vrsqrt.pop %v3126
    %v3129 = vmul.f32 %v3123, %v3127
    %v3130 = vmul.f32 %v3124, %v3128
    %3132 = vrot.lane.b32.xlu0 %v2398, 74
    %v3133 = vpop.permute.xlu0 %3132
    %v3135 = vmul.f32 %v3129, %v3133
    %v3136 = vmul.f32 %v3130, %v3133
    %3137 = vrot.lane.b32.xlu0 %v2398, 68
    %v3138 = vpop.permute.xlu0 %3137
    %v3140 = vadd.f32 %v3135, %v3138
    %v3141 = vadd.f32 %v3136, %v3138
    %3143 = vset.pattern.permute.xlu0 0
    %3144 = vperm.xlu0 %3143, %v3140
    %v3145 = vpop.permute.xlu0 %3144
    %3148 = vset.pattern.permute.xlu0 0
    %3149 = vperm.xlu0 %3148, %v3141
    %v3150 = vpop.permute.xlu0 %3149
    %v3152 = vmul.f32 %v3145, %v2312
    %v3153 = vmul.f32 %v3150, %v2312
    %3154 = vset.pattern.permute.xlu0 1
    %3155 = vperm.xlu0 %3154, %v3140
    %v3156 = vpop.permute.xlu0 %3155
    %3158 = vset.pattern.permute.xlu0 1
    %3159 = vperm.xlu0 %3158, %v3141
    %v3160 = vpop.permute.xlu0 %3159
    %v3162 = vmul.f32 %v3156, %v2326
    %v3163 = vmul.f32 %v3160, %v2326
    %v3164 = vadd.f32 %v3152, %v3162
    %v3165 = vadd.f32 %v3153, %v3163
    %3166 = vset.pattern.permute.xlu0 2
    %3167 = vperm.xlu0 %3166, %v3140
    %v3168 = vpop.permute.xlu0 %3167
    %3170 = vset.pattern.permute.xlu0 2
    %3171 = vperm.xlu0 %3170, %v3141
    %v3172 = vpop.permute.xlu0 %3171
    %v3174 = vmul.f32 %v3168, %v2342
    %v3175 = vmul.f32 %v3172, %v2342
    %v3176 = vadd.f32 %v3164, %v3174
    %v3177 = vadd.f32 %v3165, %v3175
    %3178 = vset.pattern.permute.xlu0 3
    %3179 = vperm.xlu0 %3178, %v3140
    %v3180 = vpop.permute.xlu0 %3179
    %3182 = vset.pattern.permute.xlu0 3
    %3183 = vperm.xlu0 %3182, %v3141
    %v3184 = vpop.permute.xlu0 %3183
    %v3186 = vmul.f32 %v3180, %v2358
    %v3187 = vmul.f32 %v3184, %v2358
    %v3188 = vadd.f32 %v3176, %v3186
    %v3189 = vadd.f32 %v3177, %v3187
    %3190 = vset.pattern.permute.xlu0 4
    %3191 = vperm.xlu0 %3190, %v3140
    %v3192 = vpop.permute.xlu0 %3191
    %3194 = vset.pattern.permute.xlu0 4
    %3195 = vperm.xlu0 %3194, %v3141
    %v3196 = vpop.permute.xlu0 %3195
    %v3198 = vmul.f32 %v3192, %v2374
    %v3199 = vmul.f32 %v3196, %v2374
    %v3200 = vadd.f32 %v3188, %v3198
    %v3201 = vadd.f32 %v3189, %v3199
    %3202 = vset.pattern.permute.xlu0 5
    %3203 = vperm.xlu0 %3202, %v3140
    %v3204 = vpop.permute.xlu0 %3203
    %3206 = vset.pattern.permute.xlu0 5
    %3207 = vperm.xlu0 %3206, %v3141
    %v3208 = vpop.permute.xlu0 %3207
    %v3210 = vmul.f32 %v3204, %v2390
    %v3211 = vmul.f32 %v3208, %v2390
    %v3212 = vadd.f32 %v3200, %v3210
    %v3213 = vadd.f32 %v3201, %v3211
    %v3214 = vadd.f32 %v3212, %v2398
    %v3215 = vadd.f32 %v3213, %v2398
    %v3216 = vmax.f32 %v3214, 0.0
    %v3217 = vmax.f32 %v3215, 0.0
    %3220 = vrot.lane.b32.xlu0 %v3216, 104
    %v3221 = vpop.permute.xlu0 %3220
    %3222 = vrot.lane.b32.xlu0 %v3217, 104
    %v3223 = vpop.permute.xlu0 %3222
    %3227 = vrot.lane.b32.xlu0 %v2295, 68
    %v3228 = vpop.permute.xlu0 %3227
    %3229 = vrot.lane.b32.xlu0 %v2296, 68
    %v3230 = vpop.permute.xlu0 %3229
    %3231 = vrot.lane.b32.xlu0 %v2297, 68
    %v3232 = vpop.permute.xlu0 %3231
    %3236 = vrot.lane.b32.xlu0 %v2398, 80
    %v3237 = vpop.permute.xlu0 %3236
    %v3239 = vsel %vm1106, %v3221, 0
    %v3241 = vsel %vm1106, %v3223, 0
    %3243 = vmatprep.subr.mxu0 0.0
    %3244 = vmatpush1.msra.mxu0 %v3228
    %3245 = vmatprep.subr.mxu0 0.0
    %3246 = vmatpush1.msra.mxu0 %v3230
    %3247 = vmatprep.subr.mxu0 0.0
    %3248 = vmatpush1.msra.mxu0 %v3232
    %3249 = vmatprep.subr.mxu0 0.0
    %3250 = vmatpush1.msra.mxu0 0.0
    %3251 = vmatprep.subr.mxu0 0.0
    %3252 = vmatpush1.msra.mxu0 0.0
    %3253 = vmatprep.subr.mxu0 0.0
    %3254 = vmatpush1.msra.mxu0 0.0
    %3255 = vmatprep.subr.mxu0 0.0
    %3256 = vmatpush1.msra.mxu0 0.0
    %3257 = vmatprep.subr.mxu0 0.0
    %3258 = vmatpush1.msra.mxu0 0.0
    %3259 = vmatprep.subr.mxu0 0.0
    %3260 = vmatpush1.msra.mxu0 0.0
    %3261 = vmatprep.subr.mxu0 0.0
    %3262 = vmatpush1.msra.mxu0 0.0
    %3263 = vmatprep.subr.mxu0 0.0
    %3264 = vmatpush1.msra.mxu0 0.0
    %3265 = vmatprep.subr.mxu0 0.0
    %3266 = vmatpush1.msra.mxu0 0.0
    %3267 = vmatprep.subr.mxu0 0.0
    %3268 = vmatpush1.msra.mxu0 0.0
    %3269 = vmatprep.subr.mxu0 0.0
    %3270 = vmatpush1.msra.mxu0 0.0
    %3271 = vmatprep.subr.mxu0 0.0
    %3272 = vmatpush1.msra.mxu0 0.0
    %3273 = vmatprep.subr.mxu0 0.0
    %3274 = vmatpush1.msra.mxu0 0.0
    %3275 = vmatprep.subr.mxu0 0.0
    %3276 = vmatpush1.msra.mxu0 0.0
    %3277 = vmatprep.subr.mxu0 0.0
    %3278 = vmatpush1.msra.mxu0 0.0
    %3279 = vmatprep.subr.mxu0 0.0
    %3280 = vmatpush1.msra.mxu0 0.0
    %3281 = vmatprep.subr.mxu0 0.0
    %3282 = vmatpush1.msra.mxu0 0.0
    %3283 = vmatprep.subr.mxu0 0.0
    %3284 = vmatpush1.msra.mxu0 0.0
    %3285 = vmatprep.subr.mxu0 0.0
    %3286 = vmatpush1.msra.mxu0 0.0
    %3287 = vmatprep.subr.mxu0 0.0
    %3288 = vmatpush1.msra.mxu0 0.0
    %3289 = vmatprep.subr.mxu0 0.0
    %3290 = vmatpush1.msra.mxu0 0.0
    %3291 = vmatprep.subr.mxu0 0.0
    %3292 = vmatpush1.msra.mxu0 0.0
    %3293 = vmatprep.subr.mxu0 0.0
    %3294 = vmatpush1.msra.mxu0 0.0
    %3295 = vmatprep.subr.mxu0 0.0
    %3296 = vmatpush1.msra.mxu0 0.0
    %3297 = vmatprep.subr.mxu0 0.0
    %3298 = vmatpush1.msra.mxu0 0.0
    %3299 = vmatprep.subr.mxu0 0.0
    %3300 = vmatpush1.msra.mxu0 0.0
    %3301 = vmatprep.subr.mxu0 0.0
    %3302 = vmatpush1.msra.mxu0 0.0
    %3303 = vmatprep.subr.mxu0 0.0
    %3304 = vmatpush1.msra.mxu0 0.0
    %3305 = vmatprep.subr.mxu0 0.0
    %3306 = vmatpush1.msra.mxu0 0.0
    %3307 = vmatprep.mubr.f32.mxu0 0.0
    %3308 = vmatmul.mubr.f32.gmra.mrb[0].mxu0 %v3239
    %v3309 = vpop.f32.mrb[0].mxu0
    %v3310 = vadd.f32 %v3237, %v3309
    %v3311 = vpop.f32.mrb[0].mxu0
    %3312 = vmatprep.mubr.f32.mxu0 0.0
    %3313 = vmatmul.mubr.f32.gmra.mrb[0].mxu0 %v3241
    %v3314 = vpop.f32.mrb[0].mxu0
    %v3315 = vadd.f32 %v3237, %v3314
    %v3316 = vpop.f32.mrb[0].mxu0
    %3317 = vdwg.mxu0
    %v3318 = vadd.f32 %v3140, %v3310
    %v3319 = vadd.f32 %v3141, %v3315
    %v3320 = vsel %vm966, %v3318, 0.0
    %3321 = vadd.xlane.f32.xlu0 %v3320
    %v3322 = vpop.xlane.xlu0 %3321
    %v3323 = vsel %vm966, %v3319, 0.0
    %3324 = vadd.xlane.f32.xlu0 %v3323
    %v3325 = vpop.xlane.xlu0 %3324
    %v3326 = vmul.f32 %v3322, %v973
    %v3327 = vmul.f32 %v3325, %v973
    %v3328 = vmul.f32 %v3318, %v3318
    %v3329 = vmul.f32 %v3319, %v3319
    %v3330 = vsel %vm966, %v3328, 0.0
    %3331 = vadd.xlane.f32.xlu0 %v3330
    %v3332 = vpop.xlane.xlu0 %3331
    %v3333 = vsel %vm966, %v3329, 0.0
    %3334 = vadd.xlane.f32.xlu0 %v3333
    %v3335 = vpop.xlane.xlu0 %3334
    %v3336 = vmul.f32 %v3332, %v973
    %v3337 = vmul.f32 %v3335, %v973
    %v3338 = vmul.f32 %v3326, %v3326
    %v3339 = vmul.f32 %v3327, %v3327
    %v3340 = vsub.f32 %v3336, %v3338
    %v3341 = vsub.f32 %v3337, %v3339
    %v3342 = vsub.f32 %v3318, %v3326
    %v3343 = vsub.f32 %v3319, %v3327
    %v3344 = vadd.f32 %v3340, 1e-05
    %v3345 = vadd.f32 %v3341, 1e-05
    %v3346 = vrsqrt.pop %v3344
    %v3347 = vrsqrt.pop %v3345
    %v3348 = vmul.f32 %v3342, %v3346
    %v3349 = vmul.f32 %v3343, %v3347
    %3350 = vrot.lane.b32.xlu0 %v2398, 62
    %v3351 = vpop.permute.xlu0 %3350
    %v3353 = vmul.f32 %v3348, %v3351
    %v3354 = vmul.f32 %v3349, %v3351
    %3355 = vrot.lane.b32.xlu0 %v2398, 56
    %v3356 = vpop.permute.xlu0 %3355
    %v3358 = vadd.f32 %v3353, %v3356
    %v3359 = vadd.f32 %v3354, %v3356
    %v3360 = vld [vmem:[#allocation2 + $0x18] sm:$0x3f]
    %v3361 = vld [vmem:[#allocation2] sm:$0xff]
    %v3362 = vld [vmem:[#allocation2 + $0x8] sm:$0xff]
    %v3363 = vld [vmem:[#allocation2 + $0x10] sm:$0xff]
    %v3364 = vld [vmem:[#allocation2 + $0x23] sm:$0x1]
    %3366 = vset.pattern.permute.xlu0 0
    %3367 = vperm.xlu0 %3366, %v3358
    %v3368 = vpop.permute.xlu0 %3367
    %3371 = vset.pattern.permute.xlu0 0
    %3372 = vperm.xlu0 %3371, %v3359
    %v3373 = vpop.permute.xlu0 %3372
    %v3375 = vlaneseq
    %v3376 = vshrl.u32 %v3375, 7
    %v3377 = vsub.s32 0, %v3376
    %v3378 = vrot.slane %v3360, %v3377
    %v3379 = vmul.f32 %v3368, %v3378
    %v3380 = vmul.f32 %v3373, %v3378
    %3381 = vset.pattern.permute.xlu0 1
    %3382 = vperm.xlu0 %3381, %v3358
    %v3383 = vpop.permute.xlu0 %3382
    %3385 = vset.pattern.permute.xlu0 1
    %3386 = vperm.xlu0 %3385, %v3359
    %v3387 = vpop.permute.xlu0 %3386
    %v3389 = vlaneseq
    %v3390 = vshrl.u32 %v3389, 7
    %v3391 = vsub.s32 1, %v3390
    %v3392 = vrot.slane %v3360, %v3391
    %v3393 = vmul.f32 %v3383, %v3392
    %v3394 = vmul.f32 %v3387, %v3392
    %v3395 = vadd.f32 %v3379, %v3393
    %v3396 = vadd.f32 %v3380, %v3394
    %3397 = vset.pattern.permute.xlu0 2
    %3398 = vperm.xlu0 %3397, %v3358
    %v3399 = vpop.permute.xlu0 %3398
    %3401 = vset.pattern.permute.xlu0 2
    %3402 = vperm.xlu0 %3401, %v3359
    %v3403 = vpop.permute.xlu0 %3402
    %v3405 = vlaneseq
    %v3406 = vshrl.u32 %v3405, 7
    %v3407 = vsub.s32 2, %v3406
    %v3408 = vrot.slane %v3360, %v3407
    %v3409 = vmul.f32 %v3399, %v3408
    %v3410 = vmul.f32 %v3403, %v3408
    %v3411 = vadd.f32 %v3395, %v3409
    %v3412 = vadd.f32 %v3396, %v3410
    %3413 = vset.pattern.permute.xlu0 3
    %3414 = vperm.xlu0 %3413, %v3358
    %v3415 = vpop.permute.xlu0 %3414
    %3417 = vset.pattern.permute.xlu0 3
    %3418 = vperm.xlu0 %3417, %v3359
    %v3419 = vpop.permute.xlu0 %3418
    %v3421 = vlaneseq
    %v3422 = vshrl.u32 %v3421, 7
    %v3423 = vsub.s32 3, %v3422
    %v3424 = vrot.slane %v3360, %v3423
    %v3425 = vmul.f32 %v3415, %v3424
    %v3426 = vmul.f32 %v3419, %v3424
    %v3427 = vadd.f32 %v3411, %v3425
    %v3428 = vadd.f32 %v3412, %v3426
    %3429 = vset.pattern.permute.xlu0 4
    %3430 = vperm.xlu0 %3429, %v3358
    %v3431 = vpop.permute.xlu0 %3430
    %3433 = vset.pattern.permute.xlu0 4
    %3434 = vperm.xlu0 %3433, %v3359
    %v3435 = vpop.permute.xlu0 %3434
    %v3437 = vlaneseq
    %v3438 = vshrl.u32 %v3437, 7
    %v3439 = vsub.s32 4, %v3438
    %v3440 = vrot.slane %v3360, %v3439
    %v3441 = vmul.f32 %v3431, %v3440
    %v3442 = vmul.f32 %v3435, %v3440
    %v3443 = vadd.f32 %v3427, %v3441
    %v3444 = vadd.f32 %v3428, %v3442
    %3445 = vset.pattern.permute.xlu0 5
    %3446 = vperm.xlu0 %3445, %v3358
    %v3447 = vpop.permute.xlu0 %3446
    %3449 = vset.pattern.permute.xlu0 5
    %3450 = vperm.xlu0 %3449, %v3359
    %v3451 = vpop.permute.xlu0 %3450
    %v3453 = vlaneseq
    %v3454 = vshrl.u32 %v3453, 7
    %v3455 = vsub.s32 5, %v3454
    %v3456 = vrot.slane %v3360, %v3455
    %v3457 = vmul.f32 %v3447, %v3456
    %v3458 = vmul.f32 %v3451, %v3456
    %v3459 = vadd.f32 %v3443, %v3457
    %v3460 = vadd.f32 %v3444, %v3458
    %v3461 = vlaneseq
    %v3462 = vshrl.u32 %v3461, 7
    %v3463 = vsub.s32 0, %v3462
    %v3464 = vrot.slane %v3364, %v3463
    %v3465 = vadd.f32 %v3459, %v3464
    %v3466 = vadd.f32 %v3460, %v3464
    %v3469 = vcombine.high %v3465, %v3465
    %v3471 = vunpack.c.l.s4 1966171168
    %v3472 = vunpack.c.0.s8 %v3471
    %v3473 = vlaneseq
    %v3474 = vshrl.u32 %v3473, 7
    %v3475 = vsub.s32 %v3472, %v3474
    %v3476 = vrot.slane %v3465, %v3475
    %v3478 = vunpack.c.l.s4 1966171168
    %v3479 = vunpack.c.0.s8 %v3478
    %v3480 = vlaneseq
    %v3481 = vshrl.u32 %v3480, 7
    %v3482 = vsub.s32 %v3479, %v3481
    %v3483 = vrot.slane %v3469, %v3482
    %v3484 = vcombine.high %v3476, %v3476
    %v3485 = vcombine.high %v3483, %v3483
    %v3487 = vunpack.c.l.s4 1966171168
    %v3488 = vunpack.c.0.s8 %v3487
    %v3489 = vlaneseq
    %v3490 = vshrl.u32 %v3489, 7
    %v3491 = vsub.s32 %v3488, %v3490
    %v3492 = vrot.slane %v3476, %v3491
    %v3494 = vunpack.c.l.s4 1966171168
    %v3495 = vunpack.c.0.s8 %v3494
    %v3496 = vlaneseq
    %v3497 = vshrl.u32 %v3496, 7
    %v3498 = vsub.s32 %v3495, %v3497
    %v3499 = vrot.slane %v3483, %v3498
    %v3501 = vunpack.c.l.s4 1966171168
    %v3502 = vunpack.c.0.s8 %v3501
    %v3503 = vlaneseq
    %v3504 = vshrl.u32 %v3503, 7
    %v3505 = vsub.s32 %v3502, %v3504
    %v3506 = vrot.slane %v3484, %v3505
    %v3508 = vunpack.c.l.s4 1966171168
    %v3509 = vunpack.c.0.s8 %v3508
    %v3510 = vlaneseq
    %v3511 = vshrl.u32 %v3510, 7
    %v3512 = vsub.s32 %v3509, %v3511
    %v3513 = vrot.slane %v3485, %v3512
    %v3514 = vcombine.high %v3492, %v3492
    %v3515 = vcombine.high %v3499, %v3499
    %v3516 = vcombine.high %v3506, %v3506
    %v3517 = vcombine.high %v3513, %v3513
    %v3518 = vcombine.high %v3466, %v3466
    %v3520 = vunpack.c.l.s4 1966171168
    %v3521 = vunpack.c.0.s8 %v3520
    %v3522 = vlaneseq
    %v3523 = vshrl.u32 %v3522, 7
    %v3524 = vsub.s32 %v3521, %v3523
    %v3525 = vrot.slane %v3466, %v3524
    %v3527 = vunpack.c.l.s4 1966171168
    %v3528 = vunpack.c.0.s8 %v3527
    %v3529 = vlaneseq
    %v3530 = vshrl.u32 %v3529, 7
    %v3531 = vsub.s32 %v3528, %v3530
    %v3532 = vrot.slane %v3518, %v3531
    %v3533 = vcombine.high %v3525, %v3525
    %v3534 = vcombine.high %v3532, %v3532
    %v3536 = vunpack.c.l.s4 1966171168
    %v3537 = vunpack.c.0.s8 %v3536
    %v3538 = vlaneseq
    %v3539 = vshrl.u32 %v3538, 7
    %v3540 = vsub.s32 %v3537, %v3539
    %v3541 = vrot.slane %v3525, %v3540
    %v3543 = vunpack.c.l.s4 1966171168
    %v3544 = vunpack.c.0.s8 %v3543
    %v3545 = vlaneseq
    %v3546 = vshrl.u32 %v3545, 7
    %v3547 = vsub.s32 %v3544, %v3546
    %v3548 = vrot.slane %v3532, %v3547
    %v3550 = vunpack.c.l.s4 1966171168
    %v3551 = vunpack.c.0.s8 %v3550
    %v3552 = vlaneseq
    %v3553 = vshrl.u32 %v3552, 7
    %v3554 = vsub.s32 %v3551, %v3553
    %v3555 = vrot.slane %v3533, %v3554
    %v3557 = vunpack.c.l.s4 1966171168
    %v3558 = vunpack.c.0.s8 %v3557
    %v3559 = vlaneseq
    %v3560 = vshrl.u32 %v3559, 7
    %v3561 = vsub.s32 %v3558, %v3560
    %v3562 = vrot.slane %v3534, %v3561
    %v3563 = vcombine.high %v3541, %v3541
    %v3564 = vcombine.high %v3548, %v3548
    %v3565 = vcombine.high %v3555, %v3555
    %v3566 = vcombine.high %v3562, %v3562
    %v3567 = vlaneseq
    %v3568 = vshrl.u32 %v3567, 7
    %v3569 = vsub.s32 0, %v3568
    %v3570 = vrot.slane %v3492, %v3569
    %v3571 = vlaneseq
    %v3572 = vshrl.u32 %v3571, 7
    %v3573 = vsub.s32 0, %v3572
    %v3574 = vrot.slane %v3506, %v3573
    %v3575 = vlaneseq
    %v3576 = vshrl.u32 %v3575, 7
    %v3577 = vsub.s32 0, %v3576
    %v3578 = vrot.slane %v3514, %v3577
    %v3579 = vlaneseq
    %v3580 = vshrl.u32 %v3579, 7
    %v3581 = vsub.s32 0, %v3580
    %v3582 = vrot.slane %v3516, %v3581
    %v3583 = vlaneseq
    %v3584 = vshrl.u32 %v3583, 7
    %v3585 = vsub.s32 0, %v3584
    %v3586 = vrot.slane %v3499, %v3585
    %v3587 = vlaneseq
    %v3588 = vshrl.u32 %v3587, 7
    %v3589 = vsub.s32 0, %v3588
    %v3590 = vrot.slane %v3513, %v3589
    %v3591 = vlaneseq
    %v3592 = vshrl.u32 %v3591, 7
    %v3593 = vsub.s32 0, %v3592
    %v3594 = vrot.slane %v3515, %v3593
    %v3595 = vlaneseq
    %v3596 = vshrl.u32 %v3595, 7
    %v3597 = vsub.s32 0, %v3596
    %v3598 = vrot.slane %v3517, %v3597
    %v3599 = vlaneseq
    %v3600 = vshrl.u32 %v3599, 7
    %v3601 = vsub.s32 0, %v3600
    %v3602 = vrot.slane %v3541, %v3601
    %v3603 = vlaneseq
    %v3604 = vshrl.u32 %v3603, 7
    %v3605 = vsub.s32 0, %v3604
    %v3606 = vrot.slane %v3555, %v3605
    %v3607 = vlaneseq
    %v3608 = vshrl.u32 %v3607, 7
    %v3609 = vsub.s32 0, %v3608
    %v3610 = vrot.slane %v3563, %v3609
    %v3611 = vlaneseq
    %v3612 = vshrl.u32 %v3611, 7
    %v3613 = vsub.s32 0, %v3612
    %v3614 = vrot.slane %v3565, %v3613
    %v3615 = vlaneseq
    %v3616 = vshrl.u32 %v3615, 7
    %v3617 = vsub.s32 0, %v3616
    %v3618 = vrot.slane %v3548, %v3617
    %v3619 = vlaneseq
    %v3620 = vshrl.u32 %v3619, 7
    %v3621 = vsub.s32 0, %v3620
    %v3622 = vrot.slane %v3562, %v3621
    %v3623 = vlaneseq
    %v3624 = vshrl.u32 %v3623, 7
    %v3625 = vsub.s32 0, %v3624
    %v3626 = vrot.slane %v3564, %v3625
    %v3627 = vlaneseq
    %v3628 = vshrl.u32 %v3627, 7
    %v3629 = vsub.s32 0, %v3628
    %v3630 = vrot.slane %v3566, %v3629
    %3647 = vrot.lane.b32.xlu0 %v3465, 6
    %v3648 = vpop.permute.xlu0 %3647
    %3649 = vrot.lane.b32.xlu0 %v3466, 6
    %v3650 = vpop.permute.xlu0 %3649
    %v3653 = vmul.f32 %v3570, %v3648
    %v3654 = vmul.f32 %v3570, %v3650
    %v3655 = vmul.f32 %v3574, %v3648
    %v3656 = vmul.f32 %v3574, %v3650
    %v3657 = vmul.f32 %v3578, %v3648
    %v3658 = vmul.f32 %v3578, %v3650
    %v3659 = vmul.f32 %v3582, %v3648
    %v3660 = vmul.f32 %v3582, %v3650
    %v3661 = vmul.f32 %v3586, %v3648
    %v3662 = vmul.f32 %v3586, %v3650
    %v3663 = vmul.f32 %v3590, %v3648
    %v3664 = vmul.f32 %v3590, %v3650
    %v3665 = vmul.f32 %v3594, %v3648
    %v3666 = vmul.f32 %v3594, %v3650
    %v3667 = vmul.f32 %v3598, %v3648
    %v3668 = vmul.f32 %v3598, %v3650
    %v3669 = vmul.f32 %v3602, %v3648
    %v3670 = vmul.f32 %v3602, %v3650
    %v3671 = vmul.f32 %v3606, %v3648
    %v3672 = vmul.f32 %v3606, %v3650
    %v3673 = vmul.f32 %v3610, %v3648
    %v3674 = vmul.f32 %v3610, %v3650
    %v3675 = vmul.f32 %v3614, %v3648
    %v3676 = vmul.f32 %v3614, %v3650
    %v3677 = vmul.f32 %v3618, %v3648
    %v3678 = vmul.f32 %v3618, %v3650
    %v3679 = vmul.f32 %v3622, %v3648
    %v3680 = vmul.f32 %v3622, %v3650
    %v3681 = vmul.f32 %v3626, %v3648
    %v3682 = vmul.f32 %v3626, %v3650
    %v3683 = vmul.f32 %v3630, %v3648
    %v3684 = vmul.f32 %v3630, %v3650
    %v3685 = vadd.f32 %v3653, %v126
    %v3686 = vadd.f32 %v3654, %v127
    %v3687 = vadd.f32 %v3655, %v128
    %v3688 = vadd.f32 %v3656, %v129
    %v3689 = vadd.f32 %v3657, %v130
    %v3690 = vadd.f32 %v3658, %v131
    %v3691 = vadd.f32 %v3659, %v132
    %v3692 = vadd.f32 %v3660, %v133
    %v3693 = vadd.f32 %v3661, %v134
    %v3694 = vadd.f32 %v3662, %v135
    %v3695 = vadd.f32 %v3663, %v136
    %v3696 = vadd.f32 %v3664, %v137
    %v3697 = vadd.f32 %v3665, %v138
    %v3698 = vadd.f32 %v3666, %v139
    %v3699 = vadd.f32 %v3667, %v140
    %v3700 = vadd.f32 %v3668, %v141
    %v3701 = vadd.f32 %v3669, %v142
    %v3702 = vadd.f32 %v3670, %v143
    %v3703 = vadd.f32 %v3671, %v144
    %v3704 = vadd.f32 %v3672, %v145
    %v3705 = vadd.f32 %v3673, %v146
    %v3706 = vadd.f32 %v3674, %v147
    %v3707 = vadd.f32 %v3675, %v148
    %v3708 = vadd.f32 %v3676, %v149
    %v3709 = vadd.f32 %v3677, %v150
    %v3710 = vadd.f32 %v3678, %v151
    %v3711 = vadd.f32 %v3679, %v152
    %v3712 = vadd.f32 %v3680, %v153
    %v3713 = vadd.f32 %v3681, %v154
    %v3714 = vadd.f32 %v3682, %v155
    %v3715 = vadd.f32 %v3683, %v156
    %v3716 = vadd.f32 %v3684, %v157
    %v3717 = vsel %vm515, %v3685, -inf
    %v3718 = vsel %vm515, %v3687, -inf
    %v3719 = vsel %vm515, %v3689, -inf
    %v3720 = vmax.f32 %v3717, %v3719
    %v3721 = vsel %vm515, %v3691, -inf
    %v3722 = vmax.f32 %v3718, %v3721
    %v3723 = vsel %vm515, %v3693, -inf
    %v3724 = vmax.f32 %v3720, %v3723
    %v3725 = vsel %vm515, %v3695, -inf
    %v3726 = vmax.f32 %v3722, %v3725
    %v3727 = vsel %vm515, %v3697, -inf
    %v3728 = vmax.f32 %v3724, %v3727
    %v3729 = vsel %vm515, %v3699, -inf
    %v3730 = vmax.f32 %v3726, %v3729
    %v3731 = vsel %vm515, %v3701, -inf
    %v3732 = vmax.f32 %v3728, %v3731
    %v3733 = vsel %vm515, %v3703, -inf
    %v3734 = vmax.f32 %v3730, %v3733
    %v3735 = vsel %vm515, %v3705, -inf
    %v3736 = vmax.f32 %v3732, %v3735
    %v3737 = vsel %vm515, %v3707, -inf
    %v3738 = vmax.f32 %v3734, %v3737
    %v3739 = vsel %vm515, %v3709, -inf
    %v3740 = vmax.f32 %v3736, %v3739
    %v3741 = vsel %vm515, %v3711, -inf
    %v3742 = vmax.f32 %v3738, %v3741
    %v3743 = vsel %vm515, %v3713, -inf
    %v3744 = vmax.f32 %v3740, %v3743
    %v3745 = vsel %vm515, %v3715, -inf
    %v3746 = vmax.f32 %v3742, %v3745
    %v3747 = vmax.f32 %v3744, %v3746
    %v3748 = vsel %vm515, %v3686, -inf
    %v3749 = vsel %vm515, %v3688, -inf
    %v3750 = vsel %vm515, %v3690, -inf
    %v3751 = vmax.f32 %v3748, %v3750
    %v3752 = vsel %vm515, %v3692, -inf
    %v3753 = vmax.f32 %v3749, %v3752
    %v3754 = vsel %vm515, %v3694, -inf
    %v3755 = vmax.f32 %v3751, %v3754
    %v3756 = vsel %vm515, %v3696, -inf
    %v3757 = vmax.f32 %v3753, %v3756
    %v3758 = vsel %vm515, %v3698, -inf
    %v3759 = vmax.f32 %v3755, %v3758
    %v3760 = vsel %vm515, %v3700, -inf
    %v3761 = vmax.f32 %v3757, %v3760
    %v3762 = vsel %vm515, %v3702, -inf
    %v3763 = vmax.f32 %v3759, %v3762
    %v3764 = vsel %vm515, %v3704, -inf
    %v3765 = vmax.f32 %v3761, %v3764
    %v3766 = vsel %vm515, %v3706, -inf
    %v3767 = vmax.f32 %v3763, %v3766
    %v3768 = vsel %vm515, %v3708, -inf
    %v3769 = vmax.f32 %v3765, %v3768
    %v3770 = vsel %vm515, %v3710, -inf
    %v3771 = vmax.f32 %v3767, %v3770
    %v3772 = vsel %vm515, %v3712, -inf
    %v3773 = vmax.f32 %v3769, %v3772
    %v3774 = vsel %vm515, %v3714, -inf
    %v3775 = vmax.f32 %v3771, %v3774
    %v3776 = vsel %vm515, %v3716, -inf
    %v3777 = vmax.f32 %v3773, %v3776
    %v3778 = vmax.f32 %v3775, %v3777
    %v3779 = vsub.f32 %v3685, %v3747
    %v3780 = vsub.f32 %v3686, %v3778
    %v3781 = vsub.f32 %v3687, %v3747
    %v3782 = vsub.f32 %v3688, %v3778
    %v3783 = vsub.f32 %v3689, %v3747
    %v3784 = vsub.f32 %v3690, %v3778
    %v3785 = vsub.f32 %v3691, %v3747
    %v3786 = vsub.f32 %v3692, %v3778
    %v3787 = vsub.f32 %v3693, %v3747
    %v3788 = vsub.f32 %v3694, %v3778
    %v3789 = vsub.f32 %v3695, %v3747
    %v3790 = vsub.f32 %v3696, %v3778
    %v3791 = vsub.f32 %v3697, %v3747
    %v3792 = vsub.f32 %v3698, %v3778
    %v3793 = vsub.f32 %v3699, %v3747
    %v3794 = vsub.f32 %v3700, %v3778
    %v3795 = vsub.f32 %v3701, %v3747
    %v3796 = vsub.f32 %v3702, %v3778
    %v3797 = vsub.f32 %v3703, %v3747
    %v3798 = vsub.f32 %v3704, %v3778
    %v3799 = vsub.f32 %v3705, %v3747
    %v3800 = vsub.f32 %v3706, %v3778
    %v3801 = vsub.f32 %v3707, %v3747
    %v3802 = vsub.f32 %v3708, %v3778
    %v3803 = vsub.f32 %v3709, %v3747
    %v3804 = vsub.f32 %v3710, %v3778
    %v3805 = vsub.f32 %v3711, %v3747
    %v3806 = vsub.f32 %v3712, %v3778
    %v3807 = vsub.f32 %v3713, %v3747
    %v3808 = vsub.f32 %v3714, %v3778
    %v3809 = vsub.f32 %v3715, %v3747
    %v3810 = vsub.f32 %v3716, %v3778
    %v3811 = vmul.f32 %v3779, 1.442695
    %v3812 = vpow.pop %v3811
    %v3813 = vmul.f32 %v3780, 1.442695
    %v3814 = vpow.pop %v3813
    %v3815 = vmul.f32 %v3781, 1.442695
    %v3816 = vpow.pop %v3815
    %v3817 = vmul.f32 %v3782, 1.442695
    %v3818 = vpow.pop %v3817
    %v3819 = vmul.f32 %v3783, 1.442695
    %v3820 = vpow.pop %v3819
    %v3821 = vmul.f32 %v3784, 1.442695
    %v3822 = vpow.pop %v3821
    %v3823 = vmul.f32 %v3785, 1.442695
    %v3824 = vpow.pop %v3823
    %v3825 = vmul.f32 %v3786, 1.442695
    %v3826 = vpow.pop %v3825
    %v3827 = vmul.f32 %v3787, 1.442695
    %v3828 = vpow.pop %v3827
    %v3829 = vmul.f32 %v3788, 1.442695
    %v3830 = vpow.pop %v3829
    %v3831 = vmul.f32 %v3789, 1.442695
    %v3832 = vpow.pop %v3831
    %v3833 = vmul.f32 %v3790, 1.442695
    %v3834 = vpow.pop %v3833
    %v3835 = vmul.f32 %v3791, 1.442695
    %v3836 = vpow.pop %v3835
    %v3837 = vmul.f32 %v3792, 1.442695
    %v3838 = vpow.pop %v3837
    %v3839 = vmul.f32 %v3793, 1.442695
    %v3840 = vpow.pop %v3839
    %v3841 = vmul.f32 %v3794, 1.442695
    %v3842 = vpow.pop %v3841
    %v3843 = vmul.f32 %v3795, 1.442695
    %v3844 = vpow.pop %v3843
    %v3845 = vmul.f32 %v3796, 1.442695
    %v3846 = vpow.pop %v3845
    %v3847 = vmul.f32 %v3797, 1.442695
    %v3848 = vpow.pop %v3847
    %v3849 = vmul.f32 %v3798, 1.442695
    %v3850 = vpow.pop %v3849
    %v3851 = vmul.f32 %v3799, 1.442695
    %v3852 = vpow.pop %v3851
    %v3853 = vmul.f32 %v3800, 1.442695
    %v3854 = vpow.pop %v3853
    %v3855 = vmul.f32 %v3801, 1.442695
    %v3856 = vpow.pop %v3855
    %v3857 = vmul.f32 %v3802, 1.442695
    %v3858 = vpow.pop %v3857
    %v3859 = vmul.f32 %v3803, 1.442695
    %v3860 = vpow.pop %v3859
    %v3861 = vmul.f32 %v3804, 1.442695
    %v3862 = vpow.pop %v3861
    %v3863 = vmul.f32 %v3805, 1.442695
    %v3864 = vpow.pop %v3863
    %v3865 = vmul.f32 %v3806, 1.442695
    %v3866 = vpow.pop %v3865
    %v3867 = vmul.f32 %v3807, 1.442695
    %v3868 = vpow.pop %v3867
    %v3869 = vmul.f32 %v3808, 1.442695
    %v3870 = vpow.pop %v3869
    %v3871 = vmul.f32 %v3809, 1.442695
    %v3872 = vpow.pop %v3871
    %v3873 = vmul.f32 %v3810, 1.442695
    %v3874 = vpow.pop %v3873
    %v3875 = vsel %vm515, %v3812, 0.0
    %v3876 = vsel %vm515, %v3816, 0.0
    %v3877 = vadd.f32 %v3875, %v3876
    %v3878 = vsel %vm515, %v3820, 0.0
    %v3879 = vadd.f32 %v3877, %v3878
    %v3880 = vsel %vm515, %v3824, 0.0
    %v3881 = vadd.f32 %v3879, %v3880
    %v3882 = vsel %vm515, %v3828, 0.0
    %v3883 = vadd.f32 %v3881, %v3882
    %v3884 = vsel %vm515, %v3832, 0.0
    %v3885 = vadd.f32 %v3883, %v3884
    %v3886 = vsel %vm515, %v3836, 0.0
    %v3887 = vadd.f32 %v3885, %v3886
    %v3888 = vsel %vm515, %v3840, 0.0
    %v3889 = vadd.f32 %v3887, %v3888
    %v3890 = vsel %vm515, %v3844, 0.0
    %v3891 = vadd.f32 %v3889, %v3890
    %v3892 = vsel %vm515, %v3848, 0.0
    %v3893 = vadd.f32 %v3891, %v3892
    %v3894 = vsel %vm515, %v3852, 0.0
    %v3895 = vadd.f32 %v3893, %v3894
    %v3896 = vsel %vm515, %v3856, 0.0
    %v3897 = vadd.f32 %v3895, %v3896
    %v3898 = vsel %vm515, %v3860, 0.0
    %v3899 = vadd.f32 %v3897, %v3898
    %v3900 = vsel %vm515, %v3864, 0.0
    %v3901 = vadd.f32 %v3899, %v3900
    %v3902 = vsel %vm515, %v3868, 0.0
    %v3903 = vadd.f32 %v3901, %v3902
    %v3904 = vsel %vm515, %v3872, 0.0
    %v3905 = vadd.f32 %v3903, %v3904
    %v3906 = vsel %vm515, %v3814, 0.0
    %v3907 = vsel %vm515, %v3818, 0.0
    %v3908 = vadd.f32 %v3906, %v3907
    %v3909 = vsel %vm515, %v3822, 0.0
    %v3910 = vadd.f32 %v3908, %v3909
    %v3911 = vsel %vm515, %v3826, 0.0
    %v3912 = vadd.f32 %v3910, %v3911
    %v3913 = vsel %vm515, %v3830, 0.0
    %v3914 = vadd.f32 %v3912, %v3913
    %v3915 = vsel %vm515, %v3834, 0.0
    %v3916 = vadd.f32 %v3914, %v3915
    %v3917 = vsel %vm515, %v3838, 0.0
    %v3918 = vadd.f32 %v3916, %v3917
    %v3919 = vsel %vm515, %v3842, 0.0
    %v3920 = vadd.f32 %v3918, %v3919
    %v3921 = vsel %vm515, %v3846, 0.0
    %v3922 = vadd.f32 %v3920, %v3921
    %v3923 = vsel %vm515, %v3850, 0.0
    %v3924 = vadd.f32 %v3922, %v3923
    %v3925 = vsel %vm515, %v3854, 0.0
    %v3926 = vadd.f32 %v3924, %v3925
    %v3927 = vsel %vm515, %v3858, 0.0
    %v3928 = vadd.f32 %v3926, %v3927
    %v3929 = vsel %vm515, %v3862, 0.0
    %v3930 = vadd.f32 %v3928, %v3929
    %v3931 = vsel %vm515, %v3866, 0.0
    %v3932 = vadd.f32 %v3930, %v3931
    %v3933 = vsel %vm515, %v3870, 0.0
    %v3934 = vadd.f32 %v3932, %v3933
    %v3935 = vsel %vm515, %v3874, 0.0
    %v3936 = vadd.f32 %v3934, %v3935
    %3937 = vrot.lane.b32.xlu0 %v3570, 122
    %v3938 = vpop.permute.xlu0 %3937
    %3939 = vrot.lane.b32.xlu0 %v3574, 122
    %v3940 = vpop.permute.xlu0 %3939
    %3941 = vrot.lane.b32.xlu0 %v3578, 122
    %v3942 = vpop.permute.xlu0 %3941
    %3943 = vrot.lane.b32.xlu0 %v3582, 122
    %v3944 = vpop.permute.xlu0 %3943
    %3945 = vrot.lane.b32.xlu0 %v3586, 122
    %v3946 = vpop.permute.xlu0 %3945
    %3947 = vrot.lane.b32.xlu0 %v3590, 122
    %v3948 = vpop.permute.xlu0 %3947
    %3949 = vrot.lane.b32.xlu0 %v3594, 122
    %v3950 = vpop.permute.xlu0 %3949
    %3951 = vrot.lane.b32.xlu0 %v3598, 122
    %v3952 = vpop.permute.xlu0 %3951
    %3953 = vrot.lane.b32.xlu0 %v3602, 122
    %v3954 = vpop.permute.xlu0 %3953
    %3955 = vrot.lane.b32.xlu0 %v3606, 122
    %v3956 = vpop.permute.xlu0 %3955
    %3957 = vrot.lane.b32.xlu0 %v3610, 122
    %v3958 = vpop.permute.xlu0 %3957
    %3959 = vrot.lane.b32.xlu0 %v3614, 122
    %v3960 = vpop.permute.xlu0 %3959
    %3961 = vrot.lane.b32.xlu0 %v3618, 122
    %v3962 = vpop.permute.xlu0 %3961
    %3963 = vrot.lane.b32.xlu0 %v3622, 122
    %v3964 = vpop.permute.xlu0 %3963
    %3965 = vrot.lane.b32.xlu0 %v3626, 122
    %v3966 = vpop.permute.xlu0 %3965
    %3967 = vrot.lane.b32.xlu0 %v3630, 122
    %v3968 = vpop.permute.xlu0 %3967
    %v3985 = vmul.f32 %v3812, %v3938
    %v3986 = vmul.f32 %v3814, %v3938
    %v3987 = vmul.f32 %v3816, %v3940
    %v3988 = vmul.f32 %v3818, %v3940
    %v3989 = vmul.f32 %v3820, %v3942
    %v3990 = vmul.f32 %v3822, %v3942
    %v3991 = vmul.f32 %v3824, %v3944
    %v3992 = vmul.f32 %v3826, %v3944
    %v3993 = vmul.f32 %v3828, %v3946
    %v3994 = vmul.f32 %v3830, %v3946
    %v3995 = vmul.f32 %v3832, %v3948
    %v3996 = vmul.f32 %v3834, %v3948
    %v3997 = vmul.f32 %v3836, %v3950
    %v3998 = vmul.f32 %v3838, %v3950
    %v3999 = vmul.f32 %v3840, %v3952
    %v4000 = vmul.f32 %v3842, %v3952
    %v4001 = vmul.f32 %v3844, %v3954
    %v4002 = vmul.f32 %v3846, %v3954
    %v4003 = vmul.f32 %v3848, %v3956
    %v4004 = vmul.f32 %v3850, %v3956
    %v4005 = vmul.f32 %v3852, %v3958
    %v4006 = vmul.f32 %v3854, %v3958
    %v4007 = vmul.f32 %v3856, %v3960
    %v4008 = vmul.f32 %v3858, %v3960
    %v4009 = vmul.f32 %v3860, %v3962
    %v4010 = vmul.f32 %v3862, %v3962
    %v4011 = vmul.f32 %v3864, %v3964
    %v4012 = vmul.f32 %v3866, %v3964
    %v4013 = vmul.f32 %v3868, %v3966
    %v4014 = vmul.f32 %v3870, %v3966
    %v4015 = vmul.f32 %v3872, %v3968
    %v4016 = vmul.f32 %v3874, %v3968
    %v4017 = vsel %vm515, %v3985, 0.0
    %v4018 = vsel %vm515, %v3987, 0.0
    %v4019 = vadd.f32 %v4017, %v4018
    %v4020 = vsel %vm515, %v3989, 0.0
    %v4021 = vadd.f32 %v4019, %v4020
    %v4022 = vsel %vm515, %v3991, 0.0
    %v4023 = vadd.f32 %v4021, %v4022
    %v4024 = vsel %vm515, %v3993, 0.0
    %v4025 = vadd.f32 %v4023, %v4024
    %v4026 = vsel %vm515, %v3995, 0.0
    %v4027 = vadd.f32 %v4025, %v4026
    %v4028 = vsel %vm515, %v3997, 0.0
    %v4029 = vadd.f32 %v4027, %v4028
    %v4030 = vsel %vm515, %v3999, 0.0
    %v4031 = vadd.f32 %v4029, %v4030
    %v4032 = vsel %vm515, %v4001, 0.0
    %v4033 = vadd.f32 %v4031, %v4032
    %v4034 = vsel %vm515, %v4003, 0.0
    %v4035 = vadd.f32 %v4033, %v4034
    %v4036 = vsel %vm515, %v4005, 0.0
    %v4037 = vadd.f32 %v4035, %v4036
    %v4038 = vsel %vm515, %v4007, 0.0
    %v4039 = vadd.f32 %v4037, %v4038
    %v4040 = vsel %vm515, %v4009, 0.0
    %v4041 = vadd.f32 %v4039, %v4040
    %v4042 = vsel %vm515, %v4011, 0.0
    %v4043 = vadd.f32 %v4041, %v4042
    %v4044 = vsel %vm515, %v4013, 0.0
    %v4045 = vadd.f32 %v4043, %v4044
    %v4046 = vsel %vm515, %v4015, 0.0
    %v4047 = vadd.f32 %v4045, %v4046
    %v4048 = vsel %vm515, %v3986, 0.0
    %v4049 = vsel %vm515, %v3988, 0.0
    %v4050 = vadd.f32 %v4048, %v4049
    %v4051 = vsel %vm515, %v3990, 0.0
    %v4052 = vadd.f32 %v4050, %v4051
    %v4053 = vsel %vm515, %v3992, 0.0
    %v4054 = vadd.f32 %v4052, %v4053
    %v4055 = vsel %vm515, %v3994, 0.0
    %v4056 = vadd.f32 %v4054, %v4055
    %v4057 = vsel %vm515, %v3996, 0.0
    %v4058 = vadd.f32 %v4056, %v4057
    %v4059 = vsel %vm515, %v3998, 0.0
    %v4060 = vadd.f32 %v4058, %v4059
    %v4061 = vsel %vm515, %v4000, 0.0
    %v4062 = vadd.f32 %v4060, %v4061
    %v4063 = vsel %vm515, %v4002, 0.0
    %v4064 = vadd.f32 %v4062, %v4063
    %v4065 = vsel %vm515, %v4004, 0.0
    %v4066 = vadd.f32 %v4064, %v4065
    %v4067 = vsel %vm515, %v4006, 0.0
    %v4068 = vadd.f32 %v4066, %v4067
    %v4069 = vsel %vm515, %v4008, 0.0
    %v4070 = vadd.f32 %v4068, %v4069
    %v4071 = vsel %vm515, %v4010, 0.0
    %v4072 = vadd.f32 %v4070, %v4071
    %v4073 = vsel %vm515, %v4012, 0.0
    %v4074 = vadd.f32 %v4072, %v4073
    %v4075 = vsel %vm515, %v4014, 0.0
    %v4076 = vadd.f32 %v4074, %v4075
    %v4077 = vsel %vm515, %v4016, 0.0
    %v4078 = vadd.f32 %v4076, %v4077
    %v4079 = vrcp.pop %v3905
    %v4080 = vrcp.pop %v3936
    %v4081 = vmul.f32 %v4047, %v4079
    %v4082 = vmul.f32 %v4078, %v4080
    %4084 = vset.pattern.permute.xlu0 6
    %4085 = vperm.xlu0 %4084, %v4081
    %v4086 = vpop.permute.xlu0 %4085
    %4089 = vset.pattern.permute.xlu0 6
    %4090 = vperm.xlu0 %4089, %v4082
    %v4091 = vpop.permute.xlu0 %4090
    %v4093 = vmul.f32 %v4086, %v3378
    %v4094 = vmul.f32 %v4091, %v3378
    %4095 = vset.pattern.permute.xlu0 7
    %4096 = vperm.xlu0 %4095, %v4081
    %v4097 = vpop.permute.xlu0 %4096
    %4099 = vset.pattern.permute.xlu0 7
    %4100 = vperm.xlu0 %4099, %v4082
    %v4101 = vpop.permute.xlu0 %4100
    %v4103 = vmul.f32 %v4097, %v3392
    %v4104 = vmul.f32 %v4101, %v3392
    %v4105 = vadd.f32 %v4093, %v4103
    %v4106 = vadd.f32 %v4094, %v4104
    %4107 = vset.pattern.permute.xlu0 8
    %4108 = vperm.xlu0 %4107, %v4081
    %v4109 = vpop.permute.xlu0 %4108
    %4111 = vset.pattern.permute.xlu0 8
    %4112 = vperm.xlu0 %4111, %v4082
    %v4113 = vpop.permute.xlu0 %4112
    %v4115 = vmul.f32 %v4109, %v3408
    %v4116 = vmul.f32 %v4113, %v3408
    %v4117 = vadd.f32 %v4105, %v4115
    %v4118 = vadd.f32 %v4106, %v4116
    %4119 = vset.pattern.permute.xlu0 9
    %4120 = vperm.xlu0 %4119, %v4081
    %v4121 = vpop.permute.xlu0 %4120
    %4123 = vset.pattern.permute.xlu0 9
    %4124 = vperm.xlu0 %4123, %v4082
    %v4125 = vpop.permute.xlu0 %4124
    %v4127 = vmul.f32 %v4121, %v3424
    %v4128 = vmul.f32 %v4125, %v3424
    %v4129 = vadd.f32 %v4117, %v4127
    %v4130 = vadd.f32 %v4118, %v4128
    %4131 = vset.pattern.permute.xlu0 10
    %4132 = vperm.xlu0 %4131, %v4081
    %v4133 = vpop.permute.xlu0 %4132
    %4135 = vset.pattern.permute.xlu0 10
    %4136 = vperm.xlu0 %4135, %v4082
    %v4137 = vpop.permute.xlu0 %4136
    %v4139 = vmul.f32 %v4133, %v3440
    %v4140 = vmul.f32 %v4137, %v3440
    %v4141 = vadd.f32 %v4129, %v4139
    %v4142 = vadd.f32 %v4130, %v4140
    %4143 = vset.pattern.permute.xlu0 11
    %4144 = vperm.xlu0 %4143, %v4081
    %v4145 = vpop.permute.xlu0 %4144
    %4147 = vset.pattern.permute.xlu0 11
    %4148 = vperm.xlu0 %4147, %v4082
    %v4149 = vpop.permute.xlu0 %4148
    %v4151 = vmul.f32 %v4145, %v3456
    %v4152 = vmul.f32 %v4149, %v3456
    %v4153 = vadd.f32 %v4141, %v4151
    %v4154 = vadd.f32 %v4142, %v4152
    %v4155 = vadd.f32 %v4153, %v3464
    %v4156 = vadd.f32 %v4154, %v3464
    %4159 = vrot.lane.b32.xlu0 %v4155, 110
    %v4160 = vpop.permute.xlu0 %4159
    %4161 = vrot.lane.b32.xlu0 %v4156, 110
    %v4162 = vpop.permute.xlu0 %4161
    %v4165 = vadd.f32 %v3358, %v4160
    %v4166 = vadd.f32 %v3359, %v4162
    %v4167 = vsel %vm966, %v4165, 0.0
    %4168 = vadd.xlane.f32.xlu0 %v4167
    %v4169 = vpop.xlane.xlu0 %4168
    %v4170 = vsel %vm966, %v4166, 0.0
    %4171 = vadd.xlane.f32.xlu0 %v4170
    %v4172 = vpop.xlane.xlu0 %4171
    %v4173 = vmul.f32 %v4169, %v973
    %v4174 = vmul.f32 %v4172, %v973
    %v4175 = vmul.f32 %v4165, %v4165
    %v4176 = vmul.f32 %v4166, %v4166
    %v4177 = vsel %vm966, %v4175, 0.0
    %4178 = vadd.xlane.f32.xlu0 %v4177
    %v4179 = vpop.xlane.xlu0 %4178
    %v4180 = vsel %vm966, %v4176, 0.0
    %4181 = vadd.xlane.f32.xlu0 %v4180
    %v4182 = vpop.xlane.xlu0 %4181
    %v4183 = vmul.f32 %v4179, %v973
    %v4184 = vmul.f32 %v4182, %v973
    %v4185 = vmul.f32 %v4173, %v4173
    %v4186 = vmul.f32 %v4174, %v4174
    %v4187 = vsub.f32 %v4183, %v4185
    %v4188 = vsub.f32 %v4184, %v4186
    %v4189 = vsub.f32 %v4165, %v4173
    %v4190 = vsub.f32 %v4166, %v4174
    %v4191 = vadd.f32 %v4187, 1e-05
    %v4192 = vadd.f32 %v4188, 1e-05
    %v4193 = vrsqrt.pop %v4191
    %v4194 = vrsqrt.pop %v4192
    %v4195 = vmul.f32 %v4189, %v4193
    %v4196 = vmul.f32 %v4190, %v4194
    %4198 = vrot.lane.b32.xlu0 %v3464, 74
    %v4199 = vpop.permute.xlu0 %4198
    %v4201 = vmul.f32 %v4195, %v4199
    %v4202 = vmul.f32 %v4196, %v4199
    %4203 = vrot.lane.b32.xlu0 %v3464, 68
    %v4204 = vpop.permute.xlu0 %4203
    %v4206 = vadd.f32 %v4201, %v4204
    %v4207 = vadd.f32 %v4202, %v4204
    %4209 = vset.pattern.permute.xlu0 0
    %4210 = vperm.xlu0 %4209, %v4206
    %v4211 = vpop.permute.xlu0 %4210
    %4214 = vset.pattern.permute.xlu0 0
    %4215 = vperm.xlu0 %4214, %v4207
    %v4216 = vpop.permute.xlu0 %4215
    %v4218 = vmul.f32 %v4211, %v3378
    %v4219 = vmul.f32 %v4216, %v3378
    %4220 = vset.pattern.permute.xlu0 1
    %4221 = vperm.xlu0 %4220, %v4206
    %v4222 = vpop.permute.xlu0 %4221
    %4224 = vset.pattern.permute.xlu0 1
    %4225 = vperm.xlu0 %4224, %v4207
    %v4226 = vpop.permute.xlu0 %4225
    %v4228 = vmul.f32 %v4222, %v3392
    %v4229 = vmul.f32 %v4226, %v3392
    %v4230 = vadd.f32 %v4218, %v4228
    %v4231 = vadd.f32 %v4219, %v4229
    %4232 = vset.pattern.permute.xlu0 2
    %4233 = vperm.xlu0 %4232, %v4206
    %v4234 = vpop.permute.xlu0 %4233
    %4236 = vset.pattern.permute.xlu0 2
    %4237 = vperm.xlu0 %4236, %v4207
    %v4238 = vpop.permute.xlu0 %4237
    %v4240 = vmul.f32 %v4234, %v3408
    %v4241 = vmul.f32 %v4238, %v3408
    %v4242 = vadd.f32 %v4230, %v4240
    %v4243 = vadd.f32 %v4231, %v4241
    %4244 = vset.pattern.permute.xlu0 3
    %4245 = vperm.xlu0 %4244, %v4206
    %v4246 = vpop.permute.xlu0 %4245
    %4248 = vset.pattern.permute.xlu0 3
    %4249 = vperm.xlu0 %4248, %v4207
    %v4250 = vpop.permute.xlu0 %4249
    %v4252 = vmul.f32 %v4246, %v3424
    %v4253 = vmul.f32 %v4250, %v3424
    %v4254 = vadd.f32 %v4242, %v4252
    %v4255 = vadd.f32 %v4243, %v4253
    %4256 = vset.pattern.permute.xlu0 4
    %4257 = vperm.xlu0 %4256, %v4206
    %v4258 = vpop.permute.xlu0 %4257
    %4260 = vset.pattern.permute.xlu0 4
    %4261 = vperm.xlu0 %4260, %v4207
    %v4262 = vpop.permute.xlu0 %4261
    %v4264 = vmul.f32 %v4258, %v3440
    %v4265 = vmul.f32 %v4262, %v3440
    %v4266 = vadd.f32 %v4254, %v4264
    %v4267 = vadd.f32 %v4255, %v4265
    %4268 = vset.pattern.permute.xlu0 5
    %4269 = vperm.xlu0 %4268, %v4206
    %v4270 = vpop.permute.xlu0 %4269
    %4272 = vset.pattern.permute.xlu0 5
    %4273 = vperm.xlu0 %4272, %v4207
    %v4274 = vpop.permute.xlu0 %4273
    %v4276 = vmul.f32 %v4270, %v3456
    %v4277 = vmul.f32 %v4274, %v3456
    %v4278 = vadd.f32 %v4266, %v4276
    %v4279 = vadd.f32 %v4267, %v4277
    %v4280 = vadd.f32 %v4278, %v3464
    %v4281 = vadd.f32 %v4279, %v3464
    %v4282 = vmax.f32 %v4280, 0.0
    %v4283 = vmax.f32 %v4281, 0.0
    %4286 = vrot.lane.b32.xlu0 %v4282, 104
    %v4287 = vpop.permute.xlu0 %4286
    %4288 = vrot.lane.b32.xlu0 %v4283, 104
    %v4289 = vpop.permute.xlu0 %4288
    %4293 = vrot.lane.b32.xlu0 %v3361, 62
    %v4294 = vpop.permute.xlu0 %4293
    %4295 = vrot.lane.b32.xlu0 %v3362, 62
    %v4296 = vpop.permute.xlu0 %4295
    %4297 = vrot.lane.b32.xlu0 %v3363, 62
    %v4298 = vpop.permute.xlu0 %4297
    %4302 = vrot.lane.b32.xlu0 %v3464, 80
    %v4303 = vpop.permute.xlu0 %4302
    %v4305 = vsel %vm1106, %v4287, 0
    %v4307 = vsel %vm1106, %v4289, 0
    %4309 = vmatprep.subr.mxu0 0.0
    %4310 = vmatpush1.msra.mxu0 %v4294
    %4311 = vmatprep.subr.mxu0 0.0
    %4312 = vmatpush1.msra.mxu0 %v4296
    %4313 = vmatprep.subr.mxu0 0.0
    %4314 = vmatpush1.msra.mxu0 %v4298
    %4315 = vmatprep.subr.mxu0 0.0
    %4316 = vmatpush1.msra.mxu0 0.0
    %4317 = vmatprep.subr.mxu0 0.0
    %4318 = vmatpush1.msra.mxu0 0.0
    %4319 = vmatprep.subr.mxu0 0.0
    %4320 = vmatpush1.msra.mxu0 0.0
    %4321 = vmatprep.subr.mxu0 0.0
    %4322 = vmatpush1.msra.mxu0 0.0
    %4323 = vmatprep.subr.mxu0 0.0
    %4324 = vmatpush1.msra.mxu0 0.0
    %4325 = vmatprep.subr.mxu0 0.0
    %4326 = vmatpush1.msra.mxu0 0.0
    %4327 = vmatprep.subr.mxu0 0.0
    %4328 = vmatpush1.msra.mxu0 0.0
    %4329 = vmatprep.subr.mxu0 0.0
    %4330 = vmatpush1.msra.mxu0 0.0
    %4331 = vmatprep.subr.mxu0 0.0
    %4332 = vmatpush1.msra.mxu0 0.0
    %4333 = vmatprep.subr.mxu0 0.0
    %4334 = vmatpush1.msra.mxu0 0.0
    %4335 = vmatprep.subr.mxu0 0.0
    %4336 = vmatpush1.msra.mxu0 0.0
    %4337 = vmatprep.subr.mxu0 0.0
    %4338 = vmatpush1.msra.mxu0 0.0
    %4339 = vmatprep.subr.mxu0 0.0
    %4340 = vmatpush1.msra.mxu0 0.0
    %4341 = vmatprep.subr.mxu0 0.0
    %4342 = vmatpush1.msra.mxu0 0.0
    %4343 = vmatprep.subr.mxu0 0.0
    %4344 = vmatpush1.msra.mxu0 0.0
    %4345 = vmatprep.subr.mxu0 0.0
    %4346 = vmatpush1.msra.mxu0 0.0
    %4347 = vmatprep.subr.mxu0 0.0
    %4348 = vmatpush1.msra.mxu0 0.0
    %4349 = vmatprep.subr.mxu0 0.0
    %4350 = vmatpush1.msra.mxu0 0.0
    %4351 = vmatprep.subr.mxu0 0.0
    %4352 = vmatpush1.msra.mxu0 0.0
    %4353 = vmatprep.subr.mxu0 0.0
    %4354 = vmatpush1.msra.mxu0 0.0
    %4355 = vmatprep.subr.mxu0 0.0
    %4356 = vmatpush1.msra.mxu0 0.0
    %4357 = vmatprep.subr.mxu0 0.0
    %4358 = vmatpush1.msra.mxu0 0.0
    %4359 = vmatprep.subr.mxu0 0.0
    %4360 = vmatpush1.msra.mxu0 0.0
    %4361 = vmatprep.subr.mxu0 0.0
    %4362 = vmatpush1.msra.mxu0 0.0
    %4363 = vmatprep.subr.mxu0 0.0
    %4364 = vmatpush1.msra.mxu0 0.0
    %4365 = vmatprep.subr.mxu0 0.0
    %4366 = vmatpush1.msra.mxu0 0.0
    %4367 = vmatprep.subr.mxu0 0.0
    %4368 = vmatpush1.msra.mxu0 0.0
    %4369 = vmatprep.subr.mxu0 0.0
    %4370 = vmatpush1.msra.mxu0 0.0
    %4371 = vmatprep.subr.mxu0 0.0
    %4372 = vmatpush1.msra.mxu0 0.0
    %4373 = vmatprep.mubr.f32.mxu0 0.0
    %4374 = vmatmul.mubr.f32.gmra.mrb[0].mxu0 %v4305
    %v4375 = vpop.f32.mrb[0].mxu0
    %v4376 = vadd.f32 %v4303, %v4375
    %v4377 = vpop.f32.mrb[0].mxu0
    %4378 = vmatprep.mubr.f32.mxu0 0.0
    %4379 = vmatmul.mubr.f32.gmra.mrb[0].mxu0 %v4307
    %v4380 = vpop.f32.mrb[0].mxu0
    %v4381 = vadd.f32 %v4303, %v4380
    %v4382 = vpop.f32.mrb[0].mxu0
    %4383 = vdwg.mxu0
    %v4384 = vadd.f32 %v4206, %v4376
    %v4385 = vadd.f32 %v4207, %v4381
    %v4386 = vsel %vm966, %v4384, 0.0
    %4387 = vadd.xlane.f32.xlu0 %v4386
    %v4388 = vpop.xlane.xlu0 %4387
    %v4389 = vsel %vm966, %v4385, 0.0
    %4390 = vadd.xlane.f32.xlu0 %v4389
    %v4391 = vpop.xlane.xlu0 %4390
    %v4392 = vmul.f32 %v4388, %v973
    %v4393 = vmul.f32 %v4391, %v973
    %v4394 = vmul.f32 %v4384, %v4384
    %v4395 = vmul.f32 %v4385, %v4385
    %v4396 = vsel %vm966, %v4394, 0.0
    %4397 = vadd.xlane.f32.xlu0 %v4396
    %v4398 = vpop.xlane.xlu0 %4397
    %v4399 = vsel %vm966, %v4395, 0.0
    %4400 = vadd.xlane.f32.xlu0 %v4399
    %v4401 = vpop.xlane.xlu0 %4400
    %v4402 = vmul.f32 %v4398, %v973
    %v4403 = vmul.f32 %v4401, %v973
    %v4404 = vmul.f32 %v4392, %v4392
    %v4405 = vmul.f32 %v4393, %v4393
    %v4406 = vsub.f32 %v4402, %v4404
    %v4407 = vsub.f32 %v4403, %v4405
    %v4408 = vsub.f32 %v4384, %v4392
    %v4409 = vsub.f32 %v4385, %v4393
    %v4410 = vadd.f32 %v4406, 1e-05
    %v4411 = vadd.f32 %v4407, 1e-05
    %v4412 = vrsqrt.pop %v4410
    %v4413 = vrsqrt.pop %v4411
    %v4414 = vmul.f32 %v4408, %v4412
    %v4415 = vmul.f32 %v4409, %v4413
    %4416 = vrot.lane.b32.xlu0 %v3464, 62
    %v4417 = vpop.permute.xlu0 %4416
    %v4419 = vmul.f32 %v4414, %v4417
    %v4420 = vmul.f32 %v4415, %v4417
    %4421 = vrot.lane.b32.xlu0 %v3464, 56
    %v4422 = vpop.permute.xlu0 %4421
    %v4424 = vadd.f32 %v4419, %v4422
    %v4425 = vadd.f32 %v4420, %v4422
    %v4426 = vld [vmem:[#allocation2 + $0x24] sm:$0x1]
    %v4427 = vlaneseq
    %v4428 = vshrl.u32 %v4427, 7
    %v4429 = vsub.s32 0, %v4428
    %v4430 = vrot.slane %v4426, %v4429
    %v4431 = vmul.f32 %v4424, %v4430
    %v4432 = vmul.f32 %v4425, %v4430
    %v4433 = vsel %vm966, %v4431, 0.0
    %4434 = vadd.xlane.f32.xlu0 %v4433
    %v4435 = vpop.xlane.xlu0 %4434
    %v4436 = vsel %vm966, %v4432, 0.0
    %4437 = vadd.xlane.f32.xlu0 %v4436
    %v4438 = vpop.xlane.xlu0 %4437
    %v4439 = vadd.f32 %v4435, %v4430
    %v4440 = vadd.f32 %v4438, %v4430
    %4443 = vrot.lane.b32.xlu0 %v4439, 122
    %v4444 = vpop.permute.xlu0 %4443
    %4445 = vrot.lane.b32.xlu0 %v4440, 122
    %v4446 = vpop.permute.xlu0 %4445
    %vm4449 = vcmask 7168
    %4450 = vst.msk [vmem:[%s2] sm:$0xff] %vm4449, %v4444
    %4451 = vst.msk [vmem:[%s2 + $0x8] sm:$0xff] %vm4449, %v4446
    // Predicated region
    $region14: #{transformer_forward.1} parent=1 // pred_check
      _
    $region15: #{transformer_forward.1} parent=1 // pred_check_branch
      %4453 = sbr.rel (0) target = $region17
    $region16: #{transformer_forward.1} parent=1 // pred_region
      _
    $region17: #{transformer_forward.1} parent=1 // pred_fallthru
      _
    // Predicated region
    $region18: #{transformer_forward.1} parent=1 // pred_check
      _
    $region19: #{transformer_forward.1} parent=1 // pred_check_branch
      %4455 = sbr.rel (0) target = $region21
    $region20: #{transformer_forward.1} parent=1 // pred_region
      _
    $region21: #{transformer_forward.1} parent=1 // pred_fallthru
      _
    %4456 = vsyncpa [#allocation3], 1

</llo_original>
